<compile_context>
chip_gen: v5e
topology: v5e:2x2
jax: 0.10.0
libtpu: 0.0.40
codegen_flags: <defaults>
</compile_context>

<pallas_src>
import functools
import math

import jax
import jax.numpy as jnp
import numpy as np
from jax.experimental import pallas as pl
from jax.experimental.pallas import tpu as pltpu

_BN_EPS = 1e-5
_BN_SCALE = 1.0 / math.sqrt(1.0 + _BN_EPS)  # eval-mode BatchNorm with default init
_LANES = 128    # vreg lane width; all channel dims are zero-padded to this
_MIN_ROWS = 8   # vreg sublane width; slab row counts are kept >= 8


# ----------------------------- fused Pallas kernel -----------------------------

def _encoder_text_kernel(*refs, a: float, b: float):
    """Whole EncoderText forward on VMEM-resident (rows, 128) channels-last slabs.

    refs = [x_slab,
            G0..G4,                      # per-stage (4, M_out, M_in) 0/1 gather matrices
            wc1, bc1,                    # stem conv  (4,128,128) bf16 taps + (1,128) f32 bias
            (w1, b1, w2, b2, wd, bd)*4,  # residual blocks
            wh, bh,                      # fused [mu | logvar] head
            out_ref]
    """
    x_ref = refs[0]
    g_refs = refs[1:6]
    params = list(refs[6:-1])
    out_ref = refs[-1]

    def take(n):
        vals = params[:n]
        del params[:n]
        return vals

    def conv_k4(x, g_ref, w_ref, b_ref, relu_in):
        # Conv1d(k=4, s=2): sum over taps of (row-gather matmul) @ (per-tap channel matmul).
        xin = jnp.maximum(x, 0.0) if relu_in else x
        xin = xin.astype(jnp.bfloat16)
        acc = None
        for j in range(4):
            xj = jnp.dot(g_ref[j], xin, preferred_element_type=jnp.float32)
            yj = jnp.dot(xj.astype(jnp.bfloat16), w_ref[j],
                         preferred_element_type=jnp.float32)
            acc = yj if acc is None else acc + yj
        return acc + b_ref[...]

    def conv_1x1(x, w_ref, b_ref, relu_in):
        xin = jnp.maximum(x, 0.0) if relu_in else x
        xin = xin.astype(jnp.bfloat16)
        return jnp.dot(xin, w_ref[...], preferred_element_type=jnp.float32) + b_ref[...]

    x = x_ref[...]                                       # (B*L, 128) f32

    wc1, bc1 = take(2)                                   # stem conv: k4 s2 p1
    h = conv_k4(x, g_refs[0], wc1, bc1, relu_in=False)

    for blk in range(4):                                 # ResidualBlock1dConv x4 (eval mode)
        w1, b1, w2, b2, wd, bd = take(6)
        g = g_refs[blk + 1]
        t = conv_1x1(h, w1, b1, relu_in=True)            # conv1(relu(bn1(x)))   (1x1)
        y = conv_k4(t, g, w2, b2, relu_in=True)          # conv2(relu(bn2(.)))   (k4 s2)
        r = conv_k4(h, g, wd, bd, relu_in=False)         # bn_d(conv_d(x))       (k4 s2)
        h = a * r + b * y                                # fused residual epilogue (f32 VPU)

    wh, bh = take(2)                                     # fused [mu | logvar] head
    out = jnp.dot(h.astype(jnp.bfloat16), wh[...],
                  preferred_element_type=jnp.float32) + bh[...]
    out_ref[...] = out.astype(out_ref.dtype)


# ------------------------------ parameter helpers ------------------------------

def _conv_params(key, c_out, c_in, k):
    k1, k2 = jax.random.split(key)
    bound = 1.0 / math.sqrt(c_in * k)
    w = jax.random.uniform(k1, (c_out, c_in, k), jnp.float32, -bound, bound)
    b = jax.random.uniform(k2, (c_out,), jnp.float32, -bound, bound)
    return w, b


def _linear_params(key, d_in, d_out):
    k1, k2 = jax.random.split(key)
    bound = 1.0 / math.sqrt(d_in)
    w = jax.random.uniform(k1, (d_in, d_out), jnp.float32, -bound, bound)
    b = jax.random.uniform(k2, (d_out,), jnp.float32, -bound, bound)
    return w, b


def _pad2(w):
    r, c = w.shape
    return jnp.pad(w, ((0, _LANES - r), (0, _LANES - c)))


def _pad_bias(bvec):
    return jnp.pad(bvec, (0, _LANES - bvec.shape[0])).reshape(1, _LANES).astype(jnp.float32)


def _conv_taps(w_oik, scale=1.0):
    """PyTorch (C_out, C_in, k) conv weight -> (k, 128, 128) bf16; tap j maps in->out."""
    k = w_oik.shape[2]
    taps = [_pad2((w_oik[:, :, j] * scale).T) for j in range(k)]
    return jnp.stack(taps, axis=0).astype(jnp.bfloat16)


def _build_gathers(batch, l_in, l_out, stride, pad, m_in, k=4):
    """0/1 selection matrices: (G[j] @ slab_in)[b*l_out+t] == slab_in[b*l_in + stride*t+j-pad]."""
    m_out = max(batch * l_out, _MIN_ROWS)
    g = np.zeros((k, m_out, m_in), np.float32)
    for bb in range(batch):
        for t in range(l_out):
            for j in range(k):
                s = stride * t + j - pad
                if 0 <= s < l_in:
                    g[j, bb * l_out + t, bb * l_in + s] = 1.0
    return jnp.asarray(g, dtype=jnp.bfloat16), m_out


# ---------------------------------- the model ----------------------------------

class EncoderTextPallas:
    """EncoderText: FeatureExtractorText (conv stem + 4 res blocks) + LinearFeatureCompressor."""

    def __init__(self, key, num_features, dim_text, class_dim):
        assert num_features <= _LANES and 5 * dim_text <= _LANES and 2 * class_dim <= _LANES
        self.num_features = num_features
        self.dim_text = dim_text
        self.class_dim = class_dim
        self.a, self.b = 2.0, 0.3
        self._gather_cache = {}

        D = dim_text
        ks = jax.random.split(key, 7)

        w0, b0 = _conv_params(ks[0], D, num_features, 4)
        stem = [_conv_taps(w0), _pad_bias(b0)]

        chans = [D, 2 * D, 3 * D, 4 * D, 5 * D]
        blocks = []
        for i in range(4):
            c_in, c_out = chans[i], chans[i + 1]
            k1, k2, k3 = jax.random.split(ks[1 + i], 3)
            w1, b1 = _conv_params(k1, c_in, c_in, 1)     # 1x1 conv
            w2, b2 = _conv_params(k2, c_out, c_in, 4)    # main conv
            wd, bd = _conv_params(k3, c_out, c_in, 4)    # downsample conv
            # eval-mode BN folded: bn1/bn2 scale the following conv weights; the downsample's
            # BN follows its conv, so it scales both weight and bias.
            blocks += [
                _pad2((w1[:, :, 0] * _BN_SCALE).T).astype(jnp.bfloat16), _pad_bias(b1),
                _conv_taps(w2, scale=_BN_SCALE), _pad_bias(b2),
                _conv_taps(wd, scale=_BN_SCALE), _pad_bias(bd * _BN_SCALE),
            ]

        wm, bm = _linear_params(ks[5], 5 * D, class_dim)
        wl, bl = _linear_params(ks[6], 5 * D, class_dim)
        head = [_pad2(jnp.concatenate([wm, wl], axis=1)).astype(jnp.bfloat16),
                _pad_bias(jnp.concatenate([bm, bl], axis=0))]

        self._flat_params = stem + blocks + head          # 2 + 24 + 2 = 28 arrays

    def _gathers(self, batch, length):
        cache_key = (batch, length)
        if cache_key not in self._gather_cache:
            L = length
            geoms = [(L, L // 2, 1), (L // 2, L // 4, 1), (L // 4, L // 8, 1),
                     (L // 8, L // 16, 1), (L // 16, 1, 0)]
            gs, m_in = [], batch * L
            for l_in, l_out, pad in geoms:
                g, m_in = _build_gathers(batch, l_in, l_out, 2, pad, m_in)
                gs.append(g)
            self._gather_cache[cache_key] = tuple(gs)
        return self._gather_cache[cache_key]

    def __call__(self, x_text):
        B, L, F = x_text.shape
        assert F == self.num_features
        # the conv stack (5x stride-2, last pad=0) must reduce the sequence to length 1
        assert L == 64, "fused kernel assumes L=64 so the conv stack reduces to length 1"
        gathers = self._gathers(B, L)

        x_slab = x_text.reshape(B * L, F).astype(jnp.float32)
        x_slab = jnp.pad(x_slab, ((0, 0), (0, _LANES - F)))   # channels-last, lane-padded

        flat = [x_slab, *gathers, *self._flat_params]
        m_out = max(B, _MIN_ROWS)

        out = pl.pallas_call(
            functools.partial(_encoder_text_kernel, a=self.a, b=self.b),
            out_shape=jax.ShapeDtypeStruct((m_out, _LANES), jnp.float32),
            in_specs=[pl.BlockSpec(memory_space=pltpu.MemorySpace.VMEM)] * len(flat),
            out_specs=pl.BlockSpec(memory_space=pltpu.MemorySpace.VMEM),
        )(*flat)

        mu = out[:B, :self.class_dim]
        logvar = out[:B, self.class_dim:2 * self.class_dim]
        return (None, None, mu, logvar)


# ------------------------------------ main --------------------------------------

if __name__ == "__main__":
    # alphabet=8, seq len=64 (so the conv stack reduces the length to 1), DIM_text=16,
    # class_dim=20, batch=2
    B, L, NUM_FEATURES, DIM_TEXT, CLASS_DIM = 2, 64, 8, 16, 20

    key = jax.random.PRNGKey(0)
    k_model, k_data = jax.random.split(key)

    model = EncoderTextPallas(k_model, NUM_FEATURES, DIM_TEXT, CLASS_DIM)

    # deterministic one-hot "text": (B, L, num_features)
    char_ids = jax.random.randint(k_data, (B, L), 0, NUM_FEATURES)
    x_text = jax.nn.one_hot(char_ids, NUM_FEATURES, dtype=jnp.float32)

    _, _, mu_content, logvar_content = model(x_text)
    jax.block_until_ready(mu_content)
    jax.block_until_ready(logvar_content)

    assert mu_content.shape == (B, CLASS_DIM)
    assert logvar_content.shape == (B, CLASS_DIM)
    assert bool(jnp.all(jnp.isfinite(mu_content)))
    assert bool(jnp.all(jnp.isfinite(logvar_content)))
    print("KERNEL_OK")
</pallas_src>

<mosaic_0001>
module attributes {stable_mosaic.version = 11 : i64} {
  func.func @_encoder_text_kernel(%arg0: memref<128x128xf32, #tpu.memory_space<vmem>>, %arg1: memref<4x64x128xbf16, #tpu.memory_space<vmem>>, %arg2: memref<4x32x64xbf16, #tpu.memory_space<vmem>>, %arg3: memref<4x16x32xbf16, #tpu.memory_space<vmem>>, %arg4: memref<4x8x16xbf16, #tpu.memory_space<vmem>>, %arg5: memref<4x8x8xbf16, #tpu.memory_space<vmem>>, %arg6: memref<4x128x128xbf16, #tpu.memory_space<vmem>>, %arg7: memref<1x128xf32, #tpu.memory_space<vmem>>, %arg8: memref<128x128xbf16, #tpu.memory_space<vmem>>, %arg9: memref<1x128xf32, #tpu.memory_space<vmem>>, %arg10: memref<4x128x128xbf16, #tpu.memory_space<vmem>>, %arg11: memref<1x128xf32, #tpu.memory_space<vmem>>, %arg12: memref<4x128x128xbf16, #tpu.memory_space<vmem>>, %arg13: memref<1x128xf32, #tpu.memory_space<vmem>>, %arg14: memref<128x128xbf16, #tpu.memory_space<vmem>>, %arg15: memref<1x128xf32, #tpu.memory_space<vmem>>, %arg16: memref<4x128x128xbf16, #tpu.memory_space<vmem>>, %arg17: memref<1x128xf32, #tpu.memory_space<vmem>>, %arg18: memref<4x128x128xbf16, #tpu.memory_space<vmem>>, %arg19: memref<1x128xf32, #tpu.memory_space<vmem>>, %arg20: memref<128x128xbf16, #tpu.memory_space<vmem>>, %arg21: memref<1x128xf32, #tpu.memory_space<vmem>>, %arg22: memref<4x128x128xbf16, #tpu.memory_space<vmem>>, %arg23: memref<1x128xf32, #tpu.memory_space<vmem>>, %arg24: memref<4x128x128xbf16, #tpu.memory_space<vmem>>, %arg25: memref<1x128xf32, #tpu.memory_space<vmem>>, %arg26: memref<128x128xbf16, #tpu.memory_space<vmem>>, %arg27: memref<1x128xf32, #tpu.memory_space<vmem>>, %arg28: memref<4x128x128xbf16, #tpu.memory_space<vmem>>, %arg29: memref<1x128xf32, #tpu.memory_space<vmem>>, %arg30: memref<4x128x128xbf16, #tpu.memory_space<vmem>>, %arg31: memref<1x128xf32, #tpu.memory_space<vmem>>, %arg32: memref<128x128xbf16, #tpu.memory_space<vmem>>, %arg33: memref<1x128xf32, #tpu.memory_space<vmem>>, %arg34: memref<8x128xf32, #tpu.memory_space<vmem>>) attributes {dimension_semantics = [], scalar_prefetch = 0 : i64, scratch_operands = 0 : i64, tpu.core_type = #tpu.core_type<tc>} {
    %c0 = arith.constant 0 : index
    %c0_0 = arith.constant 0 : index
    %0 = vector.load %arg0[%c0, %c0_0] : memref<128x128xf32, #tpu.memory_space<vmem>>, vector<128x128xf32>
    %1 = arith.truncf %0 : vector<128x128xf32> to vector<128x128xbf16>
    %c0_1 = arith.constant 0 : index
    %c0_2 = arith.constant 0 : index
    %c0_3 = arith.constant 0 : index
    %2 = vector.load %arg1[%c0_1, %c0_2, %c0_3] : memref<4x64x128xbf16, #tpu.memory_space<vmem>>, vector<1x64x128xbf16>
    %3 = vector.shape_cast %2 : vector<1x64x128xbf16> to vector<64x128xbf16>
    %cst = arith.constant dense<0.000000e+00> : vector<64x128xf32>
    %4 = tpu.matmul %3, %1, %cst {dimension_numbers = #tpu.dot_dimension_numbers<[1], [0], [0], [1], [0, 0, 1, 1], [], []>} : vector<64x128xbf16>, vector<128x128xbf16>, vector<64x128xf32> -> vector<64x128xf32>
    %5 = arith.truncf %4 : vector<64x128xf32> to vector<64x128xbf16>
    %c0_4 = arith.constant 0 : index
    %c0_5 = arith.constant 0 : index
    %c0_6 = arith.constant 0 : index
    %6 = vector.load %arg6[%c0_4, %c0_5, %c0_6] : memref<4x128x128xbf16, #tpu.memory_space<vmem>>, vector<1x128x128xbf16>
    %7 = vector.shape_cast %6 : vector<1x128x128xbf16> to vector<128x128xbf16>
    %cst_7 = arith.constant dense<0.000000e+00> : vector<64x128xf32>
    %8 = tpu.matmul %5, %7, %cst_7 {dimension_numbers = #tpu.dot_dimension_numbers<[1], [0], [0], [1], [0, 0, 1, 1], [], []>} : vector<64x128xbf16>, vector<128x128xbf16>, vector<64x128xf32> -> vector<64x128xf32>
    %c1 = arith.constant 1 : index
    %c0_8 = arith.constant 0 : index
    %c0_9 = arith.constant 0 : index
    %9 = vector.load %arg1[%c1, %c0_8, %c0_9] : memref<4x64x128xbf16, #tpu.memory_space<vmem>>, vector<1x64x128xbf16>
    %10 = vector.shape_cast %9 : vector<1x64x128xbf16> to vector<64x128xbf16>
    %cst_10 = arith.constant dense<0.000000e+00> : vector<64x128xf32>
    %11 = tpu.matmul %10, %1, %cst_10 {dimension_numbers = #tpu.dot_dimension_numbers<[1], [0], [0], [1], [0, 0, 1, 1], [], []>} : vector<64x128xbf16>, vector<128x128xbf16>, vector<64x128xf32> -> vector<64x128xf32>
    %12 = arith.truncf %11 : vector<64x128xf32> to vector<64x128xbf16>
    %c1_11 = arith.constant 1 : index
    %c0_12 = arith.constant 0 : index
    %c0_13 = arith.constant 0 : index
    %13 = vector.load %arg6[%c1_11, %c0_12, %c0_13] : memref<4x128x128xbf16, #tpu.memory_space<vmem>>, vector<1x128x128xbf16>
    %14 = vector.shape_cast %13 : vector<1x128x128xbf16> to vector<128x128xbf16>
    %cst_14 = arith.constant dense<0.000000e+00> : vector<64x128xf32>
    %15 = tpu.matmul %12, %14, %cst_14 {dimension_numbers = #tpu.dot_dimension_numbers<[1], [0], [0], [1], [0, 0, 1, 1], [], []>} : vector<64x128xbf16>, vector<128x128xbf16>, vector<64x128xf32> -> vector<64x128xf32>
    %16 = arith.addf %8, %15 : vector<64x128xf32>
    %c2 = arith.constant 2 : index
    %c0_15 = arith.constant 0 : index
    %c0_16 = arith.constant 0 : index
    %17 = vector.load %arg1[%c2, %c0_15, %c0_16] : memref<4x64x128xbf16, #tpu.memory_space<vmem>>, vector<1x64x128xbf16>
    %18 = vector.shape_cast %17 : vector<1x64x128xbf16> to vector<64x128xbf16>
    %cst_17 = arith.constant dense<0.000000e+00> : vector<64x128xf32>
    %19 = tpu.matmul %18, %1, %cst_17 {dimension_numbers = #tpu.dot_dimension_numbers<[1], [0], [0], [1], [0, 0, 1, 1], [], []>} : vector<64x128xbf16>, vector<128x128xbf16>, vector<64x128xf32> -> vector<64x128xf32>
    %20 = arith.truncf %19 : vector<64x128xf32> to vector<64x128xbf16>
    %c2_18 = arith.constant 2 : index
    %c0_19 = arith.constant 0 : index
    %c0_20 = arith.constant 0 : index
    %21 = vector.load %arg6[%c2_18, %c0_19, %c0_20] : memref<4x128x128xbf16, #tpu.memory_space<vmem>>, vector<1x128x128xbf16>
    %22 = vector.shape_cast %21 : vector<1x128x128xbf16> to vector<128x128xbf16>
    %cst_21 = arith.constant dense<0.000000e+00> : vector<64x128xf32>
    %23 = tpu.matmul %20, %22, %cst_21 {dimension_numbers = #tpu.dot_dimension_numbers<[1], [0], [0], [1], [0, 0, 1, 1], [], []>} : vector<64x128xbf16>, vector<128x128xbf16>, vector<64x128xf32> -> vector<64x128xf32>
    %24 = arith.addf %16, %23 : vector<64x128xf32>
    %c3 = arith.constant 3 : index
    %c0_22 = arith.constant 0 : index
    %c0_23 = arith.constant 0 : index
    %25 = vector.load %arg1[%c3, %c0_22, %c0_23] : memref<4x64x128xbf16, #tpu.memory_space<vmem>>, vector<1x64x128xbf16>
    %26 = vector.shape_cast %25 : vector<1x64x128xbf16> to vector<64x128xbf16>
    %cst_24 = arith.constant dense<0.000000e+00> : vector<64x128xf32>
    %27 = tpu.matmul %26, %1, %cst_24 {dimension_numbers = #tpu.dot_dimension_numbers<[1], [0], [0], [1], [0, 0, 1, 1], [], []>} : vector<64x128xbf16>, vector<128x128xbf16>, vector<64x128xf32> -> vector<64x128xf32>
    %28 = arith.truncf %27 : vector<64x128xf32> to vector<64x128xbf16>
    %c3_25 = arith.constant 3 : index
    %c0_26 = arith.constant 0 : index
    %c0_27 = arith.constant 0 : index
    %29 = vector.load %arg6[%c3_25, %c0_26, %c0_27] : memref<4x128x128xbf16, #tpu.memory_space<vmem>>, vector<1x128x128xbf16>
    %30 = vector.shape_cast %29 : vector<1x128x128xbf16> to vector<128x128xbf16>
    %cst_28 = arith.constant dense<0.000000e+00> : vector<64x128xf32>
    %31 = tpu.matmul %28, %30, %cst_28 {dimension_numbers = #tpu.dot_dimension_numbers<[1], [0], [0], [1], [0, 0, 1, 1], [], []>} : vector<64x128xbf16>, vector<128x128xbf16>, vector<64x128xf32> -> vector<64x128xf32>
    %32 = arith.addf %24, %31 : vector<64x128xf32>
    %c0_29 = arith.constant 0 : index
    %c0_30 = arith.constant 0 : index
    %33 = vector.load %arg7[%c0_29, %c0_30] : memref<1x128xf32, #tpu.memory_space<vmem>>, vector<1x128xf32>
    %34 = vector.broadcast %33 : vector<1x128xf32> to vector<64x128xf32>
    %35 = arith.addf %32, %34 : vector<64x128xf32>
    %cst_31 = arith.constant 0.000000e+00 : f32
    %36 = vector.broadcast %cst_31 : f32 to vector<64x128xf32>
    %37 = arith.maximumf %35, %36 : vector<64x128xf32>
    %38 = arith.truncf %37 : vector<64x128xf32> to vector<64x128xbf16>
    %c0_32 = arith.constant 0 : index
    %c0_33 = arith.constant 0 : index
    %39 = vector.load %arg8[%c0_32, %c0_33] : memref<128x128xbf16, #tpu.memory_space<vmem>>, vector<128x128xbf16>
    %cst_34 = arith.constant dense<0.000000e+00> : vector<64x128xf32>
    %40 = tpu.matmul %38, %39, %cst_34 {dimension_numbers = #tpu.dot_dimension_numbers<[1], [0], [0], [1], [0, 0, 1, 1], [], []>} : vector<64x128xbf16>, vector<128x128xbf16>, vector<64x128xf32> -> vector<64x128xf32>
    %c0_35 = arith.constant 0 : index
    %c0_36 = arith.constant 0 : index
    %41 = vector.load %arg9[%c0_35, %c0_36] : memref<1x128xf32, #tpu.memory_space<vmem>>, vector<1x128xf32>
    %42 = vector.broadcast %41 : vector<1x128xf32> to vector<64x128xf32>
    %43 = arith.addf %40, %42 : vector<64x128xf32>
    %cst_37 = arith.constant 0.000000e+00 : f32
    %44 = vector.broadcast %cst_37 : f32 to vector<64x128xf32>
    %45 = arith.maximumf %43, %44 : vector<64x128xf32>
    %46 = arith.truncf %45 : vector<64x128xf32> to vector<64x128xbf16>
    %c0_38 = arith.constant 0 : index
    %c0_39 = arith.constant 0 : index
    %c0_40 = arith.constant 0 : index
    %47 = vector.load %arg2[%c0_38, %c0_39, %c0_40] : memref<4x32x64xbf16, #tpu.memory_space<vmem>>, vector<1x32x64xbf16>
    %48 = vector.shape_cast %47 : vector<1x32x64xbf16> to vector<32x64xbf16>
    %cst_41 = arith.constant dense<0.000000e+00> : vector<32x128xf32>
    %49 = tpu.matmul %48, %46, %cst_41 {dimension_numbers = #tpu.dot_dimension_numbers<[1], [0], [0], [1], [0, 0, 1, 1], [], []>} : vector<32x64xbf16>, vector<64x128xbf16>, vector<32x128xf32> -> vector<32x128xf32>
    %50 = arith.truncf %49 : vector<32x128xf32> to vector<32x128xbf16>
    %c0_42 = arith.constant 0 : index
    %c0_43 = arith.constant 0 : index
    %c0_44 = arith.constant 0 : index
    %51 = vector.load %arg10[%c0_42, %c0_43, %c0_44] : memref<4x128x128xbf16, #tpu.memory_space<vmem>>, vector<1x128x128xbf16>
    %52 = vector.shape_cast %51 : vector<1x128x128xbf16> to vector<128x128xbf16>
    %cst_45 = arith.constant dense<0.000000e+00> : vector<32x128xf32>
    %53 = tpu.matmul %50, %52, %cst_45 {dimension_numbers = #tpu.dot_dimension_numbers<[1], [0], [0], [1], [0, 0, 1, 1], [], []>} : vector<32x128xbf16>, vector<128x128xbf16>, vector<32x128xf32> -> vector<32x128xf32>
    %c1_46 = arith.constant 1 : index
    %c0_47 = arith.constant 0 : index
    %c0_48 = arith.constant 0 : index
    %54 = vector.load %arg2[%c1_46, %c0_47, %c0_48] : memref<4x32x64xbf16, #tpu.memory_space<vmem>>, vector<1x32x64xbf16>
    %55 = vector.shape_cast %54 : vector<1x32x64xbf16> to vector<32x64xbf16>
    %cst_49 = arith.constant dense<0.000000e+00> : vector<32x128xf32>
    %56 = tpu.matmul %55, %46, %cst_49 {dimension_numbers = #tpu.dot_dimension_numbers<[1], [0], [0], [1], [0, 0, 1, 1], [], []>} : vector<32x64xbf16>, vector<64x128xbf16>, vector<32x128xf32> -> vector<32x128xf32>
    %57 = arith.truncf %56 : vector<32x128xf32> to vector<32x128xbf16>
    %c1_50 = arith.constant 1 : index
    %c0_51 = arith.constant 0 : index
    %c0_52 = arith.constant 0 : index
    %58 = vector.load %arg10[%c1_50, %c0_51, %c0_52] : memref<4x128x128xbf16, #tpu.memory_space<vmem>>, vector<1x128x128xbf16>
    %59 = vector.shape_cast %58 : vector<1x128x128xbf16> to vector<128x128xbf16>
    %cst_53 = arith.constant dense<0.000000e+00> : vector<32x128xf32>
    %60 = tpu.matmul %57, %59, %cst_53 {dimension_numbers = #tpu.dot_dimension_numbers<[1], [0], [0], [1], [0, 0, 1, 1], [], []>} : vector<32x128xbf16>, vector<128x128xbf16>, vector<32x128xf32> -> vector<32x128xf32>
    %61 = arith.addf %53, %60 : vector<32x128xf32>
    %c2_54 = arith.constant 2 : index
    %c0_55 = arith.constant 0 : index
    %c0_56 = arith.constant 0 : index
    %62 = vector.load %arg2[%c2_54, %c0_55, %c0_56] : memref<4x32x64xbf16, #tpu.memory_space<vmem>>, vector<1x32x64xbf16>
    %63 = vector.shape_cast %62 : vector<1x32x64xbf16> to vector<32x64xbf16>
    %cst_57 = arith.constant dense<0.000000e+00> : vector<32x128xf32>
    %64 = tpu.matmul %63, %46, %cst_57 {dimension_numbers = #tpu.dot_dimension_numbers<[1], [0], [0], [1], [0, 0, 1, 1], [], []>} : vector<32x64xbf16>, vector<64x128xbf16>, vector<32x128xf32> -> vector<32x128xf32>
    %65 = arith.truncf %64 : vector<32x128xf32> to vector<32x128xbf16>
    %c2_58 = arith.constant 2 : index
    %c0_59 = arith.constant 0 : index
    %c0_60 = arith.constant 0 : index
    %66 = vector.load %arg10[%c2_58, %c0_59, %c0_60] : memref<4x128x128xbf16, #tpu.memory_space<vmem>>, vector<1x128x128xbf16>
    %67 = vector.shape_cast %66 : vector<1x128x128xbf16> to vector<128x128xbf16>
    %cst_61 = arith.constant dense<0.000000e+00> : vector<32x128xf32>
    %68 = tpu.matmul %65, %67, %cst_61 {dimension_numbers = #tpu.dot_dimension_numbers<[1], [0], [0], [1], [0, 0, 1, 1], [], []>} : vector<32x128xbf16>, vector<128x128xbf16>, vector<32x128xf32> -> vector<32x128xf32>
    %69 = arith.addf %61, %68 : vector<32x128xf32>
    %c3_62 = arith.constant 3 : index
    %c0_63 = arith.constant 0 : index
    %c0_64 = arith.constant 0 : index
    %70 = vector.load %arg2[%c3_62, %c0_63, %c0_64] : memref<4x32x64xbf16, #tpu.memory_space<vmem>>, vector<1x32x64xbf16>
    %71 = vector.shape_cast %70 : vector<1x32x64xbf16> to vector<32x64xbf16>
    %cst_65 = arith.constant dense<0.000000e+00> : vector<32x128xf32>
    %72 = tpu.matmul %71, %46, %cst_65 {dimension_numbers = #tpu.dot_dimension_numbers<[1], [0], [0], [1], [0, 0, 1, 1], [], []>} : vector<32x64xbf16>, vector<64x128xbf16>, vector<32x128xf32> -> vector<32x128xf32>
    %73 = arith.truncf %72 : vector<32x128xf32> to vector<32x128xbf16>
    %c3_66 = arith.constant 3 : index
    %c0_67 = arith.constant 0 : index
    %c0_68 = arith.constant 0 : index
    %74 = vector.load %arg10[%c3_66, %c0_67, %c0_68] : memref<4x128x128xbf16, #tpu.memory_space<vmem>>, vector<1x128x128xbf16>
    %75 = vector.shape_cast %74 : vector<1x128x128xbf16> to vector<128x128xbf16>
    %cst_69 = arith.constant dense<0.000000e+00> : vector<32x128xf32>
    %76 = tpu.matmul %73, %75, %cst_69 {dimension_numbers = #tpu.dot_dimension_numbers<[1], [0], [0], [1], [0, 0, 1, 1], [], []>} : vector<32x128xbf16>, vector<128x128xbf16>, vector<32x128xf32> -> vector<32x128xf32>
    %77 = arith.addf %69, %76 : vector<32x128xf32>
    %c0_70 = arith.constant 0 : index
    %c0_71 = arith.constant 0 : index
    %78 = vector.load %arg11[%c0_70, %c0_71] : memref<1x128xf32, #tpu.memory_space<vmem>>, vector<1x128xf32>
    %79 = vector.broadcast %78 : vector<1x128xf32> to vector<32x128xf32>
    %80 = arith.addf %77, %79 : vector<32x128xf32>
    %81 = arith.truncf %35 : vector<64x128xf32> to vector<64x128xbf16>
    %c0_72 = arith.constant 0 : index
    %c0_73 = arith.constant 0 : index
    %c0_74 = arith.constant 0 : index
    %82 = vector.load %arg2[%c0_72, %c0_73, %c0_74] : memref<4x32x64xbf16, #tpu.memory_space<vmem>>, vector<1x32x64xbf16>
    %83 = vector.shape_cast %82 : vector<1x32x64xbf16> to vector<32x64xbf16>
    %cst_75 = arith.constant dense<0.000000e+00> : vector<32x128xf32>
    %84 = tpu.matmul %83, %81, %cst_75 {dimension_numbers = #tpu.dot_dimension_numbers<[1], [0], [0], [1], [0, 0, 1, 1], [], []>} : vector<32x64xbf16>, vector<64x128xbf16>, vector<32x128xf32> -> vector<32x128xf32>
    %85 = arith.truncf %84 : vector<32x128xf32> to vector<32x128xbf16>
    %c0_76 = arith.constant 0 : index
    %c0_77 = arith.constant 0 : index
    %c0_78 = arith.constant 0 : index
    %86 = vector.load %arg12[%c0_76, %c0_77, %c0_78] : memref<4x128x128xbf16, #tpu.memory_space<vmem>>, vector<1x128x128xbf16>
    %87 = vector.shape_cast %86 : vector<1x128x128xbf16> to vector<128x128xbf16>
    %cst_79 = arith.constant dense<0.000000e+00> : vector<32x128xf32>
    %88 = tpu.matmul %85, %87, %cst_79 {dimension_numbers = #tpu.dot_dimension_numbers<[1], [0], [0], [1], [0, 0, 1, 1], [], []>} : vector<32x128xbf16>, vector<128x128xbf16>, vector<32x128xf32> -> vector<32x128xf32>
    %c1_80 = arith.constant 1 : index
    %c0_81 = arith.constant 0 : index
    %c0_82 = arith.constant 0 : index
    %89 = vector.load %arg2[%c1_80, %c0_81, %c0_82] : memref<4x32x64xbf16, #tpu.memory_space<vmem>>, vector<1x32x64xbf16>
    %90 = vector.shape_cast %89 : vector<1x32x64xbf16> to vector<32x64xbf16>
    %cst_83 = arith.constant dense<0.000000e+00> : vector<32x128xf32>
    %91 = tpu.matmul %90, %81, %cst_83 {dimension_numbers = #tpu.dot_dimension_numbers<[1], [0], [0], [1], [0, 0, 1, 1], [], []>} : vector<32x64xbf16>, vector<64x128xbf16>, vector<32x128xf32> -> vector<32x128xf32>
    %92 = arith.truncf %91 : vector<32x128xf32> to vector<32x128xbf16>
    %c1_84 = arith.constant 1 : index
    %c0_85 = arith.constant 0 : index
    %c0_86 = arith.constant 0 : index
    %93 = vector.load %arg12[%c1_84, %c0_85, %c0_86] : memref<4x128x128xbf16, #tpu.memory_space<vmem>>, vector<1x128x128xbf16>
    %94 = vector.shape_cast %93 : vector<1x128x128xbf16> to vector<128x128xbf16>
    %cst_87 = arith.constant dense<0.000000e+00> : vector<32x128xf32>
    %95 = tpu.matmul %92, %94, %cst_87 {dimension_numbers = #tpu.dot_dimension_numbers<[1], [0], [0], [1], [0, 0, 1, 1], [], []>} : vector<32x128xbf16>, vector<128x128xbf16>, vector<32x128xf32> -> vector<32x128xf32>
    %96 = arith.addf %88, %95 : vector<32x128xf32>
    %c2_88 = arith.constant 2 : index
    %c0_89 = arith.constant 0 : index
    %c0_90 = arith.constant 0 : index
    %97 = vector.load %arg2[%c2_88, %c0_89, %c0_90] : memref<4x32x64xbf16, #tpu.memory_space<vmem>>, vector<1x32x64xbf16>
    %98 = vector.shape_cast %97 : vector<1x32x64xbf16> to vector<32x64xbf16>
    %cst_91 = arith.constant dense<0.000000e+00> : vector<32x128xf32>
    %99 = tpu.matmul %98, %81, %cst_91 {dimension_numbers = #tpu.dot_dimension_numbers<[1], [0], [0], [1], [0, 0, 1, 1], [], []>} : vector<32x64xbf16>, vector<64x128xbf16>, vector<32x128xf32> -> vector<32x128xf32>
    %100 = arith.truncf %99 : vector<32x128xf32> to vector<32x128xbf16>
    %c2_92 = arith.constant 2 : index
    %c0_93 = arith.constant 0 : index
    %c0_94 = arith.constant 0 : index
    %101 = vector.load %arg12[%c2_92, %c0_93, %c0_94] : memref<4x128x128xbf16, #tpu.memory_space<vmem>>, vector<1x128x128xbf16>
    %102 = vector.shape_cast %101 : vector<1x128x128xbf16> to vector<128x128xbf16>
    %cst_95 = arith.constant dense<0.000000e+00> : vector<32x128xf32>
    %103 = tpu.matmul %100, %102, %cst_95 {dimension_numbers = #tpu.dot_dimension_numbers<[1], [0], [0], [1], [0, 0, 1, 1], [], []>} : vector<32x128xbf16>, vector<128x128xbf16>, vector<32x128xf32> -> vector<32x128xf32>
    %104 = arith.addf %96, %103 : vector<32x128xf32>
    %c3_96 = arith.constant 3 : index
    %c0_97 = arith.constant 0 : index
    %c0_98 = arith.constant 0 : index
    %105 = vector.load %arg2[%c3_96, %c0_97, %c0_98] : memref<4x32x64xbf16, #tpu.memory_space<vmem>>, vector<1x32x64xbf16>
    %106 = vector.shape_cast %105 : vector<1x32x64xbf16> to vector<32x64xbf16>
    %cst_99 = arith.constant dense<0.000000e+00> : vector<32x128xf32>
    %107 = tpu.matmul %106, %81, %cst_99 {dimension_numbers = #tpu.dot_dimension_numbers<[1], [0], [0], [1], [0, 0, 1, 1], [], []>} : vector<32x64xbf16>, vector<64x128xbf16>, vector<32x128xf32> -> vector<32x128xf32>
    %108 = arith.truncf %107 : vector<32x128xf32> to vector<32x128xbf16>
    %c3_100 = arith.constant 3 : index
    %c0_101 = arith.constant 0 : index
    %c0_102 = arith.constant 0 : index
    %109 = vector.load %arg12[%c3_100, %c0_101, %c0_102] : memref<4x128x128xbf16, #tpu.memory_space<vmem>>, vector<1x128x128xbf16>
    %110 = vector.shape_cast %109 : vector<1x128x128xbf16> to vector<128x128xbf16>
    %cst_103 = arith.constant dense<0.000000e+00> : vector<32x128xf32>
    %111 = tpu.matmul %108, %110, %cst_103 {dimension_numbers = #tpu.dot_dimension_numbers<[1], [0], [0], [1], [0, 0, 1, 1], [], []>} : vector<32x128xbf16>, vector<128x128xbf16>, vector<32x128xf32> -> vector<32x128xf32>
    %112 = arith.addf %104, %111 : vector<32x128xf32>
    %c0_104 = arith.constant 0 : index
    %c0_105 = arith.constant 0 : index
    %113 = vector.load %arg13[%c0_104, %c0_105] : memref<1x128xf32, #tpu.memory_space<vmem>>, vector<1x128xf32>
    %114 = vector.broadcast %113 : vector<1x128xf32> to vector<32x128xf32>
    %115 = arith.addf %112, %114 : vector<32x128xf32>
    %cst_106 = arith.constant 2.000000e+00 : f32
    %116 = vector.broadcast %cst_106 : f32 to vector<32x128xf32>
    %117 = arith.mulf %116, %115 : vector<32x128xf32>
    %cst_107 = arith.constant 3.000000e-01 : f32
    %118 = vector.broadcast %cst_107 : f32 to vector<32x128xf32>
    %119 = arith.mulf %118, %80 : vector<32x128xf32>
    %120 = arith.addf %117, %119 : vector<32x128xf32>
    %cst_108 = arith.constant 0.000000e+00 : f32
    %121 = vector.broadcast %cst_108 : f32 to vector<32x128xf32>
    %122 = arith.maximumf %120, %121 : vector<32x128xf32>
    %123 = arith.truncf %122 : vector<32x128xf32> to vector<32x128xbf16>
    %c0_109 = arith.constant 0 : index
    %c0_110 = arith.constant 0 : index
    %124 = vector.load %arg14[%c0_109, %c0_110] : memref<128x128xbf16, #tpu.memory_space<vmem>>, vector<128x128xbf16>
    %cst_111 = arith.constant dense<0.000000e+00> : vector<32x128xf32>
    %125 = tpu.matmul %123, %124, %cst_111 {dimension_numbers = #tpu.dot_dimension_numbers<[1], [0], [0], [1], [0, 0, 1, 1], [], []>} : vector<32x128xbf16>, vector<128x128xbf16>, vector<32x128xf32> -> vector<32x128xf32>
    %c0_112 = arith.constant 0 : index
    %c0_113 = arith.constant 0 : index
    %126 = vector.load %arg15[%c0_112, %c0_113] : memref<1x128xf32, #tpu.memory_space<vmem>>, vector<1x128xf32>
    %127 = vector.broadcast %126 : vector<1x128xf32> to vector<32x128xf32>
    %128 = arith.addf %125, %127 : vector<32x128xf32>
    %cst_114 = arith.constant 0.000000e+00 : f32
    %129 = vector.broadcast %cst_114 : f32 to vector<32x128xf32>
    %130 = arith.maximumf %128, %129 : vector<32x128xf32>
    %131 = arith.truncf %130 : vector<32x128xf32> to vector<32x128xbf16>
    %c0_115 = arith.constant 0 : index
    %c0_116 = arith.constant 0 : index
    %c0_117 = arith.constant 0 : index
    %132 = vector.load %arg3[%c0_115, %c0_116, %c0_117] : memref<4x16x32xbf16, #tpu.memory_space<vmem>>, vector<1x16x32xbf16>
    %133 = vector.shape_cast %132 : vector<1x16x32xbf16> to vector<16x32xbf16>
    %cst_118 = arith.constant dense<0.000000e+00> : vector<16x128xf32>
    %134 = tpu.matmul %133, %131, %cst_118 {dimension_numbers = #tpu.dot_dimension_numbers<[1], [0], [0], [1], [0, 0, 1, 1], [], []>} : vector<16x32xbf16>, vector<32x128xbf16>, vector<16x128xf32> -> vector<16x128xf32>
    %135 = arith.truncf %134 : vector<16x128xf32> to vector<16x128xbf16>
    %c0_119 = arith.constant 0 : index
    %c0_120 = arith.constant 0 : index
    %c0_121 = arith.constant 0 : index
    %136 = vector.load %arg16[%c0_119, %c0_120, %c0_121] : memref<4x128x128xbf16, #tpu.memory_space<vmem>>, vector<1x128x128xbf16>
    %137 = vector.shape_cast %136 : vector<1x128x128xbf16> to vector<128x128xbf16>
    %cst_122 = arith.constant dense<0.000000e+00> : vector<16x128xf32>
    %138 = tpu.matmul %135, %137, %cst_122 {dimension_numbers = #tpu.dot_dimension_numbers<[1], [0], [0], [1], [0, 0, 1, 1], [], []>} : vector<16x128xbf16>, vector<128x128xbf16>, vector<16x128xf32> -> vector<16x128xf32>
    %c1_123 = arith.constant 1 : index
    %c0_124 = arith.constant 0 : index
    %c0_125 = arith.constant 0 : index
    %139 = vector.load %arg3[%c1_123, %c0_124, %c0_125] : memref<4x16x32xbf16, #tpu.memory_space<vmem>>, vector<1x16x32xbf16>
    %140 = vector.shape_cast %139 : vector<1x16x32xbf16> to vector<16x32xbf16>
    %cst_126 = arith.constant dense<0.000000e+00> : vector<16x128xf32>
    %141 = tpu.matmul %140, %131, %cst_126 {dimension_numbers = #tpu.dot_dimension_numbers<[1], [0], [0], [1], [0, 0, 1, 1], [], []>} : vector<16x32xbf16>, vector<32x128xbf16>, vector<16x128xf32> -> vector<16x128xf32>
    %142 = arith.truncf %141 : vector<16x128xf32> to vector<16x128xbf16>
    %c1_127 = arith.constant 1 : index
    %c0_128 = arith.constant 0 : index
    %c0_129 = arith.constant 0 : index
    %143 = vector.load %arg16[%c1_127, %c0_128, %c0_129] : memref<4x128x128xbf16, #tpu.memory_space<vmem>>, vector<1x128x128xbf16>
    %144 = vector.shape_cast %143 : vector<1x128x128xbf16> to vector<128x128xbf16>
    %cst_130 = arith.constant dense<0.000000e+00> : vector<16x128xf32>
    %145 = tpu.matmul %142, %144, %cst_130 {dimension_numbers = #tpu.dot_dimension_numbers<[1], [0], [0], [1], [0, 0, 1, 1], [], []>} : vector<16x128xbf16>, vector<128x128xbf16>, vector<16x128xf32> -> vector<16x128xf32>
    %146 = arith.addf %138, %145 : vector<16x128xf32>
    %c2_131 = arith.constant 2 : index
    %c0_132 = arith.constant 0 : index
    %c0_133 = arith.constant 0 : index
    %147 = vector.load %arg3[%c2_131, %c0_132, %c0_133] : memref<4x16x32xbf16, #tpu.memory_space<vmem>>, vector<1x16x32xbf16>
    %148 = vector.shape_cast %147 : vector<1x16x32xbf16> to vector<16x32xbf16>
    %cst_134 = arith.constant dense<0.000000e+00> : vector<16x128xf32>
    %149 = tpu.matmul %148, %131, %cst_134 {dimension_numbers = #tpu.dot_dimension_numbers<[1], [0], [0], [1], [0, 0, 1, 1], [], []>} : vector<16x32xbf16>, vector<32x128xbf16>, vector<16x128xf32> -> vector<16x128xf32>
    %150 = arith.truncf %149 : vector<16x128xf32> to vector<16x128xbf16>
    %c2_135 = arith.constant 2 : index
    %c0_136 = arith.constant 0 : index
    %c0_137 = arith.constant 0 : index
    %151 = vector.load %arg16[%c2_135, %c0_136, %c0_137] : memref<4x128x128xbf16, #tpu.memory_space<vmem>>, vector<1x128x128xbf16>
    %152 = vector.shape_cast %151 : vector<1x128x128xbf16> to vector<128x128xbf16>
    %cst_138 = arith.constant dense<0.000000e+00> : vector<16x128xf32>
    %153 = tpu.matmul %150, %152, %cst_138 {dimension_numbers = #tpu.dot_dimension_numbers<[1], [0], [0], [1], [0, 0, 1, 1], [], []>} : vector<16x128xbf16>, vector<128x128xbf16>, vector<16x128xf32> -> vector<16x128xf32>
    %154 = arith.addf %146, %153 : vector<16x128xf32>
    %c3_139 = arith.constant 3 : index
    %c0_140 = arith.constant 0 : index
    %c0_141 = arith.constant 0 : index
    %155 = vector.load %arg3[%c3_139, %c0_140, %c0_141] : memref<4x16x32xbf16, #tpu.memory_space<vmem>>, vector<1x16x32xbf16>
    %156 = vector.shape_cast %155 : vector<1x16x32xbf16> to vector<16x32xbf16>
    %cst_142 = arith.constant dense<0.000000e+00> : vector<16x128xf32>
    %157 = tpu.matmul %156, %131, %cst_142 {dimension_numbers = #tpu.dot_dimension_numbers<[1], [0], [0], [1], [0, 0, 1, 1], [], []>} : vector<16x32xbf16>, vector<32x128xbf16>, vector<16x128xf32> -> vector<16x128xf32>
    %158 = arith.truncf %157 : vector<16x128xf32> to vector<16x128xbf16>
    %c3_143 = arith.constant 3 : index
    %c0_144 = arith.constant 0 : index
    %c0_145 = arith.constant 0 : index
    %159 = vector.load %arg16[%c3_143, %c0_144, %c0_145] : memref<4x128x128xbf16, #tpu.memory_space<vmem>>, vector<1x128x128xbf16>
    %160 = vector.shape_cast %159 : vector<1x128x128xbf16> to vector<128x128xbf16>
    %cst_146 = arith.constant dense<0.000000e+00> : vector<16x128xf32>
    %161 = tpu.matmul %158, %160, %cst_146 {dimension_numbers = #tpu.dot_dimension_numbers<[1], [0], [0], [1], [0, 0, 1, 1], [], []>} : vector<16x128xbf16>, vector<128x128xbf16>, vector<16x128xf32> -> vector<16x128xf32>
    %162 = arith.addf %154, %161 : vector<16x128xf32>
    %c0_147 = arith.constant 0 : index
    %c0_148 = arith.constant 0 : index
    %163 = vector.load %arg17[%c0_147, %c0_148] : memref<1x128xf32, #tpu.memory_space<vmem>>, vector<1x128xf32>
    %164 = vector.broadcast %163 : vector<1x128xf32> to vector<16x128xf32>
    %165 = arith.addf %162, %164 : vector<16x128xf32>
    %166 = arith.truncf %120 : vector<32x128xf32> to vector<32x128xbf16>
    %c0_149 = arith.constant 0 : index
    %c0_150 = arith.constant 0 : index
    %c0_151 = arith.constant 0 : index
    %167 = vector.load %arg3[%c0_149, %c0_150, %c0_151] : memref<4x16x32xbf16, #tpu.memory_space<vmem>>, vector<1x16x32xbf16>
    %168 = vector.shape_cast %167 : vector<1x16x32xbf16> to vector<16x32xbf16>
    %cst_152 = arith.constant dense<0.000000e+00> : vector<16x128xf32>
    %169 = tpu.matmul %168, %166, %cst_152 {dimension_numbers = #tpu.dot_dimension_numbers<[1], [0], [0], [1], [0, 0, 1, 1], [], []>} : vector<16x32xbf16>, vector<32x128xbf16>, vector<16x128xf32> -> vector<16x128xf32>
    %170 = arith.truncf %169 : vector<16x128xf32> to vector<16x128xbf16>
    %c0_153 = arith.constant 0 : index
    %c0_154 = arith.constant 0 : index
    %c0_155 = arith.constant 0 : index
    %171 = vector.load %arg18[%c0_153, %c0_154, %c0_155] : memref<4x128x128xbf16, #tpu.memory_space<vmem>>, vector<1x128x128xbf16>
    %172 = vector.shape_cast %171 : vector<1x128x128xbf16> to vector<128x128xbf16>
    %cst_156 = arith.constant dense<0.000000e+00> : vector<16x128xf32>
    %173 = tpu.matmul %170, %172, %cst_156 {dimension_numbers = #tpu.dot_dimension_numbers<[1], [0], [0], [1], [0, 0, 1, 1], [], []>} : vector<16x128xbf16>, vector<128x128xbf16>, vector<16x128xf32> -> vector<16x128xf32>
    %c1_157 = arith.constant 1 : index
    %c0_158 = arith.constant 0 : index
    %c0_159 = arith.constant 0 : index
    %174 = vector.load %arg3[%c1_157, %c0_158, %c0_159] : memref<4x16x32xbf16, #tpu.memory_space<vmem>>, vector<1x16x32xbf16>
    %175 = vector.shape_cast %174 : vector<1x16x32xbf16> to vector<16x32xbf16>
    %cst_160 = arith.constant dense<0.000000e+00> : vector<16x128xf32>
    %176 = tpu.matmul %175, %166, %cst_160 {dimension_numbers = #tpu.dot_dimension_numbers<[1], [0], [0], [1], [0, 0, 1, 1], [], []>} : vector<16x32xbf16>, vector<32x128xbf16>, vector<16x128xf32> -> vector<16x128xf32>
    %177 = arith.truncf %176 : vector<16x128xf32> to vector<16x128xbf16>
    %c1_161 = arith.constant 1 : index
    %c0_162 = arith.constant 0 : index
    %c0_163 = arith.constant 0 : index
    %178 = vector.load %arg18[%c1_161, %c0_162, %c0_163] : memref<4x128x128xbf16, #tpu.memory_space<vmem>>, vector<1x128x128xbf16>
    %179 = vector.shape_cast %178 : vector<1x128x128xbf16> to vector<128x128xbf16>
    %cst_164 = arith.constant dense<0.000000e+00> : vector<16x128xf32>
    %180 = tpu.matmul %177, %179, %cst_164 {dimension_numbers = #tpu.dot_dimension_numbers<[1], [0], [0], [1], [0, 0, 1, 1], [], []>} : vector<16x128xbf16>, vector<128x128xbf16>, vector<16x128xf32> -> vector<16x128xf32>
    %181 = arith.addf %173, %180 : vector<16x128xf32>
    %c2_165 = arith.constant 2 : index
    %c0_166 = arith.constant 0 : index
    %c0_167 = arith.constant 0 : index
    %182 = vector.load %arg3[%c2_165, %c0_166, %c0_167] : memref<4x16x32xbf16, #tpu.memory_space<vmem>>, vector<1x16x32xbf16>
    %183 = vector.shape_cast %182 : vector<1x16x32xbf16> to vector<16x32xbf16>
    %cst_168 = arith.constant dense<0.000000e+00> : vector<16x128xf32>
    %184 = tpu.matmul %183, %166, %cst_168 {dimension_numbers = #tpu.dot_dimension_numbers<[1], [0], [0], [1], [0, 0, 1, 1], [], []>} : vector<16x32xbf16>, vector<32x128xbf16>, vector<16x128xf32> -> vector<16x128xf32>
    %185 = arith.truncf %184 : vector<16x128xf32> to vector<16x128xbf16>
    %c2_169 = arith.constant 2 : index
    %c0_170 = arith.constant 0 : index
    %c0_171 = arith.constant 0 : index
    %186 = vector.load %arg18[%c2_169, %c0_170, %c0_171] : memref<4x128x128xbf16, #tpu.memory_space<vmem>>, vector<1x128x128xbf16>
    %187 = vector.shape_cast %186 : vector<1x128x128xbf16> to vector<128x128xbf16>
    %cst_172 = arith.constant dense<0.000000e+00> : vector<16x128xf32>
    %188 = tpu.matmul %185, %187, %cst_172 {dimension_numbers = #tpu.dot_dimension_numbers<[1], [0], [0], [1], [0, 0, 1, 1], [], []>} : vector<16x128xbf16>, vector<128x128xbf16>, vector<16x128xf32> -> vector<16x128xf32>
    %189 = arith.addf %181, %188 : vector<16x128xf32>
    %c3_173 = arith.constant 3 : index
    %c0_174 = arith.constant 0 : index
    %c0_175 = arith.constant 0 : index
    %190 = vector.load %arg3[%c3_173, %c0_174, %c0_175] : memref<4x16x32xbf16, #tpu.memory_space<vmem>>, vector<1x16x32xbf16>
    %191 = vector.shape_cast %190 : vector<1x16x32xbf16> to vector<16x32xbf16>
    %cst_176 = arith.constant dense<0.000000e+00> : vector<16x128xf32>
    %192 = tpu.matmul %191, %166, %cst_176 {dimension_numbers = #tpu.dot_dimension_numbers<[1], [0], [0], [1], [0, 0, 1, 1], [], []>} : vector<16x32xbf16>, vector<32x128xbf16>, vector<16x128xf32> -> vector<16x128xf32>
    %193 = arith.truncf %192 : vector<16x128xf32> to vector<16x128xbf16>
    %c3_177 = arith.constant 3 : index
    %c0_178 = arith.constant 0 : index
    %c0_179 = arith.constant 0 : index
    %194 = vector.load %arg18[%c3_177, %c0_178, %c0_179] : memref<4x128x128xbf16, #tpu.memory_space<vmem>>, vector<1x128x128xbf16>
    %195 = vector.shape_cast %194 : vector<1x128x128xbf16> to vector<128x128xbf16>
    %cst_180 = arith.constant dense<0.000000e+00> : vector<16x128xf32>
    %196 = tpu.matmul %193, %195, %cst_180 {dimension_numbers = #tpu.dot_dimension_numbers<[1], [0], [0], [1], [0, 0, 1, 1], [], []>} : vector<16x128xbf16>, vector<128x128xbf16>, vector<16x128xf32> -> vector<16x128xf32>
    %197 = arith.addf %189, %196 : vector<16x128xf32>
    %c0_181 = arith.constant 0 : index
    %c0_182 = arith.constant 0 : index
    %198 = vector.load %arg19[%c0_181, %c0_182] : memref<1x128xf32, #tpu.memory_space<vmem>>, vector<1x128xf32>
    %199 = vector.broadcast %198 : vector<1x128xf32> to vector<16x128xf32>
    %200 = arith.addf %197, %199 : vector<16x128xf32>
    %cst_183 = arith.constant 2.000000e+00 : f32
    %201 = vector.broadcast %cst_183 : f32 to vector<16x128xf32>
    %202 = arith.mulf %201, %200 : vector<16x128xf32>
    %cst_184 = arith.constant 3.000000e-01 : f32
    %203 = vector.broadcast %cst_184 : f32 to vector<16x128xf32>
    %204 = arith.mulf %203, %165 : vector<16x128xf32>
    %205 = arith.addf %202, %204 : vector<16x128xf32>
    %cst_185 = arith.constant 0.000000e+00 : f32
    %206 = vector.broadcast %cst_185 : f32 to vector<16x128xf32>
    %207 = arith.maximumf %205, %206 : vector<16x128xf32>
    %208 = arith.truncf %207 : vector<16x128xf32> to vector<16x128xbf16>
    %c0_186 = arith.constant 0 : index
    %c0_187 = arith.constant 0 : index
    %209 = vector.load %arg20[%c0_186, %c0_187] : memref<128x128xbf16, #tpu.memory_space<vmem>>, vector<128x128xbf16>
    %cst_188 = arith.constant dense<0.000000e+00> : vector<16x128xf32>
    %210 = tpu.matmul %208, %209, %cst_188 {dimension_numbers = #tpu.dot_dimension_numbers<[1], [0], [0], [1], [0, 0, 1, 1], [], []>} : vector<16x128xbf16>, vector<128x128xbf16>, vector<16x128xf32> -> vector<16x128xf32>
    %c0_189 = arith.constant 0 : index
    %c0_190 = arith.constant 0 : index
    %211 = vector.load %arg21[%c0_189, %c0_190] : memref<1x128xf32, #tpu.memory_space<vmem>>, vector<1x128xf32>
    %212 = vector.broadcast %211 : vector<1x128xf32> to vector<16x128xf32>
    %213 = arith.addf %210, %212 : vector<16x128xf32>
    %cst_191 = arith.constant 0.000000e+00 : f32
    %214 = vector.broadcast %cst_191 : f32 to vector<16x128xf32>
    %215 = arith.maximumf %213, %214 : vector<16x128xf32>
    %216 = arith.truncf %215 : vector<16x128xf32> to vector<16x128xbf16>
    %c0_192 = arith.constant 0 : index
    %c0_193 = arith.constant 0 : index
    %c0_194 = arith.constant 0 : index
    %217 = vector.load %arg4[%c0_192, %c0_193, %c0_194] : memref<4x8x16xbf16, #tpu.memory_space<vmem>>, vector<1x8x16xbf16>
    %218 = vector.shape_cast %217 : vector<1x8x16xbf16> to vector<8x16xbf16>
    %cst_195 = arith.constant dense<0.000000e+00> : vector<8x128xf32>
    %219 = tpu.matmul %218, %216, %cst_195 {dimension_numbers = #tpu.dot_dimension_numbers<[1], [0], [0], [1], [0, 0, 1, 1], [], []>} : vector<8x16xbf16>, vector<16x128xbf16>, vector<8x128xf32> -> vector<8x128xf32>
    %220 = arith.truncf %219 : vector<8x128xf32> to vector<8x128xbf16>
    %c0_196 = arith.constant 0 : index
    %c0_197 = arith.constant 0 : index
    %c0_198 = arith.constant 0 : index
    %221 = vector.load %arg22[%c0_196, %c0_197, %c0_198] : memref<4x128x128xbf16, #tpu.memory_space<vmem>>, vector<1x128x128xbf16>
    %222 = vector.shape_cast %221 : vector<1x128x128xbf16> to vector<128x128xbf16>
    %cst_199 = arith.constant dense<0.000000e+00> : vector<8x128xf32>
    %223 = tpu.matmul %220, %222, %cst_199 {dimension_numbers = #tpu.dot_dimension_numbers<[1], [0], [0], [1], [0, 0, 1, 1], [], []>} : vector<8x128xbf16>, vector<128x128xbf16>, vector<8x128xf32> -> vector<8x128xf32>
    %c1_200 = arith.constant 1 : index
    %c0_201 = arith.constant 0 : index
    %c0_202 = arith.constant 0 : index
    %224 = vector.load %arg4[%c1_200, %c0_201, %c0_202] : memref<4x8x16xbf16, #tpu.memory_space<vmem>>, vector<1x8x16xbf16>
    %225 = vector.shape_cast %224 : vector<1x8x16xbf16> to vector<8x16xbf16>
    %cst_203 = arith.constant dense<0.000000e+00> : vector<8x128xf32>
    %226 = tpu.matmul %225, %216, %cst_203 {dimension_numbers = #tpu.dot_dimension_numbers<[1], [0], [0], [1], [0, 0, 1, 1], [], []>} : vector<8x16xbf16>, vector<16x128xbf16>, vector<8x128xf32> -> vector<8x128xf32>
    %227 = arith.truncf %226 : vector<8x128xf32> to vector<8x128xbf16>
    %c1_204 = arith.constant 1 : index
    %c0_205 = arith.constant 0 : index
    %c0_206 = arith.constant 0 : index
    %228 = vector.load %arg22[%c1_204, %c0_205, %c0_206] : memref<4x128x128xbf16, #tpu.memory_space<vmem>>, vector<1x128x128xbf16>
    %229 = vector.shape_cast %228 : vector<1x128x128xbf16> to vector<128x128xbf16>
    %cst_207 = arith.constant dense<0.000000e+00> : vector<8x128xf32>
    %230 = tpu.matmul %227, %229, %cst_207 {dimension_numbers = #tpu.dot_dimension_numbers<[1], [0], [0], [1], [0, 0, 1, 1], [], []>} : vector<8x128xbf16>, vector<128x128xbf16>, vector<8x128xf32> -> vector<8x128xf32>
    %231 = arith.addf %223, %230 : vector<8x128xf32>
    %c2_208 = arith.constant 2 : index
    %c0_209 = arith.constant 0 : index
    %c0_210 = arith.constant 0 : index
    %232 = vector.load %arg4[%c2_208, %c0_209, %c0_210] : memref<4x8x16xbf16, #tpu.memory_space<vmem>>, vector<1x8x16xbf16>
    %233 = vector.shape_cast %232 : vector<1x8x16xbf16> to vector<8x16xbf16>
    %cst_211 = arith.constant dense<0.000000e+00> : vector<8x128xf32>
    %234 = tpu.matmul %233, %216, %cst_211 {dimension_numbers = #tpu.dot_dimension_numbers<[1], [0], [0], [1], [0, 0, 1, 1], [], []>} : vector<8x16xbf16>, vector<16x128xbf16>, vector<8x128xf32> -> vector<8x128xf32>
    %235 = arith.truncf %234 : vector<8x128xf32> to vector<8x128xbf16>
    %c2_212 = arith.constant 2 : index
    %c0_213 = arith.constant 0 : index
    %c0_214 = arith.constant 0 : index
    %236 = vector.load %arg22[%c2_212, %c0_213, %c0_214] : memref<4x128x128xbf16, #tpu.memory_space<vmem>>, vector<1x128x128xbf16>
    %237 = vector.shape_cast %236 : vector<1x128x128xbf16> to vector<128x128xbf16>
    %cst_215 = arith.constant dense<0.000000e+00> : vector<8x128xf32>
    %238 = tpu.matmul %235, %237, %cst_215 {dimension_numbers = #tpu.dot_dimension_numbers<[1], [0], [0], [1], [0, 0, 1, 1], [], []>} : vector<8x128xbf16>, vector<128x128xbf16>, vector<8x128xf32> -> vector<8x128xf32>
    %239 = arith.addf %231, %238 : vector<8x128xf32>
    %c3_216 = arith.constant 3 : index
    %c0_217 = arith.constant 0 : index
    %c0_218 = arith.constant 0 : index
    %240 = vector.load %arg4[%c3_216, %c0_217, %c0_218] : memref<4x8x16xbf16, #tpu.memory_space<vmem>>, vector<1x8x16xbf16>
    %241 = vector.shape_cast %240 : vector<1x8x16xbf16> to vector<8x16xbf16>
    %cst_219 = arith.constant dense<0.000000e+00> : vector<8x128xf32>
    %242 = tpu.matmul %241, %216, %cst_219 {dimension_numbers = #tpu.dot_dimension_numbers<[1], [0], [0], [1], [0, 0, 1, 1], [], []>} : vector<8x16xbf16>, vector<16x128xbf16>, vector<8x128xf32> -> vector<8x128xf32>
    %243 = arith.truncf %242 : vector<8x128xf32> to vector<8x128xbf16>
    %c3_220 = arith.constant 3 : index
    %c0_221 = arith.constant 0 : index
    %c0_222 = arith.constant 0 : index
    %244 = vector.load %arg22[%c3_220, %c0_221, %c0_222] : memref<4x128x128xbf16, #tpu.memory_space<vmem>>, vector<1x128x128xbf16>
    %245 = vector.shape_cast %244 : vector<1x128x128xbf16> to vector<128x128xbf16>
    %cst_223 = arith.constant dense<0.000000e+00> : vector<8x128xf32>
    %246 = tpu.matmul %243, %245, %cst_223 {dimension_numbers = #tpu.dot_dimension_numbers<[1], [0], [0], [1], [0, 0, 1, 1], [], []>} : vector<8x128xbf16>, vector<128x128xbf16>, vector<8x128xf32> -> vector<8x128xf32>
    %247 = arith.addf %239, %246 : vector<8x128xf32>
    %c0_224 = arith.constant 0 : index
    %c0_225 = arith.constant 0 : index
    %248 = vector.load %arg23[%c0_224, %c0_225] : memref<1x128xf32, #tpu.memory_space<vmem>>, vector<1x128xf32>
    %249 = vector.broadcast %248 : vector<1x128xf32> to vector<8x128xf32>
    %250 = arith.addf %247, %249 : vector<8x128xf32>
    %251 = arith.truncf %205 : vector<16x128xf32> to vector<16x128xbf16>
    %c0_226 = arith.constant 0 : index
    %c0_227 = arith.constant 0 : index
    %c0_228 = arith.constant 0 : index
    %252 = vector.load %arg4[%c0_226, %c0_227, %c0_228] : memref<4x8x16xbf16, #tpu.memory_space<vmem>>, vector<1x8x16xbf16>
    %253 = vector.shape_cast %252 : vector<1x8x16xbf16> to vector<8x16xbf16>
    %cst_229 = arith.constant dense<0.000000e+00> : vector<8x128xf32>
    %254 = tpu.matmul %253, %251, %cst_229 {dimension_numbers = #tpu.dot_dimension_numbers<[1], [0], [0], [1], [0, 0, 1, 1], [], []>} : vector<8x16xbf16>, vector<16x128xbf16>, vector<8x128xf32> -> vector<8x128xf32>
    %255 = arith.truncf %254 : vector<8x128xf32> to vector<8x128xbf16>
    %c0_230 = arith.constant 0 : index
    %c0_231 = arith.constant 0 : index
    %c0_232 = arith.constant 0 : index
    %256 = vector.load %arg24[%c0_230, %c0_231, %c0_232] : memref<4x128x128xbf16, #tpu.memory_space<vmem>>, vector<1x128x128xbf16>
    %257 = vector.shape_cast %256 : vector<1x128x128xbf16> to vector<128x128xbf16>
    %cst_233 = arith.constant dense<0.000000e+00> : vector<8x128xf32>
    %258 = tpu.matmul %255, %257, %cst_233 {dimension_numbers = #tpu.dot_dimension_numbers<[1], [0], [0], [1], [0, 0, 1, 1], [], []>} : vector<8x128xbf16>, vector<128x128xbf16>, vector<8x128xf32> -> vector<8x128xf32>
    %c1_234 = arith.constant 1 : index
    %c0_235 = arith.constant 0 : index
    %c0_236 = arith.constant 0 : index
    %259 = vector.load %arg4[%c1_234, %c0_235, %c0_236] : memref<4x8x16xbf16, #tpu.memory_space<vmem>>, vector<1x8x16xbf16>
    %260 = vector.shape_cast %259 : vector<1x8x16xbf16> to vector<8x16xbf16>
    %cst_237 = arith.constant dense<0.000000e+00> : vector<8x128xf32>
    %261 = tpu.matmul %260, %251, %cst_237 {dimension_numbers = #tpu.dot_dimension_numbers<[1], [0], [0], [1], [0, 0, 1, 1], [], []>} : vector<8x16xbf16>, vector<16x128xbf16>, vector<8x128xf32> -> vector<8x128xf32>
    %262 = arith.truncf %261 : vector<8x128xf32> to vector<8x128xbf16>
    %c1_238 = arith.constant 1 : index
    %c0_239 = arith.constant 0 : index
    %c0_240 = arith.constant 0 : index
    %263 = vector.load %arg24[%c1_238, %c0_239, %c0_240] : memref<4x128x128xbf16, #tpu.memory_space<vmem>>, vector<1x128x128xbf16>
    %264 = vector.shape_cast %263 : vector<1x128x128xbf16> to vector<128x128xbf16>
    %cst_241 = arith.constant dense<0.000000e+00> : vector<8x128xf32>
    %265 = tpu.matmul %262, %264, %cst_241 {dimension_numbers = #tpu.dot_dimension_numbers<[1], [0], [0], [1], [0, 0, 1, 1], [], []>} : vector<8x128xbf16>, vector<128x128xbf16>, vector<8x128xf32> -> vector<8x128xf32>
    %266 = arith.addf %258, %265 : vector<8x128xf32>
    %c2_242 = arith.constant 2 : index
    %c0_243 = arith.constant 0 : index
    %c0_244 = arith.constant 0 : index
    %267 = vector.load %arg4[%c2_242, %c0_243, %c0_244] : memref<4x8x16xbf16, #tpu.memory_space<vmem>>, vector<1x8x16xbf16>
    %268 = vector.shape_cast %267 : vector<1x8x16xbf16> to vector<8x16xbf16>
    %cst_245 = arith.constant dense<0.000000e+00> : vector<8x128xf32>
    %269 = tpu.matmul %268, %251, %cst_245 {dimension_numbers = #tpu.dot_dimension_numbers<[1], [0], [0], [1], [0, 0, 1, 1], [], []>} : vector<8x16xbf16>, vector<16x128xbf16>, vector<8x128xf32> -> vector<8x128xf32>
    %270 = arith.truncf %269 : vector<8x128xf32> to vector<8x128xbf16>
    %c2_246 = arith.constant 2 : index
    %c0_247 = arith.constant 0 : index
    %c0_248 = arith.constant 0 : index
    %271 = vector.load %arg24[%c2_246, %c0_247, %c0_248] : memref<4x128x128xbf16, #tpu.memory_space<vmem>>, vector<1x128x128xbf16>
    %272 = vector.shape_cast %271 : vector<1x128x128xbf16> to vector<128x128xbf16>
    %cst_249 = arith.constant dense<0.000000e+00> : vector<8x128xf32>
    %273 = tpu.matmul %270, %272, %cst_249 {dimension_numbers = #tpu.dot_dimension_numbers<[1], [0], [0], [1], [0, 0, 1, 1], [], []>} : vector<8x128xbf16>, vector<128x128xbf16>, vector<8x128xf32> -> vector<8x128xf32>
    %274 = arith.addf %266, %273 : vector<8x128xf32>
    %c3_250 = arith.constant 3 : index
    %c0_251 = arith.constant 0 : index
    %c0_252 = arith.constant 0 : index
    %275 = vector.load %arg4[%c3_250, %c0_251, %c0_252] : memref<4x8x16xbf16, #tpu.memory_space<vmem>>, vector<1x8x16xbf16>
    %276 = vector.shape_cast %275 : vector<1x8x16xbf16> to vector<8x16xbf16>
    %cst_253 = arith.constant dense<0.000000e+00> : vector<8x128xf32>
    %277 = tpu.matmul %276, %251, %cst_253 {dimension_numbers = #tpu.dot_dimension_numbers<[1], [0], [0], [1], [0, 0, 1, 1], [], []>} : vector<8x16xbf16>, vector<16x128xbf16>, vector<8x128xf32> -> vector<8x128xf32>
    %278 = arith.truncf %277 : vector<8x128xf32> to vector<8x128xbf16>
    %c3_254 = arith.constant 3 : index
    %c0_255 = arith.constant 0 : index
    %c0_256 = arith.constant 0 : index
    %279 = vector.load %arg24[%c3_254, %c0_255, %c0_256] : memref<4x128x128xbf16, #tpu.memory_space<vmem>>, vector<1x128x128xbf16>
    %280 = vector.shape_cast %279 : vector<1x128x128xbf16> to vector<128x128xbf16>
    %cst_257 = arith.constant dense<0.000000e+00> : vector<8x128xf32>
    %281 = tpu.matmul %278, %280, %cst_257 {dimension_numbers = #tpu.dot_dimension_numbers<[1], [0], [0], [1], [0, 0, 1, 1], [], []>} : vector<8x128xbf16>, vector<128x128xbf16>, vector<8x128xf32> -> vector<8x128xf32>
    %282 = arith.addf %274, %281 : vector<8x128xf32>
    %c0_258 = arith.constant 0 : index
    %c0_259 = arith.constant 0 : index
    %283 = vector.load %arg25[%c0_258, %c0_259] : memref<1x128xf32, #tpu.memory_space<vmem>>, vector<1x128xf32>
    %284 = vector.broadcast %283 : vector<1x128xf32> to vector<8x128xf32>
    %285 = arith.addf %282, %284 : vector<8x128xf32>
    %cst_260 = arith.constant 2.000000e+00 : f32
    %286 = vector.broadcast %cst_260 : f32 to vector<8x128xf32>
    %287 = arith.mulf %286, %285 : vector<8x128xf32>
    %cst_261 = arith.constant 3.000000e-01 : f32
    %288 = vector.broadcast %cst_261 : f32 to vector<8x128xf32>
    %289 = arith.mulf %288, %250 : vector<8x128xf32>
    %290 = arith.addf %287, %289 : vector<8x128xf32>
    %cst_262 = arith.constant 0.000000e+00 : f32
    %291 = vector.broadcast %cst_262 : f32 to vector<8x128xf32>
    %292 = arith.maximumf %290, %291 : vector<8x128xf32>
    %293 = arith.truncf %292 : vector<8x128xf32> to vector<8x128xbf16>
    %c0_263 = arith.constant 0 : index
    %c0_264 = arith.constant 0 : index
    %294 = vector.load %arg26[%c0_263, %c0_264] : memref<128x128xbf16, #tpu.memory_space<vmem>>, vector<128x128xbf16>
    %cst_265 = arith.constant dense<0.000000e+00> : vector<8x128xf32>
    %295 = tpu.matmul %293, %294, %cst_265 {dimension_numbers = #tpu.dot_dimension_numbers<[1], [0], [0], [1], [0, 0, 1, 1], [], []>} : vector<8x128xbf16>, vector<128x128xbf16>, vector<8x128xf32> -> vector<8x128xf32>
    %c0_266 = arith.constant 0 : index
    %c0_267 = arith.constant 0 : index
    %296 = vector.load %arg27[%c0_266, %c0_267] : memref<1x128xf32, #tpu.memory_space<vmem>>, vector<1x128xf32>
    %297 = vector.broadcast %296 : vector<1x128xf32> to vector<8x128xf32>
    %298 = arith.addf %295, %297 : vector<8x128xf32>
    %cst_268 = arith.constant 0.000000e+00 : f32
    %299 = vector.broadcast %cst_268 : f32 to vector<8x128xf32>
    %300 = arith.maximumf %298, %299 : vector<8x128xf32>
    %301 = arith.truncf %300 : vector<8x128xf32> to vector<8x128xbf16>
    %c0_269 = arith.constant 0 : index
    %c0_270 = arith.constant 0 : index
    %c0_271 = arith.constant 0 : index
    %302 = vector.load %arg5[%c0_269, %c0_270, %c0_271] : memref<4x8x8xbf16, #tpu.memory_space<vmem>>, vector<1x8x8xbf16>
    %303 = vector.shape_cast %302 : vector<1x8x8xbf16> to vector<8x8xbf16>
    %cst_272 = arith.constant dense<0.000000e+00> : vector<8x128xf32>
    %304 = tpu.matmul %303, %301, %cst_272 {dimension_numbers = #tpu.dot_dimension_numbers<[1], [0], [0], [1], [0, 0, 1, 1], [], []>} : vector<8x8xbf16>, vector<8x128xbf16>, vector<8x128xf32> -> vector<8x128xf32>
    %305 = arith.truncf %304 : vector<8x128xf32> to vector<8x128xbf16>
    %c0_273 = arith.constant 0 : index
    %c0_274 = arith.constant 0 : index
    %c0_275 = arith.constant 0 : index
    %306 = vector.load %arg28[%c0_273, %c0_274, %c0_275] : memref<4x128x128xbf16, #tpu.memory_space<vmem>>, vector<1x128x128xbf16>
    %307 = vector.shape_cast %306 : vector<1x128x128xbf16> to vector<128x128xbf16>
    %cst_276 = arith.constant dense<0.000000e+00> : vector<8x128xf32>
    %308 = tpu.matmul %305, %307, %cst_276 {dimension_numbers = #tpu.dot_dimension_numbers<[1], [0], [0], [1], [0, 0, 1, 1], [], []>} : vector<8x128xbf16>, vector<128x128xbf16>, vector<8x128xf32> -> vector<8x128xf32>
    %c1_277 = arith.constant 1 : index
    %c0_278 = arith.constant 0 : index
    %c0_279 = arith.constant 0 : index
    %309 = vector.load %arg5[%c1_277, %c0_278, %c0_279] : memref<4x8x8xbf16, #tpu.memory_space<vmem>>, vector<1x8x8xbf16>
    %310 = vector.shape_cast %309 : vector<1x8x8xbf16> to vector<8x8xbf16>
    %cst_280 = arith.constant dense<0.000000e+00> : vector<8x128xf32>
    %311 = tpu.matmul %310, %301, %cst_280 {dimension_numbers = #tpu.dot_dimension_numbers<[1], [0], [0], [1], [0, 0, 1, 1], [], []>} : vector<8x8xbf16>, vector<8x128xbf16>, vector<8x128xf32> -> vector<8x128xf32>
    %312 = arith.truncf %311 : vector<8x128xf32> to vector<8x128xbf16>
    %c1_281 = arith.constant 1 : index
    %c0_282 = arith.constant 0 : index
    %c0_283 = arith.constant 0 : index
    %313 = vector.load %arg28[%c1_281, %c0_282, %c0_283] : memref<4x128x128xbf16, #tpu.memory_space<vmem>>, vector<1x128x128xbf16>
    %314 = vector.shape_cast %313 : vector<1x128x128xbf16> to vector<128x128xbf16>
    %cst_284 = arith.constant dense<0.000000e+00> : vector<8x128xf32>
    %315 = tpu.matmul %312, %314, %cst_284 {dimension_numbers = #tpu.dot_dimension_numbers<[1], [0], [0], [1], [0, 0, 1, 1], [], []>} : vector<8x128xbf16>, vector<128x128xbf16>, vector<8x128xf32> -> vector<8x128xf32>
    %316 = arith.addf %308, %315 : vector<8x128xf32>
    %c2_285 = arith.constant 2 : index
    %c0_286 = arith.constant 0 : index
    %c0_287 = arith.constant 0 : index
    %317 = vector.load %arg5[%c2_285, %c0_286, %c0_287] : memref<4x8x8xbf16, #tpu.memory_space<vmem>>, vector<1x8x8xbf16>
    %318 = vector.shape_cast %317 : vector<1x8x8xbf16> to vector<8x8xbf16>
    %cst_288 = arith.constant dense<0.000000e+00> : vector<8x128xf32>
    %319 = tpu.matmul %318, %301, %cst_288 {dimension_numbers = #tpu.dot_dimension_numbers<[1], [0], [0], [1], [0, 0, 1, 1], [], []>} : vector<8x8xbf16>, vector<8x128xbf16>, vector<8x128xf32> -> vector<8x128xf32>
    %320 = arith.truncf %319 : vector<8x128xf32> to vector<8x128xbf16>
    %c2_289 = arith.constant 2 : index
    %c0_290 = arith.constant 0 : index
    %c0_291 = arith.constant 0 : index
    %321 = vector.load %arg28[%c2_289, %c0_290, %c0_291] : memref<4x128x128xbf16, #tpu.memory_space<vmem>>, vector<1x128x128xbf16>
    %322 = vector.shape_cast %321 : vector<1x128x128xbf16> to vector<128x128xbf16>
    %cst_292 = arith.constant dense<0.000000e+00> : vector<8x128xf32>
    %323 = tpu.matmul %320, %322, %cst_292 {dimension_numbers = #tpu.dot_dimension_numbers<[1], [0], [0], [1], [0, 0, 1, 1], [], []>} : vector<8x128xbf16>, vector<128x128xbf16>, vector<8x128xf32> -> vector<8x128xf32>
    %324 = arith.addf %316, %323 : vector<8x128xf32>
    %c3_293 = arith.constant 3 : index
    %c0_294 = arith.constant 0 : index
    %c0_295 = arith.constant 0 : index
    %325 = vector.load %arg5[%c3_293, %c0_294, %c0_295] : memref<4x8x8xbf16, #tpu.memory_space<vmem>>, vector<1x8x8xbf16>
    %326 = vector.shape_cast %325 : vector<1x8x8xbf16> to vector<8x8xbf16>
    %cst_296 = arith.constant dense<0.000000e+00> : vector<8x128xf32>
    %327 = tpu.matmul %326, %301, %cst_296 {dimension_numbers = #tpu.dot_dimension_numbers<[1], [0], [0], [1], [0, 0, 1, 1], [], []>} : vector<8x8xbf16>, vector<8x128xbf16>, vector<8x128xf32> -> vector<8x128xf32>
    %328 = arith.truncf %327 : vector<8x128xf32> to vector<8x128xbf16>
    %c3_297 = arith.constant 3 : index
    %c0_298 = arith.constant 0 : index
    %c0_299 = arith.constant 0 : index
    %329 = vector.load %arg28[%c3_297, %c0_298, %c0_299] : memref<4x128x128xbf16, #tpu.memory_space<vmem>>, vector<1x128x128xbf16>
    %330 = vector.shape_cast %329 : vector<1x128x128xbf16> to vector<128x128xbf16>
    %cst_300 = arith.constant dense<0.000000e+00> : vector<8x128xf32>
    %331 = tpu.matmul %328, %330, %cst_300 {dimension_numbers = #tpu.dot_dimension_numbers<[1], [0], [0], [1], [0, 0, 1, 1], [], []>} : vector<8x128xbf16>, vector<128x128xbf16>, vector<8x128xf32> -> vector<8x128xf32>
    %332 = arith.addf %324, %331 : vector<8x128xf32>
    %c0_301 = arith.constant 0 : index
    %c0_302 = arith.constant 0 : index
    %333 = vector.load %arg29[%c0_301, %c0_302] : memref<1x128xf32, #tpu.memory_space<vmem>>, vector<1x128xf32>
    %334 = vector.broadcast %333 : vector<1x128xf32> to vector<8x128xf32>
    %335 = arith.addf %332, %334 : vector<8x128xf32>
    %336 = arith.truncf %290 : vector<8x128xf32> to vector<8x128xbf16>
    %c0_303 = arith.constant 0 : index
    %c0_304 = arith.constant 0 : index
    %c0_305 = arith.constant 0 : index
    %337 = vector.load %arg5[%c0_303, %c0_304, %c0_305] : memref<4x8x8xbf16, #tpu.memory_space<vmem>>, vector<1x8x8xbf16>
    %338 = vector.shape_cast %337 : vector<1x8x8xbf16> to vector<8x8xbf16>
    %cst_306 = arith.constant dense<0.000000e+00> : vector<8x128xf32>
    %339 = tpu.matmul %338, %336, %cst_306 {dimension_numbers = #tpu.dot_dimension_numbers<[1], [0], [0], [1], [0, 0, 1, 1], [], []>} : vector<8x8xbf16>, vector<8x128xbf16>, vector<8x128xf32> -> vector<8x128xf32>
    %340 = arith.truncf %339 : vector<8x128xf32> to vector<8x128xbf16>
    %c0_307 = arith.constant 0 : index
    %c0_308 = arith.constant 0 : index
    %c0_309 = arith.constant 0 : index
    %341 = vector.load %arg30[%c0_307, %c0_308, %c0_309] : memref<4x128x128xbf16, #tpu.memory_space<vmem>>, vector<1x128x128xbf16>
    %342 = vector.shape_cast %341 : vector<1x128x128xbf16> to vector<128x128xbf16>
    %cst_310 = arith.constant dense<0.000000e+00> : vector<8x128xf32>
    %343 = tpu.matmul %340, %342, %cst_310 {dimension_numbers = #tpu.dot_dimension_numbers<[1], [0], [0], [1], [0, 0, 1, 1], [], []>} : vector<8x128xbf16>, vector<128x128xbf16>, vector<8x128xf32> -> vector<8x128xf32>
    %c1_311 = arith.constant 1 : index
    %c0_312 = arith.constant 0 : index
    %c0_313 = arith.constant 0 : index
    %344 = vector.load %arg5[%c1_311, %c0_312, %c0_313] : memref<4x8x8xbf16, #tpu.memory_space<vmem>>, vector<1x8x8xbf16>
    %345 = vector.shape_cast %344 : vector<1x8x8xbf16> to vector<8x8xbf16>
    %cst_314 = arith.constant dense<0.000000e+00> : vector<8x128xf32>
    %346 = tpu.matmul %345, %336, %cst_314 {dimension_numbers = #tpu.dot_dimension_numbers<[1], [0], [0], [1], [0, 0, 1, 1], [], []>} : vector<8x8xbf16>, vector<8x128xbf16>, vector<8x128xf32> -> vector<8x128xf32>
    %347 = arith.truncf %346 : vector<8x128xf32> to vector<8x128xbf16>
    %c1_315 = arith.constant 1 : index
    %c0_316 = arith.constant 0 : index
    %c0_317 = arith.constant 0 : index
    %348 = vector.load %arg30[%c1_315, %c0_316, %c0_317] : memref<4x128x128xbf16, #tpu.memory_space<vmem>>, vector<1x128x128xbf16>
    %349 = vector.shape_cast %348 : vector<1x128x128xbf16> to vector<128x128xbf16>
    %cst_318 = arith.constant dense<0.000000e+00> : vector<8x128xf32>
    %350 = tpu.matmul %347, %349, %cst_318 {dimension_numbers = #tpu.dot_dimension_numbers<[1], [0], [0], [1], [0, 0, 1, 1], [], []>} : vector<8x128xbf16>, vector<128x128xbf16>, vector<8x128xf32> -> vector<8x128xf32>
    %351 = arith.addf %343, %350 : vector<8x128xf32>
    %c2_319 = arith.constant 2 : index
    %c0_320 = arith.constant 0 : index
    %c0_321 = arith.constant 0 : index
    %352 = vector.load %arg5[%c2_319, %c0_320, %c0_321] : memref<4x8x8xbf16, #tpu.memory_space<vmem>>, vector<1x8x8xbf16>
    %353 = vector.shape_cast %352 : vector<1x8x8xbf16> to vector<8x8xbf16>
    %cst_322 = arith.constant dense<0.000000e+00> : vector<8x128xf32>
    %354 = tpu.matmul %353, %336, %cst_322 {dimension_numbers = #tpu.dot_dimension_numbers<[1], [0], [0], [1], [0, 0, 1, 1], [], []>} : vector<8x8xbf16>, vector<8x128xbf16>, vector<8x128xf32> -> vector<8x128xf32>
    %355 = arith.truncf %354 : vector<8x128xf32> to vector<8x128xbf16>
    %c2_323 = arith.constant 2 : index
    %c0_324 = arith.constant 0 : index
    %c0_325 = arith.constant 0 : index
    %356 = vector.load %arg30[%c2_323, %c0_324, %c0_325] : memref<4x128x128xbf16, #tpu.memory_space<vmem>>, vector<1x128x128xbf16>
    %357 = vector.shape_cast %356 : vector<1x128x128xbf16> to vector<128x128xbf16>
    %cst_326 = arith.constant dense<0.000000e+00> : vector<8x128xf32>
    %358 = tpu.matmul %355, %357, %cst_326 {dimension_numbers = #tpu.dot_dimension_numbers<[1], [0], [0], [1], [0, 0, 1, 1], [], []>} : vector<8x128xbf16>, vector<128x128xbf16>, vector<8x128xf32> -> vector<8x128xf32>
    %359 = arith.addf %351, %358 : vector<8x128xf32>
    %c3_327 = arith.constant 3 : index
    %c0_328 = arith.constant 0 : index
    %c0_329 = arith.constant 0 : index
    %360 = vector.load %arg5[%c3_327, %c0_328, %c0_329] : memref<4x8x8xbf16, #tpu.memory_space<vmem>>, vector<1x8x8xbf16>
    %361 = vector.shape_cast %360 : vector<1x8x8xbf16> to vector<8x8xbf16>
    %cst_330 = arith.constant dense<0.000000e+00> : vector<8x128xf32>
    %362 = tpu.matmul %361, %336, %cst_330 {dimension_numbers = #tpu.dot_dimension_numbers<[1], [0], [0], [1], [0, 0, 1, 1], [], []>} : vector<8x8xbf16>, vector<8x128xbf16>, vector<8x128xf32> -> vector<8x128xf32>
    %363 = arith.truncf %362 : vector<8x128xf32> to vector<8x128xbf16>
    %c3_331 = arith.constant 3 : index
    %c0_332 = arith.constant 0 : index
    %c0_333 = arith.constant 0 : index
    %364 = vector.load %arg30[%c3_331, %c0_332, %c0_333] : memref<4x128x128xbf16, #tpu.memory_space<vmem>>, vector<1x128x128xbf16>
    %365 = vector.shape_cast %364 : vector<1x128x128xbf16> to vector<128x128xbf16>
    %cst_334 = arith.constant dense<0.000000e+00> : vector<8x128xf32>
    %366 = tpu.matmul %363, %365, %cst_334 {dimension_numbers = #tpu.dot_dimension_numbers<[1], [0], [0], [1], [0, 0, 1, 1], [], []>} : vector<8x128xbf16>, vector<128x128xbf16>, vector<8x128xf32> -> vector<8x128xf32>
    %367 = arith.addf %359, %366 : vector<8x128xf32>
    %c0_335 = arith.constant 0 : index
    %c0_336 = arith.constant 0 : index
    %368 = vector.load %arg31[%c0_335, %c0_336] : memref<1x128xf32, #tpu.memory_space<vmem>>, vector<1x128xf32>
    %369 = vector.broadcast %368 : vector<1x128xf32> to vector<8x128xf32>
    %370 = arith.addf %367, %369 : vector<8x128xf32>
    %cst_337 = arith.constant 2.000000e+00 : f32
    %371 = vector.broadcast %cst_337 : f32 to vector<8x128xf32>
    %372 = arith.mulf %371, %370 : vector<8x128xf32>
    %cst_338 = arith.constant 3.000000e-01 : f32
    %373 = vector.broadcast %cst_338 : f32 to vector<8x128xf32>
    %374 = arith.mulf %373, %335 : vector<8x128xf32>
    %375 = arith.addf %372, %374 : vector<8x128xf32>
    %376 = arith.truncf %375 : vector<8x128xf32> to vector<8x128xbf16>
    %c0_339 = arith.constant 0 : index
    %c0_340 = arith.constant 0 : index
    %377 = vector.load %arg32[%c0_339, %c0_340] : memref<128x128xbf16, #tpu.memory_space<vmem>>, vector<128x128xbf16>
    %cst_341 = arith.constant dense<0.000000e+00> : vector<8x128xf32>
    %378 = tpu.matmul %376, %377, %cst_341 {dimension_numbers = #tpu.dot_dimension_numbers<[1], [0], [0], [1], [0, 0, 1, 1], [], []>} : vector<8x128xbf16>, vector<128x128xbf16>, vector<8x128xf32> -> vector<8x128xf32>
    %c0_342 = arith.constant 0 : index
    %c0_343 = arith.constant 0 : index
    %379 = vector.load %arg33[%c0_342, %c0_343] : memref<1x128xf32, #tpu.memory_space<vmem>>, vector<1x128xf32>
    %380 = vector.broadcast %379 : vector<1x128xf32> to vector<8x128xf32>
    %381 = arith.addf %378, %380 : vector<8x128xf32>
    %c0_344 = arith.constant 0 : index
    %c0_345 = arith.constant 0 : index
    %382 = vector.load %arg34[%c0_344, %c0_345] : memref<8x128xf32, #tpu.memory_space<vmem>>, vector<8x128xf32>
    tpu.vector_store %arg34[%c0_344, %c0_345], %381 {strides = array<i32>} : memref<8x128xf32, #tpu.memory_space<vmem>>, vector<8x128xf32>,
    return
  }
}

</mosaic_0001>

<llo_original>
// kernel: tpu_custom_call.1
$region0: #{tpu_custom_call.1}
  #allocation0 [shape = 'u32[]', space=smem, size = 0x4, offset = 0x4, fixed_abs, tag = 'smem constant byte address 0x4 - core index']
  #allocation1 [shape = 'u32[72,128]{1,0:T(1,128)}', space=vmem, size = 0x9000, scoped, tag = 'internal scratch']
  %s0 = inlined_call_operand.smem [shape: u32[35], index: -1, kind: input, shape index: {}]
  %s1 = sld [smem:[%s0]]
  %s2 = scalar_lea.smem %s0, 1
  %s3 = sld [smem:[%s2]]
  %s4 = scalar_lea.smem %s0, 2
  %s5 = sld [smem:[%s4]]
  %s6 = scalar_lea.smem %s0, 3
  %s7 = sld [smem:[%s6]]
  %s8 = scalar_lea.smem %s0, 4
  %s9 = sld [smem:[%s8]]
  %s10 = scalar_lea.smem %s0, 5
  %s11 = sld [smem:[%s10]]
  %s12 = scalar_lea.smem %s0, 6
  %s13 = sld [smem:[%s12]]
  %s14 = scalar_lea.smem %s0, 7
  %s15 = sld [smem:[%s14]]
  %s16 = scalar_lea.smem %s0, 8
  %s17 = sld [smem:[%s16]]
  %s18 = scalar_lea.smem %s0, 9
  %s19 = sld [smem:[%s18]]
  %s20 = scalar_lea.smem %s0, 10
  %s21 = sld [smem:[%s20]]
  %s22 = scalar_lea.smem %s0, 11
  %s23 = sld [smem:[%s22]]
  %s24 = scalar_lea.smem %s0, 12
  %s25 = sld [smem:[%s24]]
  %s26 = scalar_lea.smem %s0, 13
  %s27 = sld [smem:[%s26]]
  %s28 = scalar_lea.smem %s0, 14
  %s29 = sld [smem:[%s28]]
  %s30 = scalar_lea.smem %s0, 15
  %s31 = sld [smem:[%s30]]
  %s32 = scalar_lea.smem %s0, 16
  %s33 = sld [smem:[%s32]]
  %s34 = scalar_lea.smem %s0, 17
  %s35 = sld [smem:[%s34]]
  %s36 = scalar_lea.smem %s0, 18
  %s37 = sld [smem:[%s36]]
  %s38 = scalar_lea.smem %s0, 19
  %s39 = sld [smem:[%s38]]
  %s40 = scalar_lea.smem %s0, 20
  %s41 = sld [smem:[%s40]]
  %s42 = scalar_lea.smem %s0, 21
  %s43 = sld [smem:[%s42]]
  %s44 = scalar_lea.smem %s0, 22
  %s45 = sld [smem:[%s44]]
  %s46 = scalar_lea.smem %s0, 23
  %s47 = sld [smem:[%s46]]
  %s48 = scalar_lea.smem %s0, 24
  %s49 = sld [smem:[%s48]]
  %s50 = scalar_lea.smem %s0, 25
  %s51 = sld [smem:[%s50]]
  %s52 = scalar_lea.smem %s0, 26
  %s53 = sld [smem:[%s52]]
  %s54 = scalar_lea.smem %s0, 27
  %s55 = sld [smem:[%s54]]
  %s56 = scalar_lea.smem %s0, 28
  %s57 = sld [smem:[%s56]]
  %s58 = scalar_lea.smem %s0, 29
  %s59 = sld [smem:[%s58]]
  %s60 = scalar_lea.smem %s0, 30
  %s61 = sld [smem:[%s60]]
  %s62 = scalar_lea.smem %s0, 31
  %s63 = sld [smem:[%s62]]
  %s64 = scalar_lea.smem %s0, 32
  %s65 = sld [smem:[%s64]]
  %s66 = scalar_lea.smem %s0, 33
  %s67 = sld [smem:[%s66]]
  %s68 = scalar_lea.smem %s0, 34
  %s69 = sld [smem:[%s68]]
  %s70 = sld [smem:[#allocation0]]
  $region226: #{tpu_custom_call.1} parent=0
    _
  %s72 = ssub.s32 1, %s70
  %s73 = scalar_select 0, %s72, %s70
  $region1: #{tpu_custom_call.1} parent=0
    #allocation2 [shape = 'u8[65536]{0}', space=vmem, size = 0x10000, scoped, tag = 'input window, operand 0, single buffered']
    #allocation3 [shape = 's32[1]{0}', space=sflag, size = 0x4, scoped, tag = 'scoped memory for tpu_custom_call.1']
    #allocation4 [shape = 's32[1]{0}', space=sflag, size = 0x4, scoped, tag = 'scoped memory for tpu_custom_call.1']
    #allocation5 [shape = 'u8[65536]{0}', space=vmem, size = 0x10000, scoped, tag = 'input window, operand 1, single buffered']
    #allocation6 [shape = 's32[1]{0}', space=sflag, size = 0x4, scoped, tag = 'scoped memory for tpu_custom_call.1']
    #allocation7 [shape = 'u8[32768]{0}', space=vmem, size = 0x8000, scoped, tag = 'input window, operand 2, single buffered']
    #allocation8 [shape = 'u8[16384]{0}', space=vmem, size = 0x4000, scoped, tag = 'input window, operand 3, single buffered']
    #allocation9 [shape = 's32[1]{0}', space=sflag, size = 0x4, scoped, tag = 'scoped memory for tpu_custom_call.1']
    #allocation10 [shape = 'u8[8192]{0}', space=vmem, size = 0x2000, scoped, tag = 'input window, operand 4, single buffered']
    #allocation11 [shape = 'u8[8192]{0}', space=vmem, size = 0x2000, scoped, tag = 'input window, operand 5, single buffered']
    #allocation12 [shape = 's32[1]{0}', space=sflag, size = 0x4, scoped, tag = 'scoped memory for tpu_custom_call.1']
    #allocation13 [shape = 'u8[131072]{0}', space=vmem, size = 0x20000, scoped, tag = 'input window, operand 6, single buffered']
    #allocation14 [shape = 'u8[32768]{0}', space=vmem, size = 0x8000, scoped, tag = 'input window, operand 8, single buffered']
    #allocation15 [shape = 's32[1]{0}', space=sflag, size = 0x4, scoped, tag = 'scoped memory for tpu_custom_call.1']
    #allocation16 [shape = 'u8[131072]{0}', space=vmem, size = 0x20000, scoped, tag = 'input window, operand 10, single buffered']
    #allocation17 [shape = 'u8[131072]{0}', space=vmem, size = 0x20000, scoped, tag = 'input window, operand 12, single buffered']
    #allocation18 [shape = 's32[1]{0}', space=sflag, size = 0x4, scoped, tag = 'scoped memory for tpu_custom_call.1']
    #allocation19 [shape = 'u8[32768]{0}', space=vmem, size = 0x8000, scoped, tag = 'input window, operand 14, single buffered']
    #allocation20 [shape = 'u8[131072]{0}', space=vmem, size = 0x20000, scoped, tag = 'input window, operand 16, single buffered']
    #allocation21 [shape = 's32[1]{0}', space=sflag, size = 0x4, scoped, tag = 'scoped memory for tpu_custom_call.1']
    #allocation22 [shape = 'u8[131072]{0}', space=vmem, size = 0x20000, scoped, tag = 'input window, operand 18, single buffered']
    #allocation23 [shape = 'u8[32768]{0}', space=vmem, size = 0x8000, scoped, tag = 'input window, operand 20, single buffered']
    #allocation24 [shape = 's32[1]{0}', space=sflag, size = 0x4, scoped, tag = 'scoped memory for tpu_custom_call.1']
    #allocation25 [shape = 'u8[131072]{0}', space=vmem, size = 0x20000, scoped, tag = 'input window, operand 22, single buffered']
    #allocation26 [shape = 'u8[131072]{0}', space=vmem, size = 0x20000, scoped, tag = 'input window, operand 24, single buffered']
    #allocation27 [shape = 's32[1]{0}', space=sflag, size = 0x4, scoped, tag = 'scoped memory for tpu_custom_call.1']
    #allocation28 [shape = 'u8[32768]{0}', space=vmem, size = 0x8000, scoped, tag = 'input window, operand 26, single buffered']
    #allocation29 [shape = 'u8[131072]{0}', space=vmem, size = 0x20000, scoped, tag = 'input window, operand 28, single buffered']
    #allocation30 [shape = 's32[1]{0}', space=sflag, size = 0x4, scoped, tag = 'scoped memory for tpu_custom_call.1']
    #allocation31 [shape = 'u8[131072]{0}', space=vmem, size = 0x20000, scoped, tag = 'input window, operand 30, single buffered']
    #allocation32 [shape = 'u8[32768]{0}', space=vmem, size = 0x8000, scoped, tag = 'input window, operand 32, single buffered']
    #allocation33 [shape = 's32[1]{0}', space=sflag, size = 0x4, scoped, tag = 'scoped memory for tpu_custom_call.1']
    #allocation34 [shape = 'u8[4096]{0}', space=vmem, size = 0x1000, scoped, tag = 'output window, operand 0, single buffered']
    %74 = vsyncpa [#allocation3], 0
    %75 = vsyncpa [#allocation6], 0
    %76 = vsyncpa [#allocation9], 0
    %77 = vsyncpa [#allocation12], 0
    %78 = vsyncpa [#allocation15], 0
    %79 = vsyncpa [#allocation18], 0
    %80 = vsyncpa [#allocation21], 0
    %81 = vsyncpa [#allocation24], 0
    %82 = vsyncpa [#allocation27], 0
    %83 = vsyncpa [#allocation30], 0
    %84 = vsyncpa [#allocation33], 0
    %85 = vsyncpa [#allocation4], 0
    // Predicated region
    $region2: #{tpu_custom_call.1} parent=1 // pred_check
      _
    $region3: #{tpu_custom_call.1} parent=1 // pred_check_branch
      %87 = sbr.rel (0) target = $region5
    $region4: #{tpu_custom_call.1} parent=1 // pred_region
      %89 = vsyncadd [#allocation3], 0
      %s90 = sshll.u32 %s1, 4
      %s91 = int_to_ptr.hbm [resolvable:$true] %s90
      %s92 = sshll.u32 [#allocation2], 4
      %s93 = int_to_ptr.vmem [resolvable:$true] %s92
      %98 = dma.hbm_to_vmem [thread:$0]  %s91, 2048, %s93, [#allocation3], 128, 128, 8
    $region5: #{tpu_custom_call.1} parent=1 // pred_fallthru
      _
    // Predicated region
    $region6: #{tpu_custom_call.1} parent=1 // pred_check
      _
    $region7: #{tpu_custom_call.1} parent=1 // pred_check_branch
      %100 = sbr.rel (0) target = $region9
    $region8: #{tpu_custom_call.1} parent=1 // pred_region
      %102 = vsyncadd [#allocation6], 0
      %s103 = sshll.u32 %s3, 4
      %s104 = int_to_ptr.hbm [resolvable:$true] %s103
      %s105 = sshll.u32 [#allocation5], 4
      %s106 = int_to_ptr.vmem [resolvable:$true] %s105
      %111 = dma.hbm_to_vmem [thread:$0]  %s104, 2048, %s106, [#allocation6], 64, 64, 4
    $region9: #{tpu_custom_call.1} parent=1 // pred_fallthru
      _
    // Predicated region
    $region10: #{tpu_custom_call.1} parent=1 // pred_check
      _
    $region11: #{tpu_custom_call.1} parent=1 // pred_check_branch
      %113 = sbr.rel (0) target = $region13
    $region12: #{tpu_custom_call.1} parent=1 // pred_region
      %115 = vsyncadd [#allocation6], 0
      %s116 = sshll.u32 %s5, 4
      %s117 = int_to_ptr.hbm [resolvable:$true] %s116
      %s118 = sshll.u32 [#allocation7], 4
      %s119 = int_to_ptr.vmem [resolvable:$true] %s118
      %124 = dma.hbm_to_vmem [thread:$0]  %s117, 1024, %s119, [#allocation6], 64, 64, 4
    $region13: #{tpu_custom_call.1} parent=1 // pred_fallthru
      _
    // Predicated region
    $region14: #{tpu_custom_call.1} parent=1 // pred_check
      _
    $region15: #{tpu_custom_call.1} parent=1 // pred_check_branch
      %126 = sbr.rel (0) target = $region17
    $region16: #{tpu_custom_call.1} parent=1 // pred_region
      %128 = vsyncadd [#allocation9], 0
      %s129 = sshll.u32 %s7, 4
      %s130 = int_to_ptr.hbm [resolvable:$true] %s129
      %s131 = sshll.u32 [#allocation8], 4
      %s132 = int_to_ptr.vmem [resolvable:$true] %s131
      %137 = dma.hbm_to_vmem [thread:$0]  %s130, 512, %s132, [#allocation9], 64, 64, 4
    $region17: #{tpu_custom_call.1} parent=1 // pred_fallthru
      _
    // Predicated region
    $region18: #{tpu_custom_call.1} parent=1 // pred_check
      _
    $region19: #{tpu_custom_call.1} parent=1 // pred_check_branch
      %139 = sbr.rel (0) target = $region21
    $region20: #{tpu_custom_call.1} parent=1 // pred_region
      %141 = vsyncadd [#allocation9], 0
      %s142 = sshll.u32 %s9, 4
      %s143 = int_to_ptr.hbm [resolvable:$true] %s142
      %s144 = sshll.u32 [#allocation10], 4
      %s145 = int_to_ptr.vmem [resolvable:$true] %s144
      %150 = dma.hbm_to_vmem [thread:$0]  %s143, 256, %s145, [#allocation9], 64, 64, 4
    $region21: #{tpu_custom_call.1} parent=1 // pred_fallthru
      _
    // Predicated region
    $region22: #{tpu_custom_call.1} parent=1 // pred_check
      _
    $region23: #{tpu_custom_call.1} parent=1 // pred_check_branch
      %152 = sbr.rel (0) target = $region25
    $region24: #{tpu_custom_call.1} parent=1 // pred_region
      %154 = vsyncadd [#allocation12], 0
      %s155 = sshll.u32 %s11, 4
      %s156 = int_to_ptr.hbm [resolvable:$true] %s155
      %s157 = sshll.u32 [#allocation11], 4
      %s158 = int_to_ptr.vmem [resolvable:$true] %s157
      %163 = dma.hbm_to_vmem [thread:$0]  %s156, 256, %s158, [#allocation12], 64, 64, 4
    $region25: #{tpu_custom_call.1} parent=1 // pred_fallthru
      _
    // Predicated region
    $region26: #{tpu_custom_call.1} parent=1 // pred_check
      _
    $region27: #{tpu_custom_call.1} parent=1 // pred_check_branch
      %165 = sbr.rel (0) target = $region29
    $region28: #{tpu_custom_call.1} parent=1 // pred_region
      %167 = vsyncadd [#allocation12], 0
      %s168 = sshll.u32 %s13, 4
      %s169 = int_to_ptr.hbm [resolvable:$true] %s168
      %s170 = sshll.u32 [#allocation13], 4
      %s171 = int_to_ptr.vmem [resolvable:$true] %s170
      %176 = dma.hbm_to_vmem [thread:$0]  %s169, 4096, %s171, [#allocation12], 64, 64, 4
    $region29: #{tpu_custom_call.1} parent=1 // pred_fallthru
      _
    // Predicated region
    $region30: #{tpu_custom_call.1} parent=1 // pred_check
      _
    $region31: #{tpu_custom_call.1} parent=1 // pred_check_branch
      %178 = sbr.rel (0) target = $region33
    $region32: #{tpu_custom_call.1} parent=1 // pred_region
      _
    $region33: #{tpu_custom_call.1} parent=1 // pred_fallthru
      _
    // Predicated region
    $region34: #{tpu_custom_call.1} parent=1 // pred_check
      _
    $region35: #{tpu_custom_call.1} parent=1 // pred_check_branch
      %180 = sbr.rel (0) target = $region37
    $region36: #{tpu_custom_call.1} parent=1 // pred_region
      %182 = vsyncadd [#allocation15], 0
      %s183 = sshll.u32 %s17, 4
      %s184 = int_to_ptr.hbm [resolvable:$true] %s183
      %s185 = sshll.u32 [#allocation14], 4
      %s186 = int_to_ptr.vmem [resolvable:$true] %s185
      %191 = dma.hbm_to_vmem [thread:$0]  %s184, 1024, %s186, [#allocation15], 64, 64, 4
    $region37: #{tpu_custom_call.1} parent=1 // pred_fallthru
      _
    // Predicated region
    $region38: #{tpu_custom_call.1} parent=1 // pred_check
      _
    $region39: #{tpu_custom_call.1} parent=1 // pred_check_branch
      %193 = sbr.rel (0) target = $region41
    $region40: #{tpu_custom_call.1} parent=1 // pred_region
      _
    $region41: #{tpu_custom_call.1} parent=1 // pred_fallthru
      _
    // Predicated region
    $region42: #{tpu_custom_call.1} parent=1 // pred_check
      _
    $region43: #{tpu_custom_call.1} parent=1 // pred_check_branch
      %195 = sbr.rel (0) target = $region45
    $region44: #{tpu_custom_call.1} parent=1 // pred_region
      %197 = vsyncadd [#allocation15], 0
      %s198 = sshll.u32 %s21, 4
      %s199 = int_to_ptr.hbm [resolvable:$true] %s198
      %s200 = sshll.u32 [#allocation16], 4
      %s201 = int_to_ptr.vmem [resolvable:$true] %s200
      %206 = dma.hbm_to_vmem [thread:$0]  %s199, 4096, %s201, [#allocation15], 64, 64, 4
    $region45: #{tpu_custom_call.1} parent=1 // pred_fallthru
      _
    // Predicated region
    $region46: #{tpu_custom_call.1} parent=1 // pred_check
      _
    $region47: #{tpu_custom_call.1} parent=1 // pred_check_branch
      %208 = sbr.rel (0) target = $region49
    $region48: #{tpu_custom_call.1} parent=1 // pred_region
      _
    $region49: #{tpu_custom_call.1} parent=1 // pred_fallthru
      _
    // Predicated region
    $region50: #{tpu_custom_call.1} parent=1 // pred_check
      _
    $region51: #{tpu_custom_call.1} parent=1 // pred_check_branch
      %210 = sbr.rel (0) target = $region53
    $region52: #{tpu_custom_call.1} parent=1 // pred_region
      %212 = vsyncadd [#allocation18], 0
      %s213 = sshll.u32 %s25, 4
      %s214 = int_to_ptr.hbm [resolvable:$true] %s213
      %s215 = sshll.u32 [#allocation17], 4
      %s216 = int_to_ptr.vmem [resolvable:$true] %s215
      %221 = dma.hbm_to_vmem [thread:$0]  %s214, 4096, %s216, [#allocation18], 64, 64, 4
    $region53: #{tpu_custom_call.1} parent=1 // pred_fallthru
      _
    // Predicated region
    $region54: #{tpu_custom_call.1} parent=1 // pred_check
      _
    $region55: #{tpu_custom_call.1} parent=1 // pred_check_branch
      %223 = sbr.rel (0) target = $region57
    $region56: #{tpu_custom_call.1} parent=1 // pred_region
      _
    $region57: #{tpu_custom_call.1} parent=1 // pred_fallthru
      _
    // Predicated region
    $region58: #{tpu_custom_call.1} parent=1 // pred_check
      _
    $region59: #{tpu_custom_call.1} parent=1 // pred_check_branch
      %225 = sbr.rel (0) target = $region61
    $region60: #{tpu_custom_call.1} parent=1 // pred_region
      %227 = vsyncadd [#allocation18], 0
      %s228 = sshll.u32 %s29, 4
      %s229 = int_to_ptr.hbm [resolvable:$true] %s228
      %s230 = sshll.u32 [#allocation19], 4
      %s231 = int_to_ptr.vmem [resolvable:$true] %s230
      %236 = dma.hbm_to_vmem [thread:$0]  %s229, 1024, %s231, [#allocation18], 64, 64, 4
    $region61: #{tpu_custom_call.1} parent=1 // pred_fallthru
      _
    // Predicated region
    $region62: #{tpu_custom_call.1} parent=1 // pred_check
      _
    $region63: #{tpu_custom_call.1} parent=1 // pred_check_branch
      %238 = sbr.rel (0) target = $region65
    $region64: #{tpu_custom_call.1} parent=1 // pred_region
      _
    $region65: #{tpu_custom_call.1} parent=1 // pred_fallthru
      _
    // Predicated region
    $region66: #{tpu_custom_call.1} parent=1 // pred_check
      _
    $region67: #{tpu_custom_call.1} parent=1 // pred_check_branch
      %240 = sbr.rel (0) target = $region69
    $region68: #{tpu_custom_call.1} parent=1 // pred_region
      %242 = vsyncadd [#allocation21], 0
      %s243 = sshll.u32 %s33, 4
      %s244 = int_to_ptr.hbm [resolvable:$true] %s243
      %s245 = sshll.u32 [#allocation20], 4
      %s246 = int_to_ptr.vmem [resolvable:$true] %s245
      %251 = dma.hbm_to_vmem [thread:$0]  %s244, 4096, %s246, [#allocation21], 64, 64, 4
    $region69: #{tpu_custom_call.1} parent=1 // pred_fallthru
      _
    // Predicated region
    $region70: #{tpu_custom_call.1} parent=1 // pred_check
      _
    $region71: #{tpu_custom_call.1} parent=1 // pred_check_branch
      %253 = sbr.rel (0) target = $region73
    $region72: #{tpu_custom_call.1} parent=1 // pred_region
      _
    $region73: #{tpu_custom_call.1} parent=1 // pred_fallthru
      _
    // Predicated region
    $region74: #{tpu_custom_call.1} parent=1 // pred_check
      _
    $region75: #{tpu_custom_call.1} parent=1 // pred_check_branch
      %255 = sbr.rel (0) target = $region77
    $region76: #{tpu_custom_call.1} parent=1 // pred_region
      %257 = vsyncadd [#allocation21], 0
      %s258 = sshll.u32 %s37, 4
      %s259 = int_to_ptr.hbm [resolvable:$true] %s258
      %s260 = sshll.u32 [#allocation22], 4
      %s261 = int_to_ptr.vmem [resolvable:$true] %s260
      %266 = dma.hbm_to_vmem [thread:$0]  %s259, 4096, %s261, [#allocation21], 64, 64, 4
    $region77: #{tpu_custom_call.1} parent=1 // pred_fallthru
      _
    // Predicated region
    $region78: #{tpu_custom_call.1} parent=1 // pred_check
      _
    $region79: #{tpu_custom_call.1} parent=1 // pred_check_branch
      %268 = sbr.rel (0) target = $region81
    $region80: #{tpu_custom_call.1} parent=1 // pred_region
      _
    $region81: #{tpu_custom_call.1} parent=1 // pred_fallthru
      _
    // Predicated region
    $region82: #{tpu_custom_call.1} parent=1 // pred_check
      _
    $region83: #{tpu_custom_call.1} parent=1 // pred_check_branch
      %270 = sbr.rel (0) target = $region85
    $region84: #{tpu_custom_call.1} parent=1 // pred_region
      %272 = vsyncadd [#allocation24], 0
      %s273 = sshll.u32 %s41, 4
      %s274 = int_to_ptr.hbm [resolvable:$true] %s273
      %s275 = sshll.u32 [#allocation23], 4
      %s276 = int_to_ptr.vmem [resolvable:$true] %s275
      %281 = dma.hbm_to_vmem [thread:$0]  %s274, 1024, %s276, [#allocation24], 64, 64, 4
    $region85: #{tpu_custom_call.1} parent=1 // pred_fallthru
      _
    // Predicated region
    $region86: #{tpu_custom_call.1} parent=1 // pred_check
      _
    $region87: #{tpu_custom_call.1} parent=1 // pred_check_branch
      %283 = sbr.rel (0) target = $region89
    $region88: #{tpu_custom_call.1} parent=1 // pred_region
      _
    $region89: #{tpu_custom_call.1} parent=1 // pred_fallthru
      _
    // Predicated region
    $region90: #{tpu_custom_call.1} parent=1 // pred_check
      _
    $region91: #{tpu_custom_call.1} parent=1 // pred_check_branch
      %285 = sbr.rel (0) target = $region93
    $region92: #{tpu_custom_call.1} parent=1 // pred_region
      %287 = vsyncadd [#allocation24], 0
      %s288 = sshll.u32 %s45, 4
      %s289 = int_to_ptr.hbm [resolvable:$true] %s288
      %s290 = sshll.u32 [#allocation25], 4
      %s291 = int_to_ptr.vmem [resolvable:$true] %s290
      %296 = dma.hbm_to_vmem [thread:$0]  %s289, 4096, %s291, [#allocation24], 64, 64, 4
    $region93: #{tpu_custom_call.1} parent=1 // pred_fallthru
      _
    // Predicated region
    $region94: #{tpu_custom_call.1} parent=1 // pred_check
      _
    $region95: #{tpu_custom_call.1} parent=1 // pred_check_branch
      %298 = sbr.rel (0) target = $region97
    $region96: #{tpu_custom_call.1} parent=1 // pred_region
      _
    $region97: #{tpu_custom_call.1} parent=1 // pred_fallthru
      _
    // Predicated region
    $region98: #{tpu_custom_call.1} parent=1 // pred_check
      _
    $region99: #{tpu_custom_call.1} parent=1 // pred_check_branch
      %300 = sbr.rel (0) target = $region101
    $region100: #{tpu_custom_call.1} parent=1 // pred_region
      %302 = vsyncadd [#allocation27], 0
      %s303 = sshll.u32 %s49, 4
      %s304 = int_to_ptr.hbm [resolvable:$true] %s303
      %s305 = sshll.u32 [#allocation26], 4
      %s306 = int_to_ptr.vmem [resolvable:$true] %s305
      %311 = dma.hbm_to_vmem [thread:$0]  %s304, 4096, %s306, [#allocation27], 64, 64, 4
    $region101: #{tpu_custom_call.1} parent=1 // pred_fallthru
      _
    // Predicated region
    $region102: #{tpu_custom_call.1} parent=1 // pred_check
      _
    $region103: #{tpu_custom_call.1} parent=1 // pred_check_branch
      %313 = sbr.rel (0) target = $region105
    $region104: #{tpu_custom_call.1} parent=1 // pred_region
      _
    $region105: #{tpu_custom_call.1} parent=1 // pred_fallthru
      _
    // Predicated region
    $region106: #{tpu_custom_call.1} parent=1 // pred_check
      _
    $region107: #{tpu_custom_call.1} parent=1 // pred_check_branch
      %315 = sbr.rel (0) target = $region109
    $region108: #{tpu_custom_call.1} parent=1 // pred_region
      %317 = vsyncadd [#allocation27], 0
      %s318 = sshll.u32 %s53, 4
      %s319 = int_to_ptr.hbm [resolvable:$true] %s318
      %s320 = sshll.u32 [#allocation28], 4
      %s321 = int_to_ptr.vmem [resolvable:$true] %s320
      %326 = dma.hbm_to_vmem [thread:$0]  %s319, 1024, %s321, [#allocation27], 64, 64, 4
    $region109: #{tpu_custom_call.1} parent=1 // pred_fallthru
      _
    // Predicated region
    $region110: #{tpu_custom_call.1} parent=1 // pred_check
      _
    $region111: #{tpu_custom_call.1} parent=1 // pred_check_branch
      %328 = sbr.rel (0) target = $region113
    $region112: #{tpu_custom_call.1} parent=1 // pred_region
      _
    $region113: #{tpu_custom_call.1} parent=1 // pred_fallthru
      _
    // Predicated region
    $region114: #{tpu_custom_call.1} parent=1 // pred_check
      _
    $region115: #{tpu_custom_call.1} parent=1 // pred_check_branch
      %330 = sbr.rel (0) target = $region117
    $region116: #{tpu_custom_call.1} parent=1 // pred_region
      %332 = vsyncadd [#allocation30], 0
      %s333 = sshll.u32 %s57, 4
      %s334 = int_to_ptr.hbm [resolvable:$true] %s333
      %s335 = sshll.u32 [#allocation29], 4
      %s336 = int_to_ptr.vmem [resolvable:$true] %s335
      %341 = dma.hbm_to_vmem [thread:$0]  %s334, 4096, %s336, [#allocation30], 64, 64, 4
    $region117: #{tpu_custom_call.1} parent=1 // pred_fallthru
      _
    // Predicated region
    $region118: #{tpu_custom_call.1} parent=1 // pred_check
      _
    $region119: #{tpu_custom_call.1} parent=1 // pred_check_branch
      %343 = sbr.rel (0) target = $region121
    $region120: #{tpu_custom_call.1} parent=1 // pred_region
      _
    $region121: #{tpu_custom_call.1} parent=1 // pred_fallthru
      _
    // Predicated region
    $region122: #{tpu_custom_call.1} parent=1 // pred_check
      _
    $region123: #{tpu_custom_call.1} parent=1 // pred_check_branch
      %345 = sbr.rel (0) target = $region125
    $region124: #{tpu_custom_call.1} parent=1 // pred_region
      %347 = vsyncadd [#allocation30], 0
      %s348 = sshll.u32 %s61, 4
      %s349 = int_to_ptr.hbm [resolvable:$true] %s348
      %s350 = sshll.u32 [#allocation31], 4
      %s351 = int_to_ptr.vmem [resolvable:$true] %s350
      %356 = dma.hbm_to_vmem [thread:$0]  %s349, 4096, %s351, [#allocation30], 64, 64, 4
    $region125: #{tpu_custom_call.1} parent=1 // pred_fallthru
      _
    // Predicated region
    $region126: #{tpu_custom_call.1} parent=1 // pred_check
      _
    $region127: #{tpu_custom_call.1} parent=1 // pred_check_branch
      %358 = sbr.rel (0) target = $region129
    $region128: #{tpu_custom_call.1} parent=1 // pred_region
      _
    $region129: #{tpu_custom_call.1} parent=1 // pred_fallthru
      _
    // Predicated region
    $region130: #{tpu_custom_call.1} parent=1 // pred_check
      _
    $region131: #{tpu_custom_call.1} parent=1 // pred_check_branch
      %360 = sbr.rel (0) target = $region133
    $region132: #{tpu_custom_call.1} parent=1 // pred_region
      %362 = vsyncadd [#allocation33], 0
      %s363 = sshll.u32 %s65, 4
      %s364 = int_to_ptr.hbm [resolvable:$true] %s363
      %s365 = sshll.u32 [#allocation32], 4
      %s366 = int_to_ptr.vmem [resolvable:$true] %s365
      %371 = dma.hbm_to_vmem [thread:$0]  %s364, 1024, %s366, [#allocation33], 64, 64, 4
    $region133: #{tpu_custom_call.1} parent=1 // pred_fallthru
      _
    // Predicated region
    $region134: #{tpu_custom_call.1} parent=1 // pred_check
      _
    $region135: #{tpu_custom_call.1} parent=1 // pred_check_branch
      %373 = sbr.rel (0) target = $region137
    $region136: #{tpu_custom_call.1} parent=1 // pred_region
      _
    $region137: #{tpu_custom_call.1} parent=1 // pred_fallthru
      _
    // Predicated region
    $region138: #{tpu_custom_call.1} parent=1 // pred_check
      _
    $region139: #{tpu_custom_call.1} parent=1 // pred_check_branch
      %375 = sbr.rel (0) target = $region141
    $region140: #{tpu_custom_call.1} parent=1 // pred_region
      %377 = dma.done [#allocation3], 2048
    $region141: #{tpu_custom_call.1} parent=1 // pred_fallthru
      _
    // Predicated region
    $region142: #{tpu_custom_call.1} parent=1 // pred_check
      _
    $region143: #{tpu_custom_call.1} parent=1 // pred_check_branch
      %379 = sbr.rel (0) target = $region145
    $region144: #{tpu_custom_call.1} parent=1 // pred_region
      %381 = dma.done [#allocation6], 2048
    $region145: #{tpu_custom_call.1} parent=1 // pred_fallthru
      _
    // Predicated region
    $region146: #{tpu_custom_call.1} parent=1 // pred_check
      _
    $region147: #{tpu_custom_call.1} parent=1 // pred_check_branch
      %383 = sbr.rel (0) target = $region149
    $region148: #{tpu_custom_call.1} parent=1 // pred_region
      %385 = dma.done [#allocation6], 1024
    $region149: #{tpu_custom_call.1} parent=1 // pred_fallthru
      _
    // Predicated region
    $region150: #{tpu_custom_call.1} parent=1 // pred_check
      _
    $region151: #{tpu_custom_call.1} parent=1 // pred_check_branch
      %387 = sbr.rel (0) target = $region153
    $region152: #{tpu_custom_call.1} parent=1 // pred_region
      %389 = dma.done [#allocation9], 512
    $region153: #{tpu_custom_call.1} parent=1 // pred_fallthru
      _
    // Predicated region
    $region154: #{tpu_custom_call.1} parent=1 // pred_check
      _
    $region155: #{tpu_custom_call.1} parent=1 // pred_check_branch
      %391 = sbr.rel (0) target = $region157
    $region156: #{tpu_custom_call.1} parent=1 // pred_region
      %393 = dma.done [#allocation9], 256
    $region157: #{tpu_custom_call.1} parent=1 // pred_fallthru
      _
    // Predicated region
    $region158: #{tpu_custom_call.1} parent=1 // pred_check
      _
    $region159: #{tpu_custom_call.1} parent=1 // pred_check_branch
      %395 = sbr.rel (0) target = $region161
    $region160: #{tpu_custom_call.1} parent=1 // pred_region
      %397 = dma.done [#allocation12], 256
    $region161: #{tpu_custom_call.1} parent=1 // pred_fallthru
      _
    // Predicated region
    $region162: #{tpu_custom_call.1} parent=1 // pred_check
      _
    $region163: #{tpu_custom_call.1} parent=1 // pred_check_branch
      %399 = sbr.rel (0) target = $region165
    $region164: #{tpu_custom_call.1} parent=1 // pred_region
      %401 = dma.done [#allocation12], 4096
    $region165: #{tpu_custom_call.1} parent=1 // pred_fallthru
      _
    // Predicated region
    $region166: #{tpu_custom_call.1} parent=1 // pred_check
      _
    $region167: #{tpu_custom_call.1} parent=1 // pred_check_branch
      %403 = sbr.rel (0) target = $region169
    $region168: #{tpu_custom_call.1} parent=1 // pred_region
      %405 = dma.done [#allocation15], 1024
    $region169: #{tpu_custom_call.1} parent=1 // pred_fallthru
      _
    // Predicated region
    $region170: #{tpu_custom_call.1} parent=1 // pred_check
      _
    $region171: #{tpu_custom_call.1} parent=1 // pred_check_branch
      %407 = sbr.rel (0) target = $region173
    $region172: #{tpu_custom_call.1} parent=1 // pred_region
      %409 = dma.done [#allocation15], 4096
    $region173: #{tpu_custom_call.1} parent=1 // pred_fallthru
      _
    // Predicated region
    $region174: #{tpu_custom_call.1} parent=1 // pred_check
      _
    $region175: #{tpu_custom_call.1} parent=1 // pred_check_branch
      %411 = sbr.rel (0) target = $region177
    $region176: #{tpu_custom_call.1} parent=1 // pred_region
      %413 = dma.done [#allocation18], 4096
    $region177: #{tpu_custom_call.1} parent=1 // pred_fallthru
      _
    // Predicated region
    $region178: #{tpu_custom_call.1} parent=1 // pred_check
      _
    $region179: #{tpu_custom_call.1} parent=1 // pred_check_branch
      %415 = sbr.rel (0) target = $region181
    $region180: #{tpu_custom_call.1} parent=1 // pred_region
      %417 = dma.done [#allocation18], 1024
    $region181: #{tpu_custom_call.1} parent=1 // pred_fallthru
      _
    // Predicated region
    $region182: #{tpu_custom_call.1} parent=1 // pred_check
      _
    $region183: #{tpu_custom_call.1} parent=1 // pred_check_branch
      %419 = sbr.rel (0) target = $region185
    $region184: #{tpu_custom_call.1} parent=1 // pred_region
      %421 = dma.done [#allocation21], 4096
    $region185: #{tpu_custom_call.1} parent=1 // pred_fallthru
      _
    // Predicated region
    $region186: #{tpu_custom_call.1} parent=1 // pred_check
      _
    $region187: #{tpu_custom_call.1} parent=1 // pred_check_branch
      %423 = sbr.rel (0) target = $region189
    $region188: #{tpu_custom_call.1} parent=1 // pred_region
      %425 = dma.done [#allocation21], 4096
    $region189: #{tpu_custom_call.1} parent=1 // pred_fallthru
      _
    // Predicated region
    $region190: #{tpu_custom_call.1} parent=1 // pred_check
      _
    $region191: #{tpu_custom_call.1} parent=1 // pred_check_branch
      %427 = sbr.rel (0) target = $region193
    $region192: #{tpu_custom_call.1} parent=1 // pred_region
      %429 = dma.done [#allocation24], 1024
    $region193: #{tpu_custom_call.1} parent=1 // pred_fallthru
      _
    // Predicated region
    $region194: #{tpu_custom_call.1} parent=1 // pred_check
      _
    $region195: #{tpu_custom_call.1} parent=1 // pred_check_branch
      %431 = sbr.rel (0) target = $region197
    $region196: #{tpu_custom_call.1} parent=1 // pred_region
      %433 = dma.done [#allocation24], 4096
    $region197: #{tpu_custom_call.1} parent=1 // pred_fallthru
      _
    // Predicated region
    $region198: #{tpu_custom_call.1} parent=1 // pred_check
      _
    $region199: #{tpu_custom_call.1} parent=1 // pred_check_branch
      %435 = sbr.rel (0) target = $region201
    $region200: #{tpu_custom_call.1} parent=1 // pred_region
      %437 = dma.done [#allocation27], 4096
    $region201: #{tpu_custom_call.1} parent=1 // pred_fallthru
      _
    // Predicated region
    $region202: #{tpu_custom_call.1} parent=1 // pred_check
      _
    $region203: #{tpu_custom_call.1} parent=1 // pred_check_branch
      %439 = sbr.rel (0) target = $region205
    $region204: #{tpu_custom_call.1} parent=1 // pred_region
      %441 = dma.done [#allocation27], 1024
    $region205: #{tpu_custom_call.1} parent=1 // pred_fallthru
      _
    // Predicated region
    $region206: #{tpu_custom_call.1} parent=1 // pred_check
      _
    $region207: #{tpu_custom_call.1} parent=1 // pred_check_branch
      %443 = sbr.rel (0) target = $region209
    $region208: #{tpu_custom_call.1} parent=1 // pred_region
      %445 = dma.done [#allocation30], 4096
    $region209: #{tpu_custom_call.1} parent=1 // pred_fallthru
      _
    // Predicated region
    $region210: #{tpu_custom_call.1} parent=1 // pred_check
      _
    $region211: #{tpu_custom_call.1} parent=1 // pred_check_branch
      %447 = sbr.rel (0) target = $region213
    $region212: #{tpu_custom_call.1} parent=1 // pred_region
      %449 = dma.done [#allocation30], 4096
    $region213: #{tpu_custom_call.1} parent=1 // pred_fallthru
      _
    // Predicated region
    $region214: #{tpu_custom_call.1} parent=1 // pred_check
      _
    $region215: #{tpu_custom_call.1} parent=1 // pred_check_branch
      %451 = sbr.rel (0) target = $region217
    $region216: #{tpu_custom_call.1} parent=1 // pred_region
      %453 = dma.done [#allocation33], 1024
    $region217: #{tpu_custom_call.1} parent=1 // pred_fallthru
      _
    %v455 = vld [vmem:[#allocation2] sm:$0xff]
    %v456 = vld [vmem:[#allocation2 + $0x8] sm:$0xff]
    %v457 = vld [vmem:[#allocation2 + $0x10] sm:$0xff]
    %v458 = vld [vmem:[#allocation2 + $0x18] sm:$0xff]
    %v459 = vld [vmem:[#allocation2 + $0x20] sm:$0xff]
    %v460 = vld [vmem:[#allocation2 + $0x28] sm:$0xff]
    %v461 = vld [vmem:[#allocation2 + $0x30] sm:$0xff]
    %v462 = vld [vmem:[#allocation2 + $0x38] sm:$0xff]
    %v463 = vld [vmem:[#allocation2 + $0x40] sm:$0xff]
    %v464 = vld [vmem:[#allocation2 + $0x48] sm:$0xff]
    %v465 = vld [vmem:[#allocation2 + $0x50] sm:$0xff]
    %v466 = vld [vmem:[#allocation2 + $0x58] sm:$0xff]
    %v467 = vld [vmem:[#allocation2 + $0x60] sm:$0xff]
    %v468 = vld [vmem:[#allocation2 + $0x68] sm:$0xff]
    %v469 = vld [vmem:[#allocation2 + $0x70] sm:$0xff]
    %v470 = vld [vmem:[#allocation2 + $0x78] sm:$0xff]
    %v471 = vpack.c.bf16 %v456, %v455
    %v472 = vpack.c.bf16 %v458, %v457
    %v473 = vpack.c.bf16 %v460, %v459
    %v474 = vpack.c.bf16 %v462, %v461
    %v475 = vpack.c.bf16 %v464, %v463
    %v476 = vpack.c.bf16 %v466, %v465
    %v477 = vpack.c.bf16 %v468, %v467
    %v478 = vpack.c.bf16 %v470, %v469
    %v479 = vld [vmem:[#allocation5] sm:$0xf]
    %v480 = vld [vmem:[#allocation5 + $0x4] sm:$0xf]
    %v481 = vld [vmem:[#allocation5 + $0x8] sm:$0xf]
    %v482 = vld [vmem:[#allocation5 + $0xc] sm:$0xf]
    %v483 = vld [vmem:[#allocation5 + $0x10] sm:$0xf]
    %v484 = vld [vmem:[#allocation5 + $0x14] sm:$0xf]
    %v485 = vld [vmem:[#allocation5 + $0x18] sm:$0xf]
    %v486 = vld [vmem:[#allocation5 + $0x1c] sm:$0xf]
    %v495 = vunpack.c.l.b16 %v479
    %v496 = vunpack.c.l.b16 %v480
    %v497 = vunpack.c.l.b16 %v481
    %v498 = vunpack.c.l.b16 %v482
    %v499 = vunpack.c.l.b16 %v483
    %v500 = vunpack.c.l.b16 %v484
    %v501 = vunpack.c.l.b16 %v485
    %v502 = vunpack.c.l.b16 %v486
    %v503 = vpack.c.b16 %v496, %v495
    %v504 = vpack.c.b16 %v498, %v497
    %v505 = vpack.c.b16 %v500, %v499
    %v506 = vpack.c.b16 %v502, %v501
    %511 = vmatpush.bf16.msra.mxu0 %v478
    %512 = vmatpush.bf16.msra.mxu0 %v477
    %513 = vmatpush.bf16.msra.mxu0 %v476
    %514 = vmatpush.bf16.msra.mxu0 %v475
    %515 = vmatpush.bf16.msra.mxu0 %v474
    %516 = vmatpush.bf16.msra.mxu0 %v473
    %517 = vmatpush.bf16.msra.mxu0 %v472
    %518 = vmatpush.bf16.msra.mxu0 %v471
    %519 = vmatmul.bf16.gmra.mxu0 %v503
    %v520 = vpop.f32.mrf.mxu0
    %v521 = vadd.f32 0.0, %v520
    %v522 = vpop.f32.mrf.mxu0
    %v523 = vadd.f32 0.0, %v522
    %524 = vmatmul.bf16.gmra.mxu0 %v504
    %v525 = vpop.f32.mrf.mxu0
    %v526 = vadd.f32 0.0, %v525
    %v527 = vpop.f32.mrf.mxu0
    %v528 = vadd.f32 0.0, %v527
    %529 = vmatmul.bf16.gmra.mxu0 %v505
    %v530 = vpop.f32.mrf.mxu0
    %v531 = vadd.f32 0.0, %v530
    %v532 = vpop.f32.mrf.mxu0
    %v533 = vadd.f32 0.0, %v532
    %534 = vmatmul.bf16.gmra.mxu0 %v506
    %v535 = vpop.f32.mrf.mxu0
    %v536 = vadd.f32 0.0, %v535
    %v537 = vpop.f32.mrf.mxu0
    %v538 = vadd.f32 0.0, %v537
    %539 = vdwg.mxu0
    %v540 = vpack.c.bf16 %v523, %v521
    %v541 = vpack.c.bf16 %v528, %v526
    %v542 = vpack.c.bf16 %v533, %v531
    %v543 = vpack.c.bf16 %v538, %v536
    %v544 = vld [vmem:[#allocation13] sm:$0xf]
    %v545 = vld [vmem:[#allocation13 + $0x4] sm:$0xf]
    %v546 = vld [vmem:[#allocation13 + $0x8] sm:$0xf]
    %v547 = vld [vmem:[#allocation13 + $0xc] sm:$0xf]
    %v548 = vld [vmem:[#allocation13 + $0x10] sm:$0xf]
    %v549 = vld [vmem:[#allocation13 + $0x14] sm:$0xf]
    %v550 = vld [vmem:[#allocation13 + $0x18] sm:$0xf]
    %v551 = vld [vmem:[#allocation13 + $0x1c] sm:$0xf]
    %v552 = vld [vmem:[#allocation13 + $0x20] sm:$0xf]
    %v553 = vld [vmem:[#allocation13 + $0x24] sm:$0xf]
    %v554 = vld [vmem:[#allocation13 + $0x28] sm:$0xf]
    %v555 = vld [vmem:[#allocation13 + $0x2c] sm:$0xf]
    %v556 = vld [vmem:[#allocation13 + $0x30] sm:$0xf]
    %v557 = vld [vmem:[#allocation13 + $0x34] sm:$0xf]
    %v558 = vld [vmem:[#allocation13 + $0x38] sm:$0xf]
    %v559 = vld [vmem:[#allocation13 + $0x3c] sm:$0xf]
    %s560 = scalar_lea.vmem [#allocation5], 32
    %v561 = vld [vmem:[%s560] sm:$0xf]
    %v562 = vld [vmem:[%s560 + $0x4] sm:$0xf]
    %v563 = vld [vmem:[%s560 + $0x8] sm:$0xf]
    %v564 = vld [vmem:[%s560 + $0xc] sm:$0xf]
    %v565 = vld [vmem:[%s560 + $0x10] sm:$0xf]
    %v566 = vld [vmem:[%s560 + $0x14] sm:$0xf]
    %v567 = vld [vmem:[%s560 + $0x18] sm:$0xf]
    %v568 = vld [vmem:[%s560 + $0x1c] sm:$0xf]
    %v577 = vunpack.c.l.b16 %v561
    %v578 = vunpack.c.l.b16 %v562
    %v579 = vunpack.c.l.b16 %v563
    %v580 = vunpack.c.l.b16 %v564
    %v581 = vunpack.c.l.b16 %v565
    %v582 = vunpack.c.l.b16 %v566
    %v583 = vunpack.c.l.b16 %v567
    %v584 = vunpack.c.l.b16 %v568
    %v585 = vpack.c.b16 %v578, %v577
    %v586 = vpack.c.b16 %v580, %v579
    %v587 = vpack.c.b16 %v582, %v581
    %v588 = vpack.c.b16 %v584, %v583
    %593 = vmatpush.bf16.msra.mxu0 %v478
    %594 = vmatpush.bf16.msra.mxu0 %v477
    %595 = vmatpush.bf16.msra.mxu0 %v476
    %596 = vmatpush.bf16.msra.mxu0 %v475
    %597 = vmatpush.bf16.msra.mxu0 %v474
    %598 = vmatpush.bf16.msra.mxu0 %v473
    %599 = vmatpush.bf16.msra.mxu0 %v472
    %600 = vmatpush.bf16.msra.mxu0 %v471
    %601 = vmatmul.bf16.gmra.mxu0 %v585
    %v602 = vpop.f32.mrf.mxu0
    %v603 = vadd.f32 0.0, %v602
    %v604 = vpop.f32.mrf.mxu0
    %v605 = vadd.f32 0.0, %v604
    %606 = vmatmul.bf16.gmra.mxu0 %v586
    %v607 = vpop.f32.mrf.mxu0
    %v608 = vadd.f32 0.0, %v607
    %v609 = vpop.f32.mrf.mxu0
    %v610 = vadd.f32 0.0, %v609
    %611 = vmatmul.bf16.gmra.mxu0 %v587
    %v612 = vpop.f32.mrf.mxu0
    %v613 = vadd.f32 0.0, %v612
    %v614 = vpop.f32.mrf.mxu0
    %v615 = vadd.f32 0.0, %v614
    %616 = vmatmul.bf16.gmra.mxu0 %v588
    %v617 = vpop.f32.mrf.mxu0
    %v618 = vadd.f32 0.0, %v617
    %v619 = vpop.f32.mrf.mxu0
    %v620 = vadd.f32 0.0, %v619
    %621 = vdwg.mxu0
    %v622 = vpack.c.bf16 %v605, %v603
    %v623 = vpack.c.bf16 %v610, %v608
    %v624 = vpack.c.bf16 %v615, %v613
    %v625 = vpack.c.bf16 %v620, %v618
    %s626 = scalar_lea.vmem [#allocation13], 64
    %v627 = vld [vmem:[%s626] sm:$0xf]
    %v628 = vld [vmem:[%s626 + $0x4] sm:$0xf]
    %v629 = vld [vmem:[%s626 + $0x8] sm:$0xf]
    %v630 = vld [vmem:[%s626 + $0xc] sm:$0xf]
    %v631 = vld [vmem:[%s626 + $0x10] sm:$0xf]
    %v632 = vld [vmem:[%s626 + $0x14] sm:$0xf]
    %v633 = vld [vmem:[%s626 + $0x18] sm:$0xf]
    %v634 = vld [vmem:[%s626 + $0x1c] sm:$0xf]
    %v635 = vld [vmem:[%s626 + $0x20] sm:$0xf]
    %v636 = vld [vmem:[%s626 + $0x24] sm:$0xf]
    %v637 = vld [vmem:[%s626 + $0x28] sm:$0xf]
    %v638 = vld [vmem:[%s626 + $0x2c] sm:$0xf]
    %v639 = vld [vmem:[%s626 + $0x30] sm:$0xf]
    %v640 = vld [vmem:[%s626 + $0x34] sm:$0xf]
    %v641 = vld [vmem:[%s626 + $0x38] sm:$0xf]
    %v642 = vld [vmem:[%s626 + $0x3c] sm:$0xf]
    %v659 = vunpack.c.l.b16 %v627
    %v660 = vunpack.c.l.b16 %v628
    %v661 = vunpack.c.l.b16 %v629
    %v662 = vunpack.c.l.b16 %v630
    %v663 = vunpack.c.l.b16 %v631
    %v664 = vunpack.c.l.b16 %v632
    %v665 = vunpack.c.l.b16 %v633
    %v666 = vunpack.c.l.b16 %v634
    %v667 = vunpack.c.l.b16 %v635
    %v668 = vunpack.c.l.b16 %v636
    %v669 = vunpack.c.l.b16 %v637
    %v670 = vunpack.c.l.b16 %v638
    %v671 = vunpack.c.l.b16 %v639
    %v672 = vunpack.c.l.b16 %v640
    %v673 = vunpack.c.l.b16 %v641
    %v674 = vunpack.c.l.b16 %v642
    %v675 = vpack.c.b16 %v660, %v659
    %v676 = vpack.c.b16 %v662, %v661
    %v677 = vpack.c.b16 %v664, %v663
    %v678 = vpack.c.b16 %v666, %v665
    %v679 = vpack.c.b16 %v668, %v667
    %v680 = vpack.c.b16 %v670, %v669
    %v681 = vpack.c.b16 %v672, %v671
    %v682 = vpack.c.b16 %v674, %v673
    %691 = vmatpush.bf16.msra.mxu0 %v682
    %692 = vmatpush.bf16.msra.mxu0 %v681
    %693 = vmatpush.bf16.msra.mxu0 %v680
    %694 = vmatpush.bf16.msra.mxu0 %v679
    %695 = vmatpush.bf16.msra.mxu0 %v678
    %696 = vmatpush.bf16.msra.mxu0 %v677
    %697 = vmatpush.bf16.msra.mxu0 %v676
    %698 = vmatpush.bf16.msra.mxu0 %v675
    %699 = vmatmul.bf16.gmra.mxu0 %v622
    %v700 = vpop.f32.mrf.mxu0
    %v701 = vadd.f32 0.0, %v700
    %v702 = vpop.f32.mrf.mxu0
    %v703 = vadd.f32 0.0, %v702
    %704 = vmatmul.bf16.gmra.mxu0 %v623
    %v705 = vpop.f32.mrf.mxu0
    %v706 = vadd.f32 0.0, %v705
    %v707 = vpop.f32.mrf.mxu0
    %v708 = vadd.f32 0.0, %v707
    %709 = vmatmul.bf16.gmra.mxu0 %v624
    %v710 = vpop.f32.mrf.mxu0
    %v711 = vadd.f32 0.0, %v710
    %v712 = vpop.f32.mrf.mxu0
    %v713 = vadd.f32 0.0, %v712
    %714 = vmatmul.bf16.gmra.mxu0 %v625
    %v715 = vpop.f32.mrf.mxu0
    %v716 = vadd.f32 0.0, %v715
    %v717 = vpop.f32.mrf.mxu0
    %v718 = vadd.f32 0.0, %v717
    %719 = vdwg.mxu0
    %v736 = vunpack.c.l.b16 %v544
    %v737 = vunpack.c.l.b16 %v545
    %v738 = vunpack.c.l.b16 %v546
    %v739 = vunpack.c.l.b16 %v547
    %v740 = vunpack.c.l.b16 %v548
    %v741 = vunpack.c.l.b16 %v549
    %v742 = vunpack.c.l.b16 %v550
    %v743 = vunpack.c.l.b16 %v551
    %v744 = vunpack.c.l.b16 %v552
    %v745 = vunpack.c.l.b16 %v553
    %v746 = vunpack.c.l.b16 %v554
    %v747 = vunpack.c.l.b16 %v555
    %v748 = vunpack.c.l.b16 %v556
    %v749 = vunpack.c.l.b16 %v557
    %v750 = vunpack.c.l.b16 %v558
    %v751 = vunpack.c.l.b16 %v559
    %v752 = vpack.c.b16 %v737, %v736
    %v753 = vpack.c.b16 %v739, %v738
    %v754 = vpack.c.b16 %v741, %v740
    %v755 = vpack.c.b16 %v743, %v742
    %v756 = vpack.c.b16 %v745, %v744
    %v757 = vpack.c.b16 %v747, %v746
    %v758 = vpack.c.b16 %v749, %v748
    %v759 = vpack.c.b16 %v751, %v750
    %768 = vmatpush.bf16.msra.mxu0 %v759
    %769 = vmatpush.bf16.msra.mxu0 %v758
    %770 = vmatpush.bf16.msra.mxu0 %v757
    %771 = vmatpush.bf16.msra.mxu0 %v756
    %772 = vmatpush.bf16.msra.mxu0 %v755
    %773 = vmatpush.bf16.msra.mxu0 %v754
    %774 = vmatpush.bf16.msra.mxu0 %v753
    %775 = vmatpush.bf16.msra.mxu0 %v752
    %776 = vmatmul.bf16.gmra.mxu0 %v540
    %v777 = vpop.f32.mrf.mxu0
    %v778 = vadd.f32 %v701, %v777
    %v779 = vpop.f32.mrf.mxu0
    %v780 = vadd.f32 %v703, %v779
    %781 = vmatmul.bf16.gmra.mxu0 %v541
    %v782 = vpop.f32.mrf.mxu0
    %v783 = vadd.f32 %v706, %v782
    %v784 = vpop.f32.mrf.mxu0
    %v785 = vadd.f32 %v708, %v784
    %786 = vmatmul.bf16.gmra.mxu0 %v542
    %v787 = vpop.f32.mrf.mxu0
    %v788 = vadd.f32 %v711, %v787
    %v789 = vpop.f32.mrf.mxu0
    %v790 = vadd.f32 %v713, %v789
    %791 = vmatmul.bf16.gmra.mxu0 %v543
    %v792 = vpop.f32.mrf.mxu0
    %v793 = vadd.f32 %v716, %v792
    %v794 = vpop.f32.mrf.mxu0
    %v795 = vadd.f32 %v718, %v794
    %796 = vdwg.mxu0
    %s797 = scalar_lea.vmem [#allocation5], 64
    %v798 = vld [vmem:[%s797] sm:$0xf]
    %v799 = vld [vmem:[%s797 + $0x4] sm:$0xf]
    %v800 = vld [vmem:[%s797 + $0x8] sm:$0xf]
    %v801 = vld [vmem:[%s797 + $0xc] sm:$0xf]
    %v802 = vld [vmem:[%s797 + $0x10] sm:$0xf]
    %v803 = vld [vmem:[%s797 + $0x14] sm:$0xf]
    %v804 = vld [vmem:[%s797 + $0x18] sm:$0xf]
    %v805 = vld [vmem:[%s797 + $0x1c] sm:$0xf]
    %v814 = vunpack.c.l.b16 %v798
    %v815 = vunpack.c.l.b16 %v799
    %v816 = vunpack.c.l.b16 %v800
    %v817 = vunpack.c.l.b16 %v801
    %v818 = vunpack.c.l.b16 %v802
    %v819 = vunpack.c.l.b16 %v803
    %v820 = vunpack.c.l.b16 %v804
    %v821 = vunpack.c.l.b16 %v805
    %v822 = vpack.c.b16 %v815, %v814
    %v823 = vpack.c.b16 %v817, %v816
    %v824 = vpack.c.b16 %v819, %v818
    %v825 = vpack.c.b16 %v821, %v820
    %830 = vmatpush.bf16.msra.mxu0 %v478
    %831 = vmatpush.bf16.msra.mxu0 %v477
    %832 = vmatpush.bf16.msra.mxu0 %v476
    %833 = vmatpush.bf16.msra.mxu0 %v475
    %834 = vmatpush.bf16.msra.mxu0 %v474
    %835 = vmatpush.bf16.msra.mxu0 %v473
    %836 = vmatpush.bf16.msra.mxu0 %v472
    %837 = vmatpush.bf16.msra.mxu0 %v471
    %838 = vmatmul.bf16.gmra.mxu0 %v822
    %v839 = vpop.f32.mrf.mxu0
    %v840 = vadd.f32 0.0, %v839
    %v841 = vpop.f32.mrf.mxu0
    %v842 = vadd.f32 0.0, %v841
    %843 = vmatmul.bf16.gmra.mxu0 %v823
    %v844 = vpop.f32.mrf.mxu0
    %v845 = vadd.f32 0.0, %v844
    %v846 = vpop.f32.mrf.mxu0
    %v847 = vadd.f32 0.0, %v846
    %848 = vmatmul.bf16.gmra.mxu0 %v824
    %v849 = vpop.f32.mrf.mxu0
    %v850 = vadd.f32 0.0, %v849
    %v851 = vpop.f32.mrf.mxu0
    %v852 = vadd.f32 0.0, %v851
    %853 = vmatmul.bf16.gmra.mxu0 %v825
    %v854 = vpop.f32.mrf.mxu0
    %v855 = vadd.f32 0.0, %v854
    %v856 = vpop.f32.mrf.mxu0
    %v857 = vadd.f32 0.0, %v856
    %858 = vdwg.mxu0
    %v859 = vpack.c.bf16 %v842, %v840
    %v860 = vpack.c.bf16 %v847, %v845
    %v861 = vpack.c.bf16 %v852, %v850
    %v862 = vpack.c.bf16 %v857, %v855
    %s863 = scalar_lea.vmem [#allocation13], 128
    %v864 = vld [vmem:[%s863] sm:$0xf]
    %v865 = vld [vmem:[%s863 + $0x4] sm:$0xf]
    %v866 = vld [vmem:[%s863 + $0x8] sm:$0xf]
    %v867 = vld [vmem:[%s863 + $0xc] sm:$0xf]
    %v868 = vld [vmem:[%s863 + $0x10] sm:$0xf]
    %v869 = vld [vmem:[%s863 + $0x14] sm:$0xf]
    %v870 = vld [vmem:[%s863 + $0x18] sm:$0xf]
    %v871 = vld [vmem:[%s863 + $0x1c] sm:$0xf]
    %v872 = vld [vmem:[%s863 + $0x20] sm:$0xf]
    %v873 = vld [vmem:[%s863 + $0x24] sm:$0xf]
    %v874 = vld [vmem:[%s863 + $0x28] sm:$0xf]
    %v875 = vld [vmem:[%s863 + $0x2c] sm:$0xf]
    %v876 = vld [vmem:[%s863 + $0x30] sm:$0xf]
    %v877 = vld [vmem:[%s863 + $0x34] sm:$0xf]
    %v878 = vld [vmem:[%s863 + $0x38] sm:$0xf]
    %v879 = vld [vmem:[%s863 + $0x3c] sm:$0xf]
    %v896 = vunpack.c.l.b16 %v864
    %v897 = vunpack.c.l.b16 %v865
    %v898 = vunpack.c.l.b16 %v866
    %v899 = vunpack.c.l.b16 %v867
    %v900 = vunpack.c.l.b16 %v868
    %v901 = vunpack.c.l.b16 %v869
    %v902 = vunpack.c.l.b16 %v870
    %v903 = vunpack.c.l.b16 %v871
    %v904 = vunpack.c.l.b16 %v872
    %v905 = vunpack.c.l.b16 %v873
    %v906 = vunpack.c.l.b16 %v874
    %v907 = vunpack.c.l.b16 %v875
    %v908 = vunpack.c.l.b16 %v876
    %v909 = vunpack.c.l.b16 %v877
    %v910 = vunpack.c.l.b16 %v878
    %v911 = vunpack.c.l.b16 %v879
    %v912 = vpack.c.b16 %v897, %v896
    %v913 = vpack.c.b16 %v899, %v898
    %v914 = vpack.c.b16 %v901, %v900
    %v915 = vpack.c.b16 %v903, %v902
    %v916 = vpack.c.b16 %v905, %v904
    %v917 = vpack.c.b16 %v907, %v906
    %v918 = vpack.c.b16 %v909, %v908
    %v919 = vpack.c.b16 %v911, %v910
    %928 = vmatpush.bf16.msra.mxu0 %v919
    %929 = vmatpush.bf16.msra.mxu0 %v918
    %930 = vmatpush.bf16.msra.mxu0 %v917
    %931 = vmatpush.bf16.msra.mxu0 %v916
    %932 = vmatpush.bf16.msra.mxu0 %v915
    %933 = vmatpush.bf16.msra.mxu0 %v914
    %934 = vmatpush.bf16.msra.mxu0 %v913
    %935 = vmatpush.bf16.msra.mxu0 %v912
    %936 = vmatmul.bf16.gmra.mxu0 %v859
    %v937 = vpop.f32.mrf.mxu0
    %v938 = vadd.f32 0.0, %v937
    %v939 = vpop.f32.mrf.mxu0
    %v940 = vadd.f32 0.0, %v939
    %941 = vmatmul.bf16.gmra.mxu0 %v860
    %v942 = vpop.f32.mrf.mxu0
    %v943 = vadd.f32 0.0, %v942
    %v944 = vpop.f32.mrf.mxu0
    %v945 = vadd.f32 0.0, %v944
    %946 = vmatmul.bf16.gmra.mxu0 %v861
    %v947 = vpop.f32.mrf.mxu0
    %v948 = vadd.f32 0.0, %v947
    %v949 = vpop.f32.mrf.mxu0
    %v950 = vadd.f32 0.0, %v949
    %951 = vmatmul.bf16.gmra.mxu0 %v862
    %v952 = vpop.f32.mrf.mxu0
    %v953 = vadd.f32 0.0, %v952
    %v954 = vpop.f32.mrf.mxu0
    %v955 = vadd.f32 0.0, %v954
    %956 = vdwg.mxu0
    %v957 = vadd.f32 %v778, %v938
    %v958 = vadd.f32 %v780, %v940
    %v959 = vadd.f32 %v783, %v943
    %v960 = vadd.f32 %v785, %v945
    %v961 = vadd.f32 %v788, %v948
    %v962 = vadd.f32 %v790, %v950
    %v963 = vadd.f32 %v793, %v953
    %v964 = vadd.f32 %v795, %v955
    %s965 = scalar_lea.vmem [#allocation5], 96
    %v966 = vld [vmem:[%s965] sm:$0xf]
    %v967 = vld [vmem:[%s965 + $0x4] sm:$0xf]
    %v968 = vld [vmem:[%s965 + $0x8] sm:$0xf]
    %v969 = vld [vmem:[%s965 + $0xc] sm:$0xf]
    %v970 = vld [vmem:[%s965 + $0x10] sm:$0xf]
    %v971 = vld [vmem:[%s965 + $0x14] sm:$0xf]
    %v972 = vld [vmem:[%s965 + $0x18] sm:$0xf]
    %v973 = vld [vmem:[%s965 + $0x1c] sm:$0xf]
    %v982 = vunpack.c.l.b16 %v966
    %v983 = vunpack.c.l.b16 %v967
    %v984 = vunpack.c.l.b16 %v968
    %v985 = vunpack.c.l.b16 %v969
    %v986 = vunpack.c.l.b16 %v970
    %v987 = vunpack.c.l.b16 %v971
    %v988 = vunpack.c.l.b16 %v972
    %v989 = vunpack.c.l.b16 %v973
    %v990 = vpack.c.b16 %v983, %v982
    %v991 = vpack.c.b16 %v985, %v984
    %v992 = vpack.c.b16 %v987, %v986
    %v993 = vpack.c.b16 %v989, %v988
    %998 = vmatpush.bf16.msra.mxu0 %v478
    %999 = vmatpush.bf16.msra.mxu0 %v477
    %1000 = vmatpush.bf16.msra.mxu0 %v476
    %1001 = vmatpush.bf16.msra.mxu0 %v475
    %1002 = vmatpush.bf16.msra.mxu0 %v474
    %1003 = vmatpush.bf16.msra.mxu0 %v473
    %1004 = vmatpush.bf16.msra.mxu0 %v472
    %1005 = vmatpush.bf16.msra.mxu0 %v471
    %1006 = vmatmul.bf16.gmra.mxu0 %v990
    %v1007 = vpop.f32.mrf.mxu0
    %v1008 = vadd.f32 0.0, %v1007
    %v1009 = vpop.f32.mrf.mxu0
    %v1010 = vadd.f32 0.0, %v1009
    %1011 = vmatmul.bf16.gmra.mxu0 %v991
    %v1012 = vpop.f32.mrf.mxu0
    %v1013 = vadd.f32 0.0, %v1012
    %v1014 = vpop.f32.mrf.mxu0
    %v1015 = vadd.f32 0.0, %v1014
    %1016 = vmatmul.bf16.gmra.mxu0 %v992
    %v1017 = vpop.f32.mrf.mxu0
    %v1018 = vadd.f32 0.0, %v1017
    %v1019 = vpop.f32.mrf.mxu0
    %v1020 = vadd.f32 0.0, %v1019
    %1021 = vmatmul.bf16.gmra.mxu0 %v993
    %v1022 = vpop.f32.mrf.mxu0
    %v1023 = vadd.f32 0.0, %v1022
    %v1024 = vpop.f32.mrf.mxu0
    %v1025 = vadd.f32 0.0, %v1024
    %1026 = vdwg.mxu0
    %v1027 = vpack.c.bf16 %v1010, %v1008
    %v1028 = vpack.c.bf16 %v1015, %v1013
    %v1029 = vpack.c.bf16 %v1020, %v1018
    %v1030 = vpack.c.bf16 %v1025, %v1023
    %s1031 = scalar_lea.vmem [#allocation13], 192
    %v1032 = vld [vmem:[%s1031] sm:$0xf]
    %v1033 = vld [vmem:[%s1031 + $0x4] sm:$0xf]
    %v1034 = vld [vmem:[%s1031 + $0x8] sm:$0xf]
    %v1035 = vld [vmem:[%s1031 + $0xc] sm:$0xf]
    %v1036 = vld [vmem:[%s1031 + $0x10] sm:$0xf]
    %v1037 = vld [vmem:[%s1031 + $0x14] sm:$0xf]
    %v1038 = vld [vmem:[%s1031 + $0x18] sm:$0xf]
    %v1039 = vld [vmem:[%s1031 + $0x1c] sm:$0xf]
    %v1040 = vld [vmem:[%s1031 + $0x20] sm:$0xf]
    %v1041 = vld [vmem:[%s1031 + $0x24] sm:$0xf]
    %v1042 = vld [vmem:[%s1031 + $0x28] sm:$0xf]
    %v1043 = vld [vmem:[%s1031 + $0x2c] sm:$0xf]
    %v1044 = vld [vmem:[%s1031 + $0x30] sm:$0xf]
    %v1045 = vld [vmem:[%s1031 + $0x34] sm:$0xf]
    %v1046 = vld [vmem:[%s1031 + $0x38] sm:$0xf]
    %v1047 = vld [vmem:[%s1031 + $0x3c] sm:$0xf]
    %v1064 = vunpack.c.l.b16 %v1032
    %v1065 = vunpack.c.l.b16 %v1033
    %v1066 = vunpack.c.l.b16 %v1034
    %v1067 = vunpack.c.l.b16 %v1035
    %v1068 = vunpack.c.l.b16 %v1036
    %v1069 = vunpack.c.l.b16 %v1037
    %v1070 = vunpack.c.l.b16 %v1038
    %v1071 = vunpack.c.l.b16 %v1039
    %v1072 = vunpack.c.l.b16 %v1040
    %v1073 = vunpack.c.l.b16 %v1041
    %v1074 = vunpack.c.l.b16 %v1042
    %v1075 = vunpack.c.l.b16 %v1043
    %v1076 = vunpack.c.l.b16 %v1044
    %v1077 = vunpack.c.l.b16 %v1045
    %v1078 = vunpack.c.l.b16 %v1046
    %v1079 = vunpack.c.l.b16 %v1047
    %v1080 = vpack.c.b16 %v1065, %v1064
    %v1081 = vpack.c.b16 %v1067, %v1066
    %v1082 = vpack.c.b16 %v1069, %v1068
    %v1083 = vpack.c.b16 %v1071, %v1070
    %v1084 = vpack.c.b16 %v1073, %v1072
    %v1085 = vpack.c.b16 %v1075, %v1074
    %v1086 = vpack.c.b16 %v1077, %v1076
    %v1087 = vpack.c.b16 %v1079, %v1078
    %1096 = vmatpush.bf16.msra.mxu0 %v1087
    %1097 = vmatpush.bf16.msra.mxu0 %v1086
    %1098 = vmatpush.bf16.msra.mxu0 %v1085
    %1099 = vmatpush.bf16.msra.mxu0 %v1084
    %1100 = vmatpush.bf16.msra.mxu0 %v1083
    %1101 = vmatpush.bf16.msra.mxu0 %v1082
    %1102 = vmatpush.bf16.msra.mxu0 %v1081
    %1103 = vmatpush.bf16.msra.mxu0 %v1080
    %1104 = vmatmul.bf16.gmra.mxu0 %v1027
    %v1105 = vpop.f32.mrf.mxu0
    %v1106 = vadd.f32 0.0, %v1105
    %v1107 = vpop.f32.mrf.mxu0
    %v1108 = vadd.f32 0.0, %v1107
    %1109 = vmatmul.bf16.gmra.mxu0 %v1028
    %v1110 = vpop.f32.mrf.mxu0
    %v1111 = vadd.f32 0.0, %v1110
    %v1112 = vpop.f32.mrf.mxu0
    %v1113 = vadd.f32 0.0, %v1112
    %1114 = vmatmul.bf16.gmra.mxu0 %v1029
    %v1115 = vpop.f32.mrf.mxu0
    %v1116 = vadd.f32 0.0, %v1115
    %v1117 = vpop.f32.mrf.mxu0
    %v1118 = vadd.f32 0.0, %v1117
    %1119 = vmatmul.bf16.gmra.mxu0 %v1030
    %v1120 = vpop.f32.mrf.mxu0
    %v1121 = vadd.f32 0.0, %v1120
    %v1122 = vpop.f32.mrf.mxu0
    %v1123 = vadd.f32 0.0, %v1122
    %1124 = vdwg.mxu0
    %v1125 = vadd.f32 %v957, %v1106
    %v1126 = vadd.f32 %v958, %v1108
    %v1127 = vadd.f32 %v959, %v1111
    %v1128 = vadd.f32 %v960, %v1113
    %v1129 = vadd.f32 %v961, %v1116
    %v1130 = vadd.f32 %v962, %v1118
    %v1131 = vadd.f32 %v963, %v1121
    %v1132 = vadd.f32 %v964, %v1123
    %v1133 = vld [vmem:[%s15] sm:$0x1]
    %v1135 = vperm.slane %v1133, 0
    %v1137 = vadd.f32 %v1125, %v1135
    %v1138 = vadd.f32 %v1126, %v1135
    %v1139 = vadd.f32 %v1127, %v1135
    %v1140 = vadd.f32 %v1128, %v1135
    %v1141 = vadd.f32 %v1129, %v1135
    %v1142 = vadd.f32 %v1130, %v1135
    %v1143 = vadd.f32 %v1131, %v1135
    %v1144 = vadd.f32 %v1132, %v1135
    %v1145 = vmax.f32 %v1137, 0.0
    %v1146 = vmax.f32 %v1138, 0.0
    %v1147 = vmax.f32 %v1139, 0.0
    %v1148 = vmax.f32 %v1140, 0.0
    %v1149 = vmax.f32 %v1141, 0.0
    %v1150 = vmax.f32 %v1142, 0.0
    %v1151 = vmax.f32 %v1143, 0.0
    %v1152 = vmax.f32 %v1144, 0.0
    %v1153 = vpack.c.bf16 %v1146, %v1145
    %v1154 = vpack.c.bf16 %v1148, %v1147
    %v1155 = vpack.c.bf16 %v1150, %v1149
    %v1156 = vpack.c.bf16 %v1152, %v1151
    %v1157 = vld [vmem:[#allocation14] sm:$0xf]
    %v1158 = vld [vmem:[#allocation14 + $0x4] sm:$0xf]
    %v1159 = vld [vmem:[#allocation14 + $0x8] sm:$0xf]
    %v1160 = vld [vmem:[#allocation14 + $0xc] sm:$0xf]
    %v1161 = vld [vmem:[#allocation14 + $0x10] sm:$0xf]
    %v1162 = vld [vmem:[#allocation14 + $0x14] sm:$0xf]
    %v1163 = vld [vmem:[#allocation14 + $0x18] sm:$0xf]
    %v1164 = vld [vmem:[#allocation14 + $0x1c] sm:$0xf]
    %v1165 = vld [vmem:[#allocation14 + $0x20] sm:$0xf]
    %v1166 = vld [vmem:[#allocation14 + $0x24] sm:$0xf]
    %v1167 = vld [vmem:[#allocation14 + $0x28] sm:$0xf]
    %v1168 = vld [vmem:[#allocation14 + $0x2c] sm:$0xf]
    %v1169 = vld [vmem:[#allocation14 + $0x30] sm:$0xf]
    %v1170 = vld [vmem:[#allocation14 + $0x34] sm:$0xf]
    %v1171 = vld [vmem:[#allocation14 + $0x38] sm:$0xf]
    %v1172 = vld [vmem:[#allocation14 + $0x3c] sm:$0xf]
    %v1173 = vld [vmem:[%s19] sm:$0x1]
    %v1175 = vperm.slane %v1173, 0
    %v1193 = vunpack.c.l.b16 %v1157
    %v1194 = vunpack.c.l.b16 %v1158
    %v1195 = vunpack.c.l.b16 %v1159
    %v1196 = vunpack.c.l.b16 %v1160
    %v1197 = vunpack.c.l.b16 %v1161
    %v1198 = vunpack.c.l.b16 %v1162
    %v1199 = vunpack.c.l.b16 %v1163
    %v1200 = vunpack.c.l.b16 %v1164
    %v1201 = vunpack.c.l.b16 %v1165
    %v1202 = vunpack.c.l.b16 %v1166
    %v1203 = vunpack.c.l.b16 %v1167
    %v1204 = vunpack.c.l.b16 %v1168
    %v1205 = vunpack.c.l.b16 %v1169
    %v1206 = vunpack.c.l.b16 %v1170
    %v1207 = vunpack.c.l.b16 %v1171
    %v1208 = vunpack.c.l.b16 %v1172
    %v1209 = vpack.c.b16 %v1194, %v1193
    %v1210 = vpack.c.b16 %v1196, %v1195
    %v1211 = vpack.c.b16 %v1198, %v1197
    %v1212 = vpack.c.b16 %v1200, %v1199
    %v1213 = vpack.c.b16 %v1202, %v1201
    %v1214 = vpack.c.b16 %v1204, %v1203
    %v1215 = vpack.c.b16 %v1206, %v1205
    %v1216 = vpack.c.b16 %v1208, %v1207
    %1225 = vmatpush.bf16.msra.mxu0 %v1216
    %1226 = vmatpush.bf16.msra.mxu0 %v1215
    %1227 = vmatpush.bf16.msra.mxu0 %v1214
    %1228 = vmatpush.bf16.msra.mxu0 %v1213
    %1229 = vmatpush.bf16.msra.mxu0 %v1212
    %1230 = vmatpush.bf16.msra.mxu0 %v1211
    %1231 = vmatpush.bf16.msra.mxu0 %v1210
    %1232 = vmatpush.bf16.msra.mxu0 %v1209
    %1233 = vmatmul.bf16.gmra.mxu0 %v1153
    %v1234 = vpop.f32.mrf.mxu0
    %v1235 = vadd.f32 %v1175, %v1234
    %v1236 = vpop.f32.mrf.mxu0
    %v1237 = vadd.f32 %v1175, %v1236
    %1238 = vmatmul.bf16.gmra.mxu0 %v1154
    %v1239 = vpop.f32.mrf.mxu0
    %v1240 = vadd.f32 %v1175, %v1239
    %v1241 = vpop.f32.mrf.mxu0
    %v1242 = vadd.f32 %v1175, %v1241
    %1243 = vmatmul.bf16.gmra.mxu0 %v1155
    %v1244 = vpop.f32.mrf.mxu0
    %v1245 = vadd.f32 %v1175, %v1244
    %v1246 = vpop.f32.mrf.mxu0
    %v1247 = vadd.f32 %v1175, %v1246
    %1248 = vmatmul.bf16.gmra.mxu0 %v1156
    %v1249 = vpop.f32.mrf.mxu0
    %v1250 = vadd.f32 %v1175, %v1249
    %v1251 = vpop.f32.mrf.mxu0
    %v1252 = vadd.f32 %v1175, %v1251
    %1253 = vdwg.mxu0
    %v1254 = vmax.f32 %v1235, 0.0
    %v1255 = vmax.f32 %v1237, 0.0
    %v1256 = vmax.f32 %v1240, 0.0
    %v1257 = vmax.f32 %v1242, 0.0
    %v1258 = vmax.f32 %v1245, 0.0
    %v1259 = vmax.f32 %v1247, 0.0
    %v1260 = vmax.f32 %v1250, 0.0
    %v1261 = vmax.f32 %v1252, 0.0
    %v1262 = vpack.c.bf16 %v1255, %v1254
    %v1263 = vpack.c.bf16 %v1257, %v1256
    %v1264 = vpack.c.bf16 %v1259, %v1258
    %v1265 = vpack.c.bf16 %v1261, %v1260
    %v1266 = vld [vmem:[#allocation7] sm:$0xf]
    %v1267 = vld [vmem:[#allocation7 + $0x4] sm:$0xf]
    %v1268 = vld [vmem:[#allocation7 + $0x8] sm:$0xf]
    %v1269 = vld [vmem:[#allocation7 + $0xc] sm:$0xf]
    %v1274 = vunpack.c.l.b16 %v1266
    %v1275 = vunpack.c.l.b16 %v1267
    %v1276 = vunpack.c.l.b16 %v1268
    %v1277 = vunpack.c.l.b16 %v1269
    %v1278 = vpack.c.b16 %v1275, %v1274
    %v1279 = vpack.c.b16 %v1277, %v1276
    %vm1280 = vcmask 523264
    %v1282 = vsel %vm1280, %v1278, 0
    %v1285 = vsel %vm1280, %v1279, 0
    %1287 = vmatpush.bf16.msra.mxu0 0
    %1288 = vmatpush.bf16.msra.mxu0 0
    %1289 = vmatpush.bf16.msra.mxu0 0
    %1290 = vmatpush.bf16.msra.mxu0 0
    %1291 = vmatpush.bf16.msra.mxu0 %v1265
    %1292 = vmatpush.bf16.msra.mxu0 %v1264
    %1293 = vmatpush.bf16.msra.mxu0 %v1263
    %1294 = vmatpush.bf16.msra.mxu0 %v1262
    %1295 = vmatmul.bf16.gmra.mxu0 %v1282
    %v1296 = vpop.f32.mrf.mxu0
    %v1297 = vadd.f32 0.0, %v1296
    %v1298 = vpop.f32.mrf.mxu0
    %v1299 = vadd.f32 0.0, %v1298
    %1300 = vmatmul.bf16.gmra.mxu0 %v1285
    %v1301 = vpop.f32.mrf.mxu0
    %v1302 = vadd.f32 0.0, %v1301
    %v1303 = vpop.f32.mrf.mxu0
    %v1304 = vadd.f32 0.0, %v1303
    %1305 = vdwg.mxu0
    %v1306 = vpack.c.bf16 %v1299, %v1297
    %v1307 = vpack.c.bf16 %v1304, %v1302
    %v1308 = vld [vmem:[#allocation16] sm:$0xf]
    %v1309 = vld [vmem:[#allocation16 + $0x4] sm:$0xf]
    %v1310 = vld [vmem:[#allocation16 + $0x8] sm:$0xf]
    %v1311 = vld [vmem:[#allocation16 + $0xc] sm:$0xf]
    %v1312 = vld [vmem:[#allocation16 + $0x10] sm:$0xf]
    %v1313 = vld [vmem:[#allocation16 + $0x14] sm:$0xf]
    %v1314 = vld [vmem:[#allocation16 + $0x18] sm:$0xf]
    %v1315 = vld [vmem:[#allocation16 + $0x1c] sm:$0xf]
    %v1316 = vld [vmem:[#allocation16 + $0x20] sm:$0xf]
    %v1317 = vld [vmem:[#allocation16 + $0x24] sm:$0xf]
    %v1318 = vld [vmem:[#allocation16 + $0x28] sm:$0xf]
    %v1319 = vld [vmem:[#allocation16 + $0x2c] sm:$0xf]
    %v1320 = vld [vmem:[#allocation16 + $0x30] sm:$0xf]
    %v1321 = vld [vmem:[#allocation16 + $0x34] sm:$0xf]
    %v1322 = vld [vmem:[#allocation16 + $0x38] sm:$0xf]
    %v1323 = vld [vmem:[#allocation16 + $0x3c] sm:$0xf]
    %s1324 = scalar_lea.vmem [#allocation7], 16
    %v1325 = vld [vmem:[%s1324] sm:$0xf]
    %v1326 = vld [vmem:[%s1324 + $0x4] sm:$0xf]
    %v1327 = vld [vmem:[%s1324 + $0x8] sm:$0xf]
    %v1328 = vld [vmem:[%s1324 + $0xc] sm:$0xf]
    %v1333 = vunpack.c.l.b16 %v1325
    %v1334 = vunpack.c.l.b16 %v1326
    %v1335 = vunpack.c.l.b16 %v1327
    %v1336 = vunpack.c.l.b16 %v1328
    %v1337 = vpack.c.b16 %v1334, %v1333
    %v1338 = vpack.c.b16 %v1336, %v1335
    %v1340 = vsel %vm1280, %v1337, 0
    %v1343 = vsel %vm1280, %v1338, 0
    %1345 = vmatpush.bf16.msra.mxu0 0
    %1346 = vmatpush.bf16.msra.mxu0 0
    %1347 = vmatpush.bf16.msra.mxu0 0
    %1348 = vmatpush.bf16.msra.mxu0 0
    %1349 = vmatpush.bf16.msra.mxu0 %v1265
    %1350 = vmatpush.bf16.msra.mxu0 %v1264
    %1351 = vmatpush.bf16.msra.mxu0 %v1263
    %1352 = vmatpush.bf16.msra.mxu0 %v1262
    %1353 = vmatmul.bf16.gmra.mxu0 %v1340
    %v1354 = vpop.f32.mrf.mxu0
    %v1355 = vadd.f32 0.0, %v1354
    %v1356 = vpop.f32.mrf.mxu0
    %v1357 = vadd.f32 0.0, %v1356
    %1358 = vmatmul.bf16.gmra.mxu0 %v1343
    %v1359 = vpop.f32.mrf.mxu0
    %v1360 = vadd.f32 0.0, %v1359
    %v1361 = vpop.f32.mrf.mxu0
    %v1362 = vadd.f32 0.0, %v1361
    %1363 = vdwg.mxu0
    %v1364 = vpack.c.bf16 %v1357, %v1355
    %v1365 = vpack.c.bf16 %v1362, %v1360
    %s1366 = scalar_lea.vmem [#allocation16], 64
    %v1367 = vld [vmem:[%s1366] sm:$0xf]
    %v1368 = vld [vmem:[%s1366 + $0x4] sm:$0xf]
    %v1369 = vld [vmem:[%s1366 + $0x8] sm:$0xf]
    %v1370 = vld [vmem:[%s1366 + $0xc] sm:$0xf]
    %v1371 = vld [vmem:[%s1366 + $0x10] sm:$0xf]
    %v1372 = vld [vmem:[%s1366 + $0x14] sm:$0xf]
    %v1373 = vld [vmem:[%s1366 + $0x18] sm:$0xf]
    %v1374 = vld [vmem:[%s1366 + $0x1c] sm:$0xf]
    %v1375 = vld [vmem:[%s1366 + $0x20] sm:$0xf]
    %v1376 = vld [vmem:[%s1366 + $0x24] sm:$0xf]
    %v1377 = vld [vmem:[%s1366 + $0x28] sm:$0xf]
    %v1378 = vld [vmem:[%s1366 + $0x2c] sm:$0xf]
    %v1379 = vld [vmem:[%s1366 + $0x30] sm:$0xf]
    %v1380 = vld [vmem:[%s1366 + $0x34] sm:$0xf]
    %v1381 = vld [vmem:[%s1366 + $0x38] sm:$0xf]
    %v1382 = vld [vmem:[%s1366 + $0x3c] sm:$0xf]
    %v1399 = vunpack.c.l.b16 %v1367
    %v1400 = vunpack.c.l.b16 %v1368
    %v1401 = vunpack.c.l.b16 %v1369
    %v1402 = vunpack.c.l.b16 %v1370
    %v1403 = vunpack.c.l.b16 %v1371
    %v1404 = vunpack.c.l.b16 %v1372
    %v1405 = vunpack.c.l.b16 %v1373
    %v1406 = vunpack.c.l.b16 %v1374
    %v1407 = vunpack.c.l.b16 %v1375
    %v1408 = vunpack.c.l.b16 %v1376
    %v1409 = vunpack.c.l.b16 %v1377
    %v1410 = vunpack.c.l.b16 %v1378
    %v1411 = vunpack.c.l.b16 %v1379
    %v1412 = vunpack.c.l.b16 %v1380
    %v1413 = vunpack.c.l.b16 %v1381
    %v1414 = vunpack.c.l.b16 %v1382
    %v1415 = vpack.c.b16 %v1400, %v1399
    %v1416 = vpack.c.b16 %v1402, %v1401
    %v1417 = vpack.c.b16 %v1404, %v1403
    %v1418 = vpack.c.b16 %v1406, %v1405
    %v1419 = vpack.c.b16 %v1408, %v1407
    %v1420 = vpack.c.b16 %v1410, %v1409
    %v1421 = vpack.c.b16 %v1412, %v1411
    %v1422 = vpack.c.b16 %v1414, %v1413
    %1431 = vmatpush.bf16.msra.mxu0 %v1422
    %1432 = vmatpush.bf16.msra.mxu0 %v1421
    %1433 = vmatpush.bf16.msra.mxu0 %v1420
    %1434 = vmatpush.bf16.msra.mxu0 %v1419
    %1435 = vmatpush.bf16.msra.mxu0 %v1418
    %1436 = vmatpush.bf16.msra.mxu0 %v1417
    %1437 = vmatpush.bf16.msra.mxu0 %v1416
    %1438 = vmatpush.bf16.msra.mxu0 %v1415
    %1439 = vmatmul.bf16.gmra.mxu0 %v1364
    %v1440 = vpop.f32.mrf.mxu0
    %v1441 = vadd.f32 0.0, %v1440
    %v1442 = vpop.f32.mrf.mxu0
    %v1443 = vadd.f32 0.0, %v1442
    %1444 = vmatmul.bf16.gmra.mxu0 %v1365
    %v1445 = vpop.f32.mrf.mxu0
    %v1446 = vadd.f32 0.0, %v1445
    %v1447 = vpop.f32.mrf.mxu0
    %v1448 = vadd.f32 0.0, %v1447
    %1449 = vdwg.mxu0
    %v1466 = vunpack.c.l.b16 %v1308
    %v1467 = vunpack.c.l.b16 %v1309
    %v1468 = vunpack.c.l.b16 %v1310
    %v1469 = vunpack.c.l.b16 %v1311
    %v1470 = vunpack.c.l.b16 %v1312
    %v1471 = vunpack.c.l.b16 %v1313
    %v1472 = vunpack.c.l.b16 %v1314
    %v1473 = vunpack.c.l.b16 %v1315
    %v1474 = vunpack.c.l.b16 %v1316
    %v1475 = vunpack.c.l.b16 %v1317
    %v1476 = vunpack.c.l.b16 %v1318
    %v1477 = vunpack.c.l.b16 %v1319
    %v1478 = vunpack.c.l.b16 %v1320
    %v1479 = vunpack.c.l.b16 %v1321
    %v1480 = vunpack.c.l.b16 %v1322
    %v1481 = vunpack.c.l.b16 %v1323
    %v1482 = vpack.c.b16 %v1467, %v1466
    %v1483 = vpack.c.b16 %v1469, %v1468
    %v1484 = vpack.c.b16 %v1471, %v1470
    %v1485 = vpack.c.b16 %v1473, %v1472
    %v1486 = vpack.c.b16 %v1475, %v1474
    %v1487 = vpack.c.b16 %v1477, %v1476
    %v1488 = vpack.c.b16 %v1479, %v1478
    %v1489 = vpack.c.b16 %v1481, %v1480
    %1498 = vmatpush.bf16.msra.mxu0 %v1489
    %1499 = vmatpush.bf16.msra.mxu0 %v1488
    %1500 = vmatpush.bf16.msra.mxu0 %v1487
    %1501 = vmatpush.bf16.msra.mxu0 %v1486
    %1502 = vmatpush.bf16.msra.mxu0 %v1485
    %1503 = vmatpush.bf16.msra.mxu0 %v1484
    %1504 = vmatpush.bf16.msra.mxu0 %v1483
    %1505 = vmatpush.bf16.msra.mxu0 %v1482
    %1506 = vmatmul.bf16.gmra.mxu0 %v1306
    %v1507 = vpop.f32.mrf.mxu0
    %v1508 = vadd.f32 %v1441, %v1507
    %v1509 = vpop.f32.mrf.mxu0
    %v1510 = vadd.f32 %v1443, %v1509
    %1511 = vmatmul.bf16.gmra.mxu0 %v1307
    %v1512 = vpop.f32.mrf.mxu0
    %v1513 = vadd.f32 %v1446, %v1512
    %v1514 = vpop.f32.mrf.mxu0
    %v1515 = vadd.f32 %v1448, %v1514
    %1516 = vdwg.mxu0
    %s1517 = scalar_lea.vmem [#allocation7], 32
    %v1518 = vld [vmem:[%s1517] sm:$0xf]
    %v1519 = vld [vmem:[%s1517 + $0x4] sm:$0xf]
    %v1520 = vld [vmem:[%s1517 + $0x8] sm:$0xf]
    %v1521 = vld [vmem:[%s1517 + $0xc] sm:$0xf]
    %v1526 = vunpack.c.l.b16 %v1518
    %v1527 = vunpack.c.l.b16 %v1519
    %v1528 = vunpack.c.l.b16 %v1520
    %v1529 = vunpack.c.l.b16 %v1521
    %v1530 = vpack.c.b16 %v1527, %v1526
    %v1531 = vpack.c.b16 %v1529, %v1528
    %v1533 = vsel %vm1280, %v1530, 0
    %v1536 = vsel %vm1280, %v1531, 0
    %1538 = vmatpush.bf16.msra.mxu0 0
    %1539 = vmatpush.bf16.msra.mxu0 0
    %1540 = vmatpush.bf16.msra.mxu0 0
    %1541 = vmatpush.bf16.msra.mxu0 0
    %1542 = vmatpush.bf16.msra.mxu0 %v1265
    %1543 = vmatpush.bf16.msra.mxu0 %v1264
    %1544 = vmatpush.bf16.msra.mxu0 %v1263
    %1545 = vmatpush.bf16.msra.mxu0 %v1262
    %1546 = vmatmul.bf16.gmra.mxu0 %v1533
    %v1547 = vpop.f32.mrf.mxu0
    %v1548 = vadd.f32 0.0, %v1547
    %v1549 = vpop.f32.mrf.mxu0
    %v1550 = vadd.f32 0.0, %v1549
    %1551 = vmatmul.bf16.gmra.mxu0 %v1536
    %v1552 = vpop.f32.mrf.mxu0
    %v1553 = vadd.f32 0.0, %v1552
    %v1554 = vpop.f32.mrf.mxu0
    %v1555 = vadd.f32 0.0, %v1554
    %1556 = vdwg.mxu0
    %v1557 = vpack.c.bf16 %v1550, %v1548
    %v1558 = vpack.c.bf16 %v1555, %v1553
    %s1559 = scalar_lea.vmem [#allocation16], 128
    %v1560 = vld [vmem:[%s1559] sm:$0xf]
    %v1561 = vld [vmem:[%s1559 + $0x4] sm:$0xf]
    %v1562 = vld [vmem:[%s1559 + $0x8] sm:$0xf]
    %v1563 = vld [vmem:[%s1559 + $0xc] sm:$0xf]
    %v1564 = vld [vmem:[%s1559 + $0x10] sm:$0xf]
    %v1565 = vld [vmem:[%s1559 + $0x14] sm:$0xf]
    %v1566 = vld [vmem:[%s1559 + $0x18] sm:$0xf]
    %v1567 = vld [vmem:[%s1559 + $0x1c] sm:$0xf]
    %v1568 = vld [vmem:[%s1559 + $0x20] sm:$0xf]
    %v1569 = vld [vmem:[%s1559 + $0x24] sm:$0xf]
    %v1570 = vld [vmem:[%s1559 + $0x28] sm:$0xf]
    %v1571 = vld [vmem:[%s1559 + $0x2c] sm:$0xf]
    %v1572 = vld [vmem:[%s1559 + $0x30] sm:$0xf]
    %v1573 = vld [vmem:[%s1559 + $0x34] sm:$0xf]
    %v1574 = vld [vmem:[%s1559 + $0x38] sm:$0xf]
    %v1575 = vld [vmem:[%s1559 + $0x3c] sm:$0xf]
    %v1592 = vunpack.c.l.b16 %v1560
    %v1593 = vunpack.c.l.b16 %v1561
    %v1594 = vunpack.c.l.b16 %v1562
    %v1595 = vunpack.c.l.b16 %v1563
    %v1596 = vunpack.c.l.b16 %v1564
    %v1597 = vunpack.c.l.b16 %v1565
    %v1598 = vunpack.c.l.b16 %v1566
    %v1599 = vunpack.c.l.b16 %v1567
    %v1600 = vunpack.c.l.b16 %v1568
    %v1601 = vunpack.c.l.b16 %v1569
    %v1602 = vunpack.c.l.b16 %v1570
    %v1603 = vunpack.c.l.b16 %v1571
    %v1604 = vunpack.c.l.b16 %v1572
    %v1605 = vunpack.c.l.b16 %v1573
    %v1606 = vunpack.c.l.b16 %v1574
    %v1607 = vunpack.c.l.b16 %v1575
    %v1608 = vpack.c.b16 %v1593, %v1592
    %v1609 = vpack.c.b16 %v1595, %v1594
    %v1610 = vpack.c.b16 %v1597, %v1596
    %v1611 = vpack.c.b16 %v1599, %v1598
    %v1612 = vpack.c.b16 %v1601, %v1600
    %v1613 = vpack.c.b16 %v1603, %v1602
    %v1614 = vpack.c.b16 %v1605, %v1604
    %v1615 = vpack.c.b16 %v1607, %v1606
    %1624 = vmatpush.bf16.msra.mxu0 %v1615
    %1625 = vmatpush.bf16.msra.mxu0 %v1614
    %1626 = vmatpush.bf16.msra.mxu0 %v1613
    %1627 = vmatpush.bf16.msra.mxu0 %v1612
    %1628 = vmatpush.bf16.msra.mxu0 %v1611
    %1629 = vmatpush.bf16.msra.mxu0 %v1610
    %1630 = vmatpush.bf16.msra.mxu0 %v1609
    %1631 = vmatpush.bf16.msra.mxu0 %v1608
    %1632 = vmatmul.bf16.gmra.mxu0 %v1557
    %v1633 = vpop.f32.mrf.mxu0
    %v1634 = vadd.f32 0.0, %v1633
    %v1635 = vpop.f32.mrf.mxu0
    %v1636 = vadd.f32 0.0, %v1635
    %1637 = vmatmul.bf16.gmra.mxu0 %v1558
    %v1638 = vpop.f32.mrf.mxu0
    %v1639 = vadd.f32 0.0, %v1638
    %v1640 = vpop.f32.mrf.mxu0
    %v1641 = vadd.f32 0.0, %v1640
    %1642 = vdwg.mxu0
    %v1643 = vadd.f32 %v1508, %v1634
    %v1644 = vadd.f32 %v1510, %v1636
    %v1645 = vadd.f32 %v1513, %v1639
    %v1646 = vadd.f32 %v1515, %v1641
    %s1647 = scalar_lea.vmem [#allocation7], 48
    %v1648 = vld [vmem:[%s1647] sm:$0xf]
    %v1649 = vld [vmem:[%s1647 + $0x4] sm:$0xf]
    %v1650 = vld [vmem:[%s1647 + $0x8] sm:$0xf]
    %v1651 = vld [vmem:[%s1647 + $0xc] sm:$0xf]
    %v1656 = vunpack.c.l.b16 %v1648
    %v1657 = vunpack.c.l.b16 %v1649
    %v1658 = vunpack.c.l.b16 %v1650
    %v1659 = vunpack.c.l.b16 %v1651
    %v1660 = vpack.c.b16 %v1657, %v1656
    %v1661 = vpack.c.b16 %v1659, %v1658
    %v1663 = vsel %vm1280, %v1660, 0
    %v1666 = vsel %vm1280, %v1661, 0
    %1668 = vmatpush.bf16.msra.mxu0 0
    %1669 = vmatpush.bf16.msra.mxu0 0
    %1670 = vmatpush.bf16.msra.mxu0 0
    %1671 = vmatpush.bf16.msra.mxu0 0
    %1672 = vmatpush.bf16.msra.mxu0 %v1265
    %1673 = vmatpush.bf16.msra.mxu0 %v1264
    %1674 = vmatpush.bf16.msra.mxu0 %v1263
    %1675 = vmatpush.bf16.msra.mxu0 %v1262
    %1676 = vmatmul.bf16.gmra.mxu0 %v1663
    %v1677 = vpop.f32.mrf.mxu0
    %v1678 = vadd.f32 0.0, %v1677
    %v1679 = vpop.f32.mrf.mxu0
    %v1680 = vadd.f32 0.0, %v1679
    %1681 = vmatmul.bf16.gmra.mxu0 %v1666
    %v1682 = vpop.f32.mrf.mxu0
    %v1683 = vadd.f32 0.0, %v1682
    %v1684 = vpop.f32.mrf.mxu0
    %v1685 = vadd.f32 0.0, %v1684
    %1686 = vdwg.mxu0
    %v1687 = vpack.c.bf16 %v1680, %v1678
    %v1688 = vpack.c.bf16 %v1685, %v1683
    %s1689 = scalar_lea.vmem [#allocation16], 192
    %v1690 = vld [vmem:[%s1689] sm:$0xf]
    %v1691 = vld [vmem:[%s1689 + $0x4] sm:$0xf]
    %v1692 = vld [vmem:[%s1689 + $0x8] sm:$0xf]
    %v1693 = vld [vmem:[%s1689 + $0xc] sm:$0xf]
    %v1694 = vld [vmem:[%s1689 + $0x10] sm:$0xf]
    %v1695 = vld [vmem:[%s1689 + $0x14] sm:$0xf]
    %v1696 = vld [vmem:[%s1689 + $0x18] sm:$0xf]
    %v1697 = vld [vmem:[%s1689 + $0x1c] sm:$0xf]
    %v1698 = vld [vmem:[%s1689 + $0x20] sm:$0xf]
    %v1699 = vld [vmem:[%s1689 + $0x24] sm:$0xf]
    %v1700 = vld [vmem:[%s1689 + $0x28] sm:$0xf]
    %v1701 = vld [vmem:[%s1689 + $0x2c] sm:$0xf]
    %v1702 = vld [vmem:[%s1689 + $0x30] sm:$0xf]
    %v1703 = vld [vmem:[%s1689 + $0x34] sm:$0xf]
    %v1704 = vld [vmem:[%s1689 + $0x38] sm:$0xf]
    %v1705 = vld [vmem:[%s1689 + $0x3c] sm:$0xf]
    %v1722 = vunpack.c.l.b16 %v1690
    %v1723 = vunpack.c.l.b16 %v1691
    %v1724 = vunpack.c.l.b16 %v1692
    %v1725 = vunpack.c.l.b16 %v1693
    %v1726 = vunpack.c.l.b16 %v1694
    %v1727 = vunpack.c.l.b16 %v1695
    %v1728 = vunpack.c.l.b16 %v1696
    %v1729 = vunpack.c.l.b16 %v1697
    %v1730 = vunpack.c.l.b16 %v1698
    %v1731 = vunpack.c.l.b16 %v1699
    %v1732 = vunpack.c.l.b16 %v1700
    %v1733 = vunpack.c.l.b16 %v1701
    %v1734 = vunpack.c.l.b16 %v1702
    %v1735 = vunpack.c.l.b16 %v1703
    %v1736 = vunpack.c.l.b16 %v1704
    %v1737 = vunpack.c.l.b16 %v1705
    %v1738 = vpack.c.b16 %v1723, %v1722
    %v1739 = vpack.c.b16 %v1725, %v1724
    %v1740 = vpack.c.b16 %v1727, %v1726
    %v1741 = vpack.c.b16 %v1729, %v1728
    %v1742 = vpack.c.b16 %v1731, %v1730
    %v1743 = vpack.c.b16 %v1733, %v1732
    %v1744 = vpack.c.b16 %v1735, %v1734
    %v1745 = vpack.c.b16 %v1737, %v1736
    %1754 = vmatpush.bf16.msra.mxu0 %v1745
    %1755 = vmatpush.bf16.msra.mxu0 %v1744
    %1756 = vmatpush.bf16.msra.mxu0 %v1743
    %1757 = vmatpush.bf16.msra.mxu0 %v1742
    %1758 = vmatpush.bf16.msra.mxu0 %v1741
    %1759 = vmatpush.bf16.msra.mxu0 %v1740
    %1760 = vmatpush.bf16.msra.mxu0 %v1739
    %1761 = vmatpush.bf16.msra.mxu0 %v1738
    %1762 = vmatmul.bf16.gmra.mxu0 %v1687
    %v1763 = vpop.f32.mrf.mxu0
    %v1764 = vadd.f32 0.0, %v1763
    %v1765 = vpop.f32.mrf.mxu0
    %v1766 = vadd.f32 0.0, %v1765
    %1767 = vmatmul.bf16.gmra.mxu0 %v1688
    %v1768 = vpop.f32.mrf.mxu0
    %v1769 = vadd.f32 0.0, %v1768
    %v1770 = vpop.f32.mrf.mxu0
    %v1771 = vadd.f32 0.0, %v1770
    %1772 = vdwg.mxu0
    %v1773 = vadd.f32 %v1643, %v1764
    %v1774 = vadd.f32 %v1644, %v1766
    %v1775 = vadd.f32 %v1645, %v1769
    %v1776 = vadd.f32 %v1646, %v1771
    %v1777 = vld [vmem:[%s23] sm:$0x1]
    %v1779 = vperm.slane %v1777, 0
    %v1781 = vadd.f32 %v1773, %v1779
    %v1782 = vadd.f32 %v1774, %v1779
    %v1783 = vadd.f32 %v1775, %v1779
    %v1784 = vadd.f32 %v1776, %v1779
    %v1785 = vpack.c.bf16 %v1138, %v1137
    %v1786 = vpack.c.bf16 %v1140, %v1139
    %v1787 = vpack.c.bf16 %v1142, %v1141
    %v1788 = vpack.c.bf16 %v1144, %v1143
    %1789 = vmatpush.bf16.msra.mxu0 0
    %1790 = vmatpush.bf16.msra.mxu0 0
    %1791 = vmatpush.bf16.msra.mxu0 0
    %1792 = vmatpush.bf16.msra.mxu0 0
    %1793 = vmatpush.bf16.msra.mxu0 %v1788
    %1794 = vmatpush.bf16.msra.mxu0 %v1787
    %1795 = vmatpush.bf16.msra.mxu0 %v1786
    %1796 = vmatpush.bf16.msra.mxu0 %v1785
    %1797 = vmatmul.bf16.gmra.mxu0 %v1282
    %v1798 = vpop.f32.mrf.mxu0
    %v1799 = vadd.f32 0.0, %v1798
    %v1800 = vpop.f32.mrf.mxu0
    %v1801 = vadd.f32 0.0, %v1800
    %1802 = vmatmul.bf16.gmra.mxu0 %v1285
    %v1803 = vpop.f32.mrf.mxu0
    %v1804 = vadd.f32 0.0, %v1803
    %v1805 = vpop.f32.mrf.mxu0
    %v1806 = vadd.f32 0.0, %v1805
    %1807 = vdwg.mxu0
    %v1808 = vpack.c.bf16 %v1801, %v1799
    %v1809 = vpack.c.bf16 %v1806, %v1804
    %v1810 = vld [vmem:[#allocation17] sm:$0xf]
    %v1811 = vld [vmem:[#allocation17 + $0x4] sm:$0xf]
    %v1812 = vld [vmem:[#allocation17 + $0x8] sm:$0xf]
    %v1813 = vld [vmem:[#allocation17 + $0xc] sm:$0xf]
    %v1814 = vld [vmem:[#allocation17 + $0x10] sm:$0xf]
    %v1815 = vld [vmem:[#allocation17 + $0x14] sm:$0xf]
    %v1816 = vld [vmem:[#allocation17 + $0x18] sm:$0xf]
    %v1817 = vld [vmem:[#allocation17 + $0x1c] sm:$0xf]
    %v1818 = vld [vmem:[#allocation17 + $0x20] sm:$0xf]
    %v1819 = vld [vmem:[#allocation17 + $0x24] sm:$0xf]
    %v1820 = vld [vmem:[#allocation17 + $0x28] sm:$0xf]
    %v1821 = vld [vmem:[#allocation17 + $0x2c] sm:$0xf]
    %v1822 = vld [vmem:[#allocation17 + $0x30] sm:$0xf]
    %v1823 = vld [vmem:[#allocation17 + $0x34] sm:$0xf]
    %v1824 = vld [vmem:[#allocation17 + $0x38] sm:$0xf]
    %v1825 = vld [vmem:[#allocation17 + $0x3c] sm:$0xf]
    %1826 = vmatpush.bf16.msra.mxu0 0
    %1827 = vmatpush.bf16.msra.mxu0 0
    %1828 = vmatpush.bf16.msra.mxu0 0
    %1829 = vmatpush.bf16.msra.mxu0 0
    %1830 = vmatpush.bf16.msra.mxu0 %v1788
    %1831 = vmatpush.bf16.msra.mxu0 %v1787
    %1832 = vmatpush.bf16.msra.mxu0 %v1786
    %1833 = vmatpush.bf16.msra.mxu0 %v1785
    %1834 = vmatmul.bf16.gmra.mxu0 %v1340
    %v1835 = vpop.f32.mrf.mxu0
    %v1836 = vadd.f32 0.0, %v1835
    %v1837 = vpop.f32.mrf.mxu0
    %v1838 = vadd.f32 0.0, %v1837
    %1839 = vmatmul.bf16.gmra.mxu0 %v1343
    %v1840 = vpop.f32.mrf.mxu0
    %v1841 = vadd.f32 0.0, %v1840
    %v1842 = vpop.f32.mrf.mxu0
    %v1843 = vadd.f32 0.0, %v1842
    %1844 = vdwg.mxu0
    %v1845 = vpack.c.bf16 %v1838, %v1836
    %v1846 = vpack.c.bf16 %v1843, %v1841
    %s1847 = scalar_lea.vmem [#allocation17], 64
    %v1848 = vld [vmem:[%s1847] sm:$0xf]
    %v1849 = vld [vmem:[%s1847 + $0x4] sm:$0xf]
    %v1850 = vld [vmem:[%s1847 + $0x8] sm:$0xf]
    %v1851 = vld [vmem:[%s1847 + $0xc] sm:$0xf]
    %v1852 = vld [vmem:[%s1847 + $0x10] sm:$0xf]
    %v1853 = vld [vmem:[%s1847 + $0x14] sm:$0xf]
    %v1854 = vld [vmem:[%s1847 + $0x18] sm:$0xf]
    %v1855 = vld [vmem:[%s1847 + $0x1c] sm:$0xf]
    %v1856 = vld [vmem:[%s1847 + $0x20] sm:$0xf]
    %v1857 = vld [vmem:[%s1847 + $0x24] sm:$0xf]
    %v1858 = vld [vmem:[%s1847 + $0x28] sm:$0xf]
    %v1859 = vld [vmem:[%s1847 + $0x2c] sm:$0xf]
    %v1860 = vld [vmem:[%s1847 + $0x30] sm:$0xf]
    %v1861 = vld [vmem:[%s1847 + $0x34] sm:$0xf]
    %v1862 = vld [vmem:[%s1847 + $0x38] sm:$0xf]
    %v1863 = vld [vmem:[%s1847 + $0x3c] sm:$0xf]
    %v1880 = vunpack.c.l.b16 %v1848
    %v1881 = vunpack.c.l.b16 %v1849
    %v1882 = vunpack.c.l.b16 %v1850
    %v1883 = vunpack.c.l.b16 %v1851
    %v1884 = vunpack.c.l.b16 %v1852
    %v1885 = vunpack.c.l.b16 %v1853
    %v1886 = vunpack.c.l.b16 %v1854
    %v1887 = vunpack.c.l.b16 %v1855
    %v1888 = vunpack.c.l.b16 %v1856
    %v1889 = vunpack.c.l.b16 %v1857
    %v1890 = vunpack.c.l.b16 %v1858
    %v1891 = vunpack.c.l.b16 %v1859
    %v1892 = vunpack.c.l.b16 %v1860
    %v1893 = vunpack.c.l.b16 %v1861
    %v1894 = vunpack.c.l.b16 %v1862
    %v1895 = vunpack.c.l.b16 %v1863
    %v1896 = vpack.c.b16 %v1881, %v1880
    %v1897 = vpack.c.b16 %v1883, %v1882
    %v1898 = vpack.c.b16 %v1885, %v1884
    %v1899 = vpack.c.b16 %v1887, %v1886
    %v1900 = vpack.c.b16 %v1889, %v1888
    %v1901 = vpack.c.b16 %v1891, %v1890
    %v1902 = vpack.c.b16 %v1893, %v1892
    %v1903 = vpack.c.b16 %v1895, %v1894
    %1912 = vmatpush.bf16.msra.mxu0 %v1903
    %1913 = vmatpush.bf16.msra.mxu0 %v1902
    %1914 = vmatpush.bf16.msra.mxu0 %v1901
    %1915 = vmatpush.bf16.msra.mxu0 %v1900
    %1916 = vmatpush.bf16.msra.mxu0 %v1899
    %1917 = vmatpush.bf16.msra.mxu0 %v1898
    %1918 = vmatpush.bf16.msra.mxu0 %v1897
    %1919 = vmatpush.bf16.msra.mxu0 %v1896
    %1920 = vmatmul.bf16.gmra.mxu0 %v1845
    %v1921 = vpop.f32.mrf.mxu0
    %v1922 = vadd.f32 0.0, %v1921
    %v1923 = vpop.f32.mrf.mxu0
    %v1924 = vadd.f32 0.0, %v1923
    %1925 = vmatmul.bf16.gmra.mxu0 %v1846
    %v1926 = vpop.f32.mrf.mxu0
    %v1927 = vadd.f32 0.0, %v1926
    %v1928 = vpop.f32.mrf.mxu0
    %v1929 = vadd.f32 0.0, %v1928
    %1930 = vdwg.mxu0
    %v1947 = vunpack.c.l.b16 %v1810
    %v1948 = vunpack.c.l.b16 %v1811
    %v1949 = vunpack.c.l.b16 %v1812
    %v1950 = vunpack.c.l.b16 %v1813
    %v1951 = vunpack.c.l.b16 %v1814
    %v1952 = vunpack.c.l.b16 %v1815
    %v1953 = vunpack.c.l.b16 %v1816
    %v1954 = vunpack.c.l.b16 %v1817
    %v1955 = vunpack.c.l.b16 %v1818
    %v1956 = vunpack.c.l.b16 %v1819
    %v1957 = vunpack.c.l.b16 %v1820
    %v1958 = vunpack.c.l.b16 %v1821
    %v1959 = vunpack.c.l.b16 %v1822
    %v1960 = vunpack.c.l.b16 %v1823
    %v1961 = vunpack.c.l.b16 %v1824
    %v1962 = vunpack.c.l.b16 %v1825
    %v1963 = vpack.c.b16 %v1948, %v1947
    %v1964 = vpack.c.b16 %v1950, %v1949
    %v1965 = vpack.c.b16 %v1952, %v1951
    %v1966 = vpack.c.b16 %v1954, %v1953
    %v1967 = vpack.c.b16 %v1956, %v1955
    %v1968 = vpack.c.b16 %v1958, %v1957
    %v1969 = vpack.c.b16 %v1960, %v1959
    %v1970 = vpack.c.b16 %v1962, %v1961
    %1979 = vmatpush.bf16.msra.mxu0 %v1970
    %1980 = vmatpush.bf16.msra.mxu0 %v1969
    %1981 = vmatpush.bf16.msra.mxu0 %v1968
    %1982 = vmatpush.bf16.msra.mxu0 %v1967
    %1983 = vmatpush.bf16.msra.mxu0 %v1966
    %1984 = vmatpush.bf16.msra.mxu0 %v1965
    %1985 = vmatpush.bf16.msra.mxu0 %v1964
    %1986 = vmatpush.bf16.msra.mxu0 %v1963
    %1987 = vmatmul.bf16.gmra.mxu0 %v1808
    %v1988 = vpop.f32.mrf.mxu0
    %v1989 = vadd.f32 %v1922, %v1988
    %v1990 = vpop.f32.mrf.mxu0
    %v1991 = vadd.f32 %v1924, %v1990
    %1992 = vmatmul.bf16.gmra.mxu0 %v1809
    %v1993 = vpop.f32.mrf.mxu0
    %v1994 = vadd.f32 %v1927, %v1993
    %v1995 = vpop.f32.mrf.mxu0
    %v1996 = vadd.f32 %v1929, %v1995
    %1997 = vdwg.mxu0
    %1998 = vmatpush.bf16.msra.mxu0 0
    %1999 = vmatpush.bf16.msra.mxu0 0
    %2000 = vmatpush.bf16.msra.mxu0 0
    %2001 = vmatpush.bf16.msra.mxu0 0
    %2002 = vmatpush.bf16.msra.mxu0 %v1788
    %2003 = vmatpush.bf16.msra.mxu0 %v1787
    %2004 = vmatpush.bf16.msra.mxu0 %v1786
    %2005 = vmatpush.bf16.msra.mxu0 %v1785
    %2006 = vmatmul.bf16.gmra.mxu0 %v1533
    %v2007 = vpop.f32.mrf.mxu0
    %v2008 = vadd.f32 0.0, %v2007
    %v2009 = vpop.f32.mrf.mxu0
    %v2010 = vadd.f32 0.0, %v2009
    %2011 = vmatmul.bf16.gmra.mxu0 %v1536
    %v2012 = vpop.f32.mrf.mxu0
    %v2013 = vadd.f32 0.0, %v2012
    %v2014 = vpop.f32.mrf.mxu0
    %v2015 = vadd.f32 0.0, %v2014
    %2016 = vdwg.mxu0
    %v2017 = vpack.c.bf16 %v2010, %v2008
    %v2018 = vpack.c.bf16 %v2015, %v2013
    %s2019 = scalar_lea.vmem [#allocation17], 128
    %v2020 = vld [vmem:[%s2019] sm:$0xf]
    %v2021 = vld [vmem:[%s2019 + $0x4] sm:$0xf]
    %v2022 = vld [vmem:[%s2019 + $0x8] sm:$0xf]
    %v2023 = vld [vmem:[%s2019 + $0xc] sm:$0xf]
    %v2024 = vld [vmem:[%s2019 + $0x10] sm:$0xf]
    %v2025 = vld [vmem:[%s2019 + $0x14] sm:$0xf]
    %v2026 = vld [vmem:[%s2019 + $0x18] sm:$0xf]
    %v2027 = vld [vmem:[%s2019 + $0x1c] sm:$0xf]
    %v2028 = vld [vmem:[%s2019 + $0x20] sm:$0xf]
    %v2029 = vld [vmem:[%s2019 + $0x24] sm:$0xf]
    %v2030 = vld [vmem:[%s2019 + $0x28] sm:$0xf]
    %v2031 = vld [vmem:[%s2019 + $0x2c] sm:$0xf]
    %v2032 = vld [vmem:[%s2019 + $0x30] sm:$0xf]
    %v2033 = vld [vmem:[%s2019 + $0x34] sm:$0xf]
    %v2034 = vld [vmem:[%s2019 + $0x38] sm:$0xf]
    %v2035 = vld [vmem:[%s2019 + $0x3c] sm:$0xf]
    %v2052 = vunpack.c.l.b16 %v2020
    %v2053 = vunpack.c.l.b16 %v2021
    %v2054 = vunpack.c.l.b16 %v2022
    %v2055 = vunpack.c.l.b16 %v2023
    %v2056 = vunpack.c.l.b16 %v2024
    %v2057 = vunpack.c.l.b16 %v2025
    %v2058 = vunpack.c.l.b16 %v2026
    %v2059 = vunpack.c.l.b16 %v2027
    %v2060 = vunpack.c.l.b16 %v2028
    %v2061 = vunpack.c.l.b16 %v2029
    %v2062 = vunpack.c.l.b16 %v2030
    %v2063 = vunpack.c.l.b16 %v2031
    %v2064 = vunpack.c.l.b16 %v2032
    %v2065 = vunpack.c.l.b16 %v2033
    %v2066 = vunpack.c.l.b16 %v2034
    %v2067 = vunpack.c.l.b16 %v2035
    %v2068 = vpack.c.b16 %v2053, %v2052
    %v2069 = vpack.c.b16 %v2055, %v2054
    %v2070 = vpack.c.b16 %v2057, %v2056
    %v2071 = vpack.c.b16 %v2059, %v2058
    %v2072 = vpack.c.b16 %v2061, %v2060
    %v2073 = vpack.c.b16 %v2063, %v2062
    %v2074 = vpack.c.b16 %v2065, %v2064
    %v2075 = vpack.c.b16 %v2067, %v2066
    %2084 = vmatpush.bf16.msra.mxu0 %v2075
    %2085 = vmatpush.bf16.msra.mxu0 %v2074
    %2086 = vmatpush.bf16.msra.mxu0 %v2073
    %2087 = vmatpush.bf16.msra.mxu0 %v2072
    %2088 = vmatpush.bf16.msra.mxu0 %v2071
    %2089 = vmatpush.bf16.msra.mxu0 %v2070
    %2090 = vmatpush.bf16.msra.mxu0 %v2069
    %2091 = vmatpush.bf16.msra.mxu0 %v2068
    %2092 = vmatmul.bf16.gmra.mxu0 %v2017
    %v2093 = vpop.f32.mrf.mxu0
    %v2094 = vadd.f32 0.0, %v2093
    %v2095 = vpop.f32.mrf.mxu0
    %v2096 = vadd.f32 0.0, %v2095
    %2097 = vmatmul.bf16.gmra.mxu0 %v2018
    %v2098 = vpop.f32.mrf.mxu0
    %v2099 = vadd.f32 0.0, %v2098
    %v2100 = vpop.f32.mrf.mxu0
    %v2101 = vadd.f32 0.0, %v2100
    %2102 = vdwg.mxu0
    %v2103 = vadd.f32 %v1989, %v2094
    %v2104 = vadd.f32 %v1991, %v2096
    %v2105 = vadd.f32 %v1994, %v2099
    %v2106 = vadd.f32 %v1996, %v2101
    %2107 = vmatpush.bf16.msra.mxu0 0
    %2108 = vmatpush.bf16.msra.mxu0 0
    %2109 = vmatpush.bf16.msra.mxu0 0
    %2110 = vmatpush.bf16.msra.mxu0 0
    %2111 = vmatpush.bf16.msra.mxu0 %v1788
    %2112 = vmatpush.bf16.msra.mxu0 %v1787
    %2113 = vmatpush.bf16.msra.mxu0 %v1786
    %2114 = vmatpush.bf16.msra.mxu0 %v1785
    %2115 = vmatmul.bf16.gmra.mxu0 %v1663
    %v2116 = vpop.f32.mrf.mxu0
    %v2117 = vadd.f32 0.0, %v2116
    %v2118 = vpop.f32.mrf.mxu0
    %v2119 = vadd.f32 0.0, %v2118
    %2120 = vmatmul.bf16.gmra.mxu0 %v1666
    %v2121 = vpop.f32.mrf.mxu0
    %v2122 = vadd.f32 0.0, %v2121
    %v2123 = vpop.f32.mrf.mxu0
    %v2124 = vadd.f32 0.0, %v2123
    %2125 = vdwg.mxu0
    %v2126 = vpack.c.bf16 %v2119, %v2117
    %v2127 = vpack.c.bf16 %v2124, %v2122
    %s2128 = scalar_lea.vmem [#allocation17], 192
    %v2129 = vld [vmem:[%s2128] sm:$0xf]
    %v2130 = vld [vmem:[%s2128 + $0x4] sm:$0xf]
    %v2131 = vld [vmem:[%s2128 + $0x8] sm:$0xf]
    %v2132 = vld [vmem:[%s2128 + $0xc] sm:$0xf]
    %v2133 = vld [vmem:[%s2128 + $0x10] sm:$0xf]
    %v2134 = vld [vmem:[%s2128 + $0x14] sm:$0xf]
    %v2135 = vld [vmem:[%s2128 + $0x18] sm:$0xf]
    %v2136 = vld [vmem:[%s2128 + $0x1c] sm:$0xf]
    %v2137 = vld [vmem:[%s2128 + $0x20] sm:$0xf]
    %v2138 = vld [vmem:[%s2128 + $0x24] sm:$0xf]
    %v2139 = vld [vmem:[%s2128 + $0x28] sm:$0xf]
    %v2140 = vld [vmem:[%s2128 + $0x2c] sm:$0xf]
    %v2141 = vld [vmem:[%s2128 + $0x30] sm:$0xf]
    %v2142 = vld [vmem:[%s2128 + $0x34] sm:$0xf]
    %v2143 = vld [vmem:[%s2128 + $0x38] sm:$0xf]
    %v2144 = vld [vmem:[%s2128 + $0x3c] sm:$0xf]
    %v2161 = vunpack.c.l.b16 %v2129
    %v2162 = vunpack.c.l.b16 %v2130
    %v2163 = vunpack.c.l.b16 %v2131
    %v2164 = vunpack.c.l.b16 %v2132
    %v2165 = vunpack.c.l.b16 %v2133
    %v2166 = vunpack.c.l.b16 %v2134
    %v2167 = vunpack.c.l.b16 %v2135
    %v2168 = vunpack.c.l.b16 %v2136
    %v2169 = vunpack.c.l.b16 %v2137
    %v2170 = vunpack.c.l.b16 %v2138
    %v2171 = vunpack.c.l.b16 %v2139
    %v2172 = vunpack.c.l.b16 %v2140
    %v2173 = vunpack.c.l.b16 %v2141
    %v2174 = vunpack.c.l.b16 %v2142
    %v2175 = vunpack.c.l.b16 %v2143
    %v2176 = vunpack.c.l.b16 %v2144
    %v2177 = vpack.c.b16 %v2162, %v2161
    %v2178 = vpack.c.b16 %v2164, %v2163
    %v2179 = vpack.c.b16 %v2166, %v2165
    %v2180 = vpack.c.b16 %v2168, %v2167
    %v2181 = vpack.c.b16 %v2170, %v2169
    %v2182 = vpack.c.b16 %v2172, %v2171
    %v2183 = vpack.c.b16 %v2174, %v2173
    %v2184 = vpack.c.b16 %v2176, %v2175
    %2193 = vmatpush.bf16.msra.mxu0 %v2184
    %2194 = vmatpush.bf16.msra.mxu0 %v2183
    %2195 = vmatpush.bf16.msra.mxu0 %v2182
    %2196 = vmatpush.bf16.msra.mxu0 %v2181
    %2197 = vmatpush.bf16.msra.mxu0 %v2180
    %2198 = vmatpush.bf16.msra.mxu0 %v2179
    %2199 = vmatpush.bf16.msra.mxu0 %v2178
    %2200 = vmatpush.bf16.msra.mxu0 %v2177
    %2201 = vmatmul.bf16.gmra.mxu0 %v2126
    %v2202 = vpop.f32.mrf.mxu0
    %v2203 = vadd.f32 0.0, %v2202
    %v2204 = vpop.f32.mrf.mxu0
    %v2205 = vadd.f32 0.0, %v2204
    %2206 = vmatmul.bf16.gmra.mxu0 %v2127
    %v2207 = vpop.f32.mrf.mxu0
    %v2208 = vadd.f32 0.0, %v2207
    %v2209 = vpop.f32.mrf.mxu0
    %v2210 = vadd.f32 0.0, %v2209
    %2211 = vdwg.mxu0
    %v2212 = vadd.f32 %v2103, %v2203
    %v2213 = vadd.f32 %v2104, %v2205
    %v2214 = vadd.f32 %v2105, %v2208
    %v2215 = vadd.f32 %v2106, %v2210
    %v2216 = vld [vmem:[%s27] sm:$0x1]
    %v2218 = vperm.slane %v2216, 0
    %v2220 = vadd.f32 %v2212, %v2218
    %v2221 = vadd.f32 %v2213, %v2218
    %v2222 = vadd.f32 %v2214, %v2218
    %v2223 = vadd.f32 %v2215, %v2218
    %v2224 = vmul.f32 %v2220, 2.0
    %v2225 = vmul.f32 %v2221, 2.0
    %v2226 = vmul.f32 %v2222, 2.0
    %v2227 = vmul.f32 %v2223, 2.0
    %v2228 = vmul.f32 %v1781, 0.3
    %v2229 = vmul.f32 %v1782, 0.3
    %v2230 = vmul.f32 %v1783, 0.3
    %v2231 = vmul.f32 %v1784, 0.3
    %v2232 = vadd.f32 %v2224, %v2228
    %v2233 = vadd.f32 %v2225, %v2229
    %v2234 = vadd.f32 %v2226, %v2230
    %v2235 = vadd.f32 %v2227, %v2231
    %v2236 = vmax.f32 %v2232, 0.0
    %v2237 = vmax.f32 %v2233, 0.0
    %v2238 = vmax.f32 %v2234, 0.0
    %v2239 = vmax.f32 %v2235, 0.0
    %v2240 = vpack.c.bf16 %v2237, %v2236
    %v2241 = vpack.c.bf16 %v2239, %v2238
    %v2242 = vld [vmem:[#allocation19] sm:$0xf]
    %v2243 = vld [vmem:[#allocation19 + $0x4] sm:$0xf]
    %v2244 = vld [vmem:[#allocation19 + $0x8] sm:$0xf]
    %v2245 = vld [vmem:[#allocation19 + $0xc] sm:$0xf]
    %v2246 = vld [vmem:[#allocation19 + $0x10] sm:$0xf]
    %v2247 = vld [vmem:[#allocation19 + $0x14] sm:$0xf]
    %v2248 = vld [vmem:[#allocation19 + $0x18] sm:$0xf]
    %v2249 = vld [vmem:[#allocation19 + $0x1c] sm:$0xf]
    %v2250 = vld [vmem:[#allocation19 + $0x20] sm:$0xf]
    %v2251 = vld [vmem:[#allocation19 + $0x24] sm:$0xf]
    %v2252 = vld [vmem:[#allocation19 + $0x28] sm:$0xf]
    %v2253 = vld [vmem:[#allocation19 + $0x2c] sm:$0xf]
    %v2254 = vld [vmem:[#allocation19 + $0x30] sm:$0xf]
    %v2255 = vld [vmem:[#allocation19 + $0x34] sm:$0xf]
    %v2256 = vld [vmem:[#allocation19 + $0x38] sm:$0xf]
    %v2257 = vld [vmem:[#allocation19 + $0x3c] sm:$0xf]
    %v2258 = vld [vmem:[%s31] sm:$0x1]
    %v2260 = vperm.slane %v2258, 0
    %v2278 = vunpack.c.l.b16 %v2242
    %v2279 = vunpack.c.l.b16 %v2243
    %v2280 = vunpack.c.l.b16 %v2244
    %v2281 = vunpack.c.l.b16 %v2245
    %v2282 = vunpack.c.l.b16 %v2246
    %v2283 = vunpack.c.l.b16 %v2247
    %v2284 = vunpack.c.l.b16 %v2248
    %v2285 = vunpack.c.l.b16 %v2249
    %v2286 = vunpack.c.l.b16 %v2250
    %v2287 = vunpack.c.l.b16 %v2251
    %v2288 = vunpack.c.l.b16 %v2252
    %v2289 = vunpack.c.l.b16 %v2253
    %v2290 = vunpack.c.l.b16 %v2254
    %v2291 = vunpack.c.l.b16 %v2255
    %v2292 = vunpack.c.l.b16 %v2256
    %v2293 = vunpack.c.l.b16 %v2257
    %v2294 = vpack.c.b16 %v2279, %v2278
    %v2295 = vpack.c.b16 %v2281, %v2280
    %v2296 = vpack.c.b16 %v2283, %v2282
    %v2297 = vpack.c.b16 %v2285, %v2284
    %v2298 = vpack.c.b16 %v2287, %v2286
    %v2299 = vpack.c.b16 %v2289, %v2288
    %v2300 = vpack.c.b16 %v2291, %v2290
    %v2301 = vpack.c.b16 %v2293, %v2292
    %2310 = vmatpush.bf16.msra.mxu0 %v2301
    %2311 = vmatpush.bf16.msra.mxu0 %v2300
    %2312 = vmatpush.bf16.msra.mxu0 %v2299
    %2313 = vmatpush.bf16.msra.mxu0 %v2298
    %2314 = vmatpush.bf16.msra.mxu0 %v2297
    %2315 = vmatpush.bf16.msra.mxu0 %v2296
    %2316 = vmatpush.bf16.msra.mxu0 %v2295
    %2317 = vmatpush.bf16.msra.mxu0 %v2294
    %2318 = vmatmul.bf16.gmra.mxu0 %v2240
    %v2319 = vpop.f32.mrf.mxu0
    %v2320 = vadd.f32 %v2260, %v2319
    %v2321 = vpop.f32.mrf.mxu0
    %v2322 = vadd.f32 %v2260, %v2321
    %2323 = vmatmul.bf16.gmra.mxu0 %v2241
    %v2324 = vpop.f32.mrf.mxu0
    %v2325 = vadd.f32 %v2260, %v2324
    %v2326 = vpop.f32.mrf.mxu0
    %v2327 = vadd.f32 %v2260, %v2326
    %2328 = vdwg.mxu0
    %v2329 = vmax.f32 %v2320, 0.0
    %v2330 = vmax.f32 %v2322, 0.0
    %v2331 = vmax.f32 %v2325, 0.0
    %v2332 = vmax.f32 %v2327, 0.0
    %v2333 = vpack.c.bf16 %v2330, %v2329
    %v2334 = vpack.c.bf16 %v2332, %v2331
    %v2335 = vld [vmem:[#allocation8] sm:$0xf]
    %v2336 = vld [vmem:[#allocation8 + $0x4] sm:$0xf]
    %v2339 = vunpack.c.l.b16 %v2335
    %v2340 = vunpack.c.l.b16 %v2336
    %v2341 = vpack.c.b16 %v2340, %v2339
    %vm2342 = vcmask 261120
    %v2344 = vsel %vm2342, %v2341, 0
    %2346 = vmatpush.bf16.msra.mxu0 0
    %2347 = vmatpush.bf16.msra.mxu0 0
    %2348 = vmatpush.bf16.msra.mxu0 0
    %2349 = vmatpush.bf16.msra.mxu0 0
    %2350 = vmatpush.bf16.msra.mxu0 0
    %2351 = vmatpush.bf16.msra.mxu0 0
    %2352 = vmatpush.bf16.msra.mxu0 %v2334
    %2353 = vmatpush.bf16.msra.mxu0 %v2333
    %2354 = vmatmul.bf16.gmra.mxu0 %v2344
    %v2355 = vpop.f32.mrf.mxu0
    %v2356 = vadd.f32 0.0, %v2355
    %v2357 = vpop.f32.mrf.mxu0
    %v2358 = vadd.f32 0.0, %v2357
    %2359 = vdwg.mxu0
    %v2360 = vpack.c.bf16 %v2358, %v2356
    %v2361 = vld [vmem:[#allocation20] sm:$0xf]
    %v2362 = vld [vmem:[#allocation20 + $0x4] sm:$0xf]
    %v2363 = vld [vmem:[#allocation20 + $0x8] sm:$0xf]
    %v2364 = vld [vmem:[#allocation20 + $0xc] sm:$0xf]
    %v2365 = vld [vmem:[#allocation20 + $0x10] sm:$0xf]
    %v2366 = vld [vmem:[#allocation20 + $0x14] sm:$0xf]
    %v2367 = vld [vmem:[#allocation20 + $0x18] sm:$0xf]
    %v2368 = vld [vmem:[#allocation20 + $0x1c] sm:$0xf]
    %v2369 = vld [vmem:[#allocation20 + $0x20] sm:$0xf]
    %v2370 = vld [vmem:[#allocation20 + $0x24] sm:$0xf]
    %v2371 = vld [vmem:[#allocation20 + $0x28] sm:$0xf]
    %v2372 = vld [vmem:[#allocation20 + $0x2c] sm:$0xf]
    %v2373 = vld [vmem:[#allocation20 + $0x30] sm:$0xf]
    %v2374 = vld [vmem:[#allocation20 + $0x34] sm:$0xf]
    %v2375 = vld [vmem:[#allocation20 + $0x38] sm:$0xf]
    %v2376 = vld [vmem:[#allocation20 + $0x3c] sm:$0xf]
    %s2377 = scalar_lea.vmem [#allocation8], 8
    %v2378 = vld [vmem:[%s2377] sm:$0xf]
    %v2379 = vld [vmem:[%s2377 + $0x4] sm:$0xf]
    %v2382 = vunpack.c.l.b16 %v2378
    %v2383 = vunpack.c.l.b16 %v2379
    %v2384 = vpack.c.b16 %v2383, %v2382
    %v2386 = vsel %vm2342, %v2384, 0
    %2388 = vmatpush.bf16.msra.mxu0 0
    %2389 = vmatpush.bf16.msra.mxu0 0
    %2390 = vmatpush.bf16.msra.mxu0 0
    %2391 = vmatpush.bf16.msra.mxu0 0
    %2392 = vmatpush.bf16.msra.mxu0 0
    %2393 = vmatpush.bf16.msra.mxu0 0
    %2394 = vmatpush.bf16.msra.mxu0 %v2334
    %2395 = vmatpush.bf16.msra.mxu0 %v2333
    %2396 = vmatmul.bf16.gmra.mxu0 %v2386
    %v2397 = vpop.f32.mrf.mxu0
    %v2398 = vadd.f32 0.0, %v2397
    %v2399 = vpop.f32.mrf.mxu0
    %v2400 = vadd.f32 0.0, %v2399
    %2401 = vdwg.mxu0
    %v2402 = vpack.c.bf16 %v2400, %v2398
    %s2403 = scalar_lea.vmem [#allocation20], 64
    %v2404 = vld [vmem:[%s2403] sm:$0xf]
    %v2405 = vld [vmem:[%s2403 + $0x4] sm:$0xf]
    %v2406 = vld [vmem:[%s2403 + $0x8] sm:$0xf]
    %v2407 = vld [vmem:[%s2403 + $0xc] sm:$0xf]
    %v2408 = vld [vmem:[%s2403 + $0x10] sm:$0xf]
    %v2409 = vld [vmem:[%s2403 + $0x14] sm:$0xf]
    %v2410 = vld [vmem:[%s2403 + $0x18] sm:$0xf]
    %v2411 = vld [vmem:[%s2403 + $0x1c] sm:$0xf]
    %v2412 = vld [vmem:[%s2403 + $0x20] sm:$0xf]
    %v2413 = vld [vmem:[%s2403 + $0x24] sm:$0xf]
    %v2414 = vld [vmem:[%s2403 + $0x28] sm:$0xf]
    %v2415 = vld [vmem:[%s2403 + $0x2c] sm:$0xf]
    %v2416 = vld [vmem:[%s2403 + $0x30] sm:$0xf]
    %v2417 = vld [vmem:[%s2403 + $0x34] sm:$0xf]
    %v2418 = vld [vmem:[%s2403 + $0x38] sm:$0xf]
    %v2419 = vld [vmem:[%s2403 + $0x3c] sm:$0xf]
    %v2436 = vunpack.c.l.b16 %v2404
    %v2437 = vunpack.c.l.b16 %v2405
    %v2438 = vunpack.c.l.b16 %v2406
    %v2439 = vunpack.c.l.b16 %v2407
    %v2440 = vunpack.c.l.b16 %v2408
    %v2441 = vunpack.c.l.b16 %v2409
    %v2442 = vunpack.c.l.b16 %v2410
    %v2443 = vunpack.c.l.b16 %v2411
    %v2444 = vunpack.c.l.b16 %v2412
    %v2445 = vunpack.c.l.b16 %v2413
    %v2446 = vunpack.c.l.b16 %v2414
    %v2447 = vunpack.c.l.b16 %v2415
    %v2448 = vunpack.c.l.b16 %v2416
    %v2449 = vunpack.c.l.b16 %v2417
    %v2450 = vunpack.c.l.b16 %v2418
    %v2451 = vunpack.c.l.b16 %v2419
    %v2452 = vpack.c.b16 %v2437, %v2436
    %v2453 = vpack.c.b16 %v2439, %v2438
    %v2454 = vpack.c.b16 %v2441, %v2440
    %v2455 = vpack.c.b16 %v2443, %v2442
    %v2456 = vpack.c.b16 %v2445, %v2444
    %v2457 = vpack.c.b16 %v2447, %v2446
    %v2458 = vpack.c.b16 %v2449, %v2448
    %v2459 = vpack.c.b16 %v2451, %v2450
    %2468 = vmatpush.bf16.msra.mxu0 %v2459
    %2469 = vmatpush.bf16.msra.mxu0 %v2458
    %2470 = vmatpush.bf16.msra.mxu0 %v2457
    %2471 = vmatpush.bf16.msra.mxu0 %v2456
    %2472 = vmatpush.bf16.msra.mxu0 %v2455
    %2473 = vmatpush.bf16.msra.mxu0 %v2454
    %2474 = vmatpush.bf16.msra.mxu0 %v2453
    %2475 = vmatpush.bf16.msra.mxu0 %v2452
    %2476 = vmatmul.bf16.gmra.mxu0 %v2402
    %v2477 = vpop.f32.mrf.mxu0
    %v2478 = vadd.f32 0.0, %v2477
    %v2479 = vpop.f32.mrf.mxu0
    %v2480 = vadd.f32 0.0, %v2479
    %2481 = vdwg.mxu0
    %v2498 = vunpack.c.l.b16 %v2361
    %v2499 = vunpack.c.l.b16 %v2362
    %v2500 = vunpack.c.l.b16 %v2363
    %v2501 = vunpack.c.l.b16 %v2364
    %v2502 = vunpack.c.l.b16 %v2365
    %v2503 = vunpack.c.l.b16 %v2366
    %v2504 = vunpack.c.l.b16 %v2367
    %v2505 = vunpack.c.l.b16 %v2368
    %v2506 = vunpack.c.l.b16 %v2369
    %v2507 = vunpack.c.l.b16 %v2370
    %v2508 = vunpack.c.l.b16 %v2371
    %v2509 = vunpack.c.l.b16 %v2372
    %v2510 = vunpack.c.l.b16 %v2373
    %v2511 = vunpack.c.l.b16 %v2374
    %v2512 = vunpack.c.l.b16 %v2375
    %v2513 = vunpack.c.l.b16 %v2376
    %v2514 = vpack.c.b16 %v2499, %v2498
    %v2515 = vpack.c.b16 %v2501, %v2500
    %v2516 = vpack.c.b16 %v2503, %v2502
    %v2517 = vpack.c.b16 %v2505, %v2504
    %v2518 = vpack.c.b16 %v2507, %v2506
    %v2519 = vpack.c.b16 %v2509, %v2508
    %v2520 = vpack.c.b16 %v2511, %v2510
    %v2521 = vpack.c.b16 %v2513, %v2512
    %2530 = vmatpush.bf16.msra.mxu0 %v2521
    %2531 = vmatpush.bf16.msra.mxu0 %v2520
    %2532 = vmatpush.bf16.msra.mxu0 %v2519
    %2533 = vmatpush.bf16.msra.mxu0 %v2518
    %2534 = vmatpush.bf16.msra.mxu0 %v2517
    %2535 = vmatpush.bf16.msra.mxu0 %v2516
    %2536 = vmatpush.bf16.msra.mxu0 %v2515
    %2537 = vmatpush.bf16.msra.mxu0 %v2514
    %2538 = vmatmul.bf16.gmra.mxu0 %v2360
    %v2539 = vpop.f32.mrf.mxu0
    %v2540 = vadd.f32 %v2478, %v2539
    %v2541 = vpop.f32.mrf.mxu0
    %v2542 = vadd.f32 %v2480, %v2541
    %2543 = vdwg.mxu0
    %s2544 = scalar_lea.vmem [#allocation8], 16
    %v2545 = vld [vmem:[%s2544] sm:$0xf]
    %v2546 = vld [vmem:[%s2544 + $0x4] sm:$0xf]
    %v2549 = vunpack.c.l.b16 %v2545
    %v2550 = vunpack.c.l.b16 %v2546
    %v2551 = vpack.c.b16 %v2550, %v2549
    %v2553 = vsel %vm2342, %v2551, 0
    %2555 = vmatpush.bf16.msra.mxu0 0
    %2556 = vmatpush.bf16.msra.mxu0 0
    %2557 = vmatpush.bf16.msra.mxu0 0
    %2558 = vmatpush.bf16.msra.mxu0 0
    %2559 = vmatpush.bf16.msra.mxu0 0
    %2560 = vmatpush.bf16.msra.mxu0 0
    %2561 = vmatpush.bf16.msra.mxu0 %v2334
    %2562 = vmatpush.bf16.msra.mxu0 %v2333
    %2563 = vmatmul.bf16.gmra.mxu0 %v2553
    %v2564 = vpop.f32.mrf.mxu0
    %v2565 = vadd.f32 0.0, %v2564
    %v2566 = vpop.f32.mrf.mxu0
    %v2567 = vadd.f32 0.0, %v2566
    %2568 = vdwg.mxu0
    %v2569 = vpack.c.bf16 %v2567, %v2565
    %s2570 = scalar_lea.vmem [#allocation20], 128
    %v2571 = vld [vmem:[%s2570] sm:$0xf]
    %v2572 = vld [vmem:[%s2570 + $0x4] sm:$0xf]
    %v2573 = vld [vmem:[%s2570 + $0x8] sm:$0xf]
    %v2574 = vld [vmem:[%s2570 + $0xc] sm:$0xf]
    %v2575 = vld [vmem:[%s2570 + $0x10] sm:$0xf]
    %v2576 = vld [vmem:[%s2570 + $0x14] sm:$0xf]
    %v2577 = vld [vmem:[%s2570 + $0x18] sm:$0xf]
    %v2578 = vld [vmem:[%s2570 + $0x1c] sm:$0xf]
    %v2579 = vld [vmem:[%s2570 + $0x20] sm:$0xf]
    %v2580 = vld [vmem:[%s2570 + $0x24] sm:$0xf]
    %v2581 = vld [vmem:[%s2570 + $0x28] sm:$0xf]
    %v2582 = vld [vmem:[%s2570 + $0x2c] sm:$0xf]
    %v2583 = vld [vmem:[%s2570 + $0x30] sm:$0xf]
    %v2584 = vld [vmem:[%s2570 + $0x34] sm:$0xf]
    %v2585 = vld [vmem:[%s2570 + $0x38] sm:$0xf]
    %v2586 = vld [vmem:[%s2570 + $0x3c] sm:$0xf]
    %v2603 = vunpack.c.l.b16 %v2571
    %v2604 = vunpack.c.l.b16 %v2572
    %v2605 = vunpack.c.l.b16 %v2573
    %v2606 = vunpack.c.l.b16 %v2574
    %v2607 = vunpack.c.l.b16 %v2575
    %v2608 = vunpack.c.l.b16 %v2576
    %v2609 = vunpack.c.l.b16 %v2577
    %v2610 = vunpack.c.l.b16 %v2578
    %v2611 = vunpack.c.l.b16 %v2579
    %v2612 = vunpack.c.l.b16 %v2580
    %v2613 = vunpack.c.l.b16 %v2581
    %v2614 = vunpack.c.l.b16 %v2582
    %v2615 = vunpack.c.l.b16 %v2583
    %v2616 = vunpack.c.l.b16 %v2584
    %v2617 = vunpack.c.l.b16 %v2585
    %v2618 = vunpack.c.l.b16 %v2586
    %v2619 = vpack.c.b16 %v2604, %v2603
    %v2620 = vpack.c.b16 %v2606, %v2605
    %v2621 = vpack.c.b16 %v2608, %v2607
    %v2622 = vpack.c.b16 %v2610, %v2609
    %v2623 = vpack.c.b16 %v2612, %v2611
    %v2624 = vpack.c.b16 %v2614, %v2613
    %v2625 = vpack.c.b16 %v2616, %v2615
    %v2626 = vpack.c.b16 %v2618, %v2617
    %2635 = vmatpush.bf16.msra.mxu0 %v2626
    %2636 = vmatpush.bf16.msra.mxu0 %v2625
    %2637 = vmatpush.bf16.msra.mxu0 %v2624
    %2638 = vmatpush.bf16.msra.mxu0 %v2623
    %2639 = vmatpush.bf16.msra.mxu0 %v2622
    %2640 = vmatpush.bf16.msra.mxu0 %v2621
    %2641 = vmatpush.bf16.msra.mxu0 %v2620
    %2642 = vmatpush.bf16.msra.mxu0 %v2619
    %2643 = vmatmul.bf16.gmra.mxu0 %v2569
    %v2644 = vpop.f32.mrf.mxu0
    %v2645 = vadd.f32 0.0, %v2644
    %v2646 = vpop.f32.mrf.mxu0
    %v2647 = vadd.f32 0.0, %v2646
    %2648 = vdwg.mxu0
    %v2649 = vadd.f32 %v2540, %v2645
    %v2650 = vadd.f32 %v2542, %v2647
    %s2651 = scalar_lea.vmem [#allocation8], 24
    %v2652 = vld [vmem:[%s2651] sm:$0xf]
    %v2653 = vld [vmem:[%s2651 + $0x4] sm:$0xf]
    %v2656 = vunpack.c.l.b16 %v2652
    %v2657 = vunpack.c.l.b16 %v2653
    %v2658 = vpack.c.b16 %v2657, %v2656
    %v2660 = vsel %vm2342, %v2658, 0
    %2662 = vmatpush.bf16.msra.mxu0 0
    %2663 = vmatpush.bf16.msra.mxu0 0
    %2664 = vmatpush.bf16.msra.mxu0 0
    %2665 = vmatpush.bf16.msra.mxu0 0
    %2666 = vmatpush.bf16.msra.mxu0 0
    %2667 = vmatpush.bf16.msra.mxu0 0
    %2668 = vmatpush.bf16.msra.mxu0 %v2334
    %2669 = vmatpush.bf16.msra.mxu0 %v2333
    %2670 = vmatmul.bf16.gmra.mxu0 %v2660
    %v2671 = vpop.f32.mrf.mxu0
    %v2672 = vadd.f32 0.0, %v2671
    %v2673 = vpop.f32.mrf.mxu0
    %v2674 = vadd.f32 0.0, %v2673
    %2675 = vdwg.mxu0
    %v2676 = vpack.c.bf16 %v2674, %v2672
    %s2677 = scalar_lea.vmem [#allocation20], 192
    %v2678 = vld [vmem:[%s2677] sm:$0xf]
    %v2679 = vld [vmem:[%s2677 + $0x4] sm:$0xf]
    %v2680 = vld [vmem:[%s2677 + $0x8] sm:$0xf]
    %v2681 = vld [vmem:[%s2677 + $0xc] sm:$0xf]
    %v2682 = vld [vmem:[%s2677 + $0x10] sm:$0xf]
    %v2683 = vld [vmem:[%s2677 + $0x14] sm:$0xf]
    %v2684 = vld [vmem:[%s2677 + $0x18] sm:$0xf]
    %v2685 = vld [vmem:[%s2677 + $0x1c] sm:$0xf]
    %v2686 = vld [vmem:[%s2677 + $0x20] sm:$0xf]
    %v2687 = vld [vmem:[%s2677 + $0x24] sm:$0xf]
    %v2688 = vld [vmem:[%s2677 + $0x28] sm:$0xf]
    %v2689 = vld [vmem:[%s2677 + $0x2c] sm:$0xf]
    %v2690 = vld [vmem:[%s2677 + $0x30] sm:$0xf]
    %v2691 = vld [vmem:[%s2677 + $0x34] sm:$0xf]
    %v2692 = vld [vmem:[%s2677 + $0x38] sm:$0xf]
    %v2693 = vld [vmem:[%s2677 + $0x3c] sm:$0xf]
    %v2710 = vunpack.c.l.b16 %v2678
    %v2711 = vunpack.c.l.b16 %v2679
    %v2712 = vunpack.c.l.b16 %v2680
    %v2713 = vunpack.c.l.b16 %v2681
    %v2714 = vunpack.c.l.b16 %v2682
    %v2715 = vunpack.c.l.b16 %v2683
    %v2716 = vunpack.c.l.b16 %v2684
    %v2717 = vunpack.c.l.b16 %v2685
    %v2718 = vunpack.c.l.b16 %v2686
    %v2719 = vunpack.c.l.b16 %v2687
    %v2720 = vunpack.c.l.b16 %v2688
    %v2721 = vunpack.c.l.b16 %v2689
    %v2722 = vunpack.c.l.b16 %v2690
    %v2723 = vunpack.c.l.b16 %v2691
    %v2724 = vunpack.c.l.b16 %v2692
    %v2725 = vunpack.c.l.b16 %v2693
    %v2726 = vpack.c.b16 %v2711, %v2710
    %v2727 = vpack.c.b16 %v2713, %v2712
    %v2728 = vpack.c.b16 %v2715, %v2714
    %v2729 = vpack.c.b16 %v2717, %v2716
    %v2730 = vpack.c.b16 %v2719, %v2718
    %v2731 = vpack.c.b16 %v2721, %v2720
    %v2732 = vpack.c.b16 %v2723, %v2722
    %v2733 = vpack.c.b16 %v2725, %v2724
    %2742 = vmatpush.bf16.msra.mxu0 %v2733
    %2743 = vmatpush.bf16.msra.mxu0 %v2732
    %2744 = vmatpush.bf16.msra.mxu0 %v2731
    %2745 = vmatpush.bf16.msra.mxu0 %v2730
    %2746 = vmatpush.bf16.msra.mxu0 %v2729
    %2747 = vmatpush.bf16.msra.mxu0 %v2728
    %2748 = vmatpush.bf16.msra.mxu0 %v2727
    %2749 = vmatpush.bf16.msra.mxu0 %v2726
    %2750 = vmatmul.bf16.gmra.mxu0 %v2676
    %v2751 = vpop.f32.mrf.mxu0
    %v2752 = vadd.f32 0.0, %v2751
    %v2753 = vpop.f32.mrf.mxu0
    %v2754 = vadd.f32 0.0, %v2753
    %2755 = vdwg.mxu0
    %v2756 = vadd.f32 %v2649, %v2752
    %v2757 = vadd.f32 %v2650, %v2754
    %v2758 = vld [vmem:[%s35] sm:$0x1]
    %v2760 = vperm.slane %v2758, 0
    %v2762 = vadd.f32 %v2756, %v2760
    %v2763 = vadd.f32 %v2757, %v2760
    %v2764 = vpack.c.bf16 %v2233, %v2232
    %v2765 = vpack.c.bf16 %v2235, %v2234
    %2766 = vmatpush.bf16.msra.mxu0 0
    %2767 = vmatpush.bf16.msra.mxu0 0
    %2768 = vmatpush.bf16.msra.mxu0 0
    %2769 = vmatpush.bf16.msra.mxu0 0
    %2770 = vmatpush.bf16.msra.mxu0 0
    %2771 = vmatpush.bf16.msra.mxu0 0
    %2772 = vmatpush.bf16.msra.mxu0 %v2765
    %2773 = vmatpush.bf16.msra.mxu0 %v2764
    %2774 = vmatmul.bf16.gmra.mxu0 %v2344
    %v2775 = vpop.f32.mrf.mxu0
    %v2776 = vadd.f32 0.0, %v2775
    %v2777 = vpop.f32.mrf.mxu0
    %v2778 = vadd.f32 0.0, %v2777
    %2779 = vdwg.mxu0
    %v2780 = vpack.c.bf16 %v2778, %v2776
    %v2781 = vld [vmem:[#allocation22] sm:$0xf]
    %v2782 = vld [vmem:[#allocation22 + $0x4] sm:$0xf]
    %v2783 = vld [vmem:[#allocation22 + $0x8] sm:$0xf]
    %v2784 = vld [vmem:[#allocation22 + $0xc] sm:$0xf]
    %v2785 = vld [vmem:[#allocation22 + $0x10] sm:$0xf]
    %v2786 = vld [vmem:[#allocation22 + $0x14] sm:$0xf]
    %v2787 = vld [vmem:[#allocation22 + $0x18] sm:$0xf]
    %v2788 = vld [vmem:[#allocation22 + $0x1c] sm:$0xf]
    %v2789 = vld [vmem:[#allocation22 + $0x20] sm:$0xf]
    %v2790 = vld [vmem:[#allocation22 + $0x24] sm:$0xf]
    %v2791 = vld [vmem:[#allocation22 + $0x28] sm:$0xf]
    %v2792 = vld [vmem:[#allocation22 + $0x2c] sm:$0xf]
    %v2793 = vld [vmem:[#allocation22 + $0x30] sm:$0xf]
    %v2794 = vld [vmem:[#allocation22 + $0x34] sm:$0xf]
    %v2795 = vld [vmem:[#allocation22 + $0x38] sm:$0xf]
    %v2796 = vld [vmem:[#allocation22 + $0x3c] sm:$0xf]
    %2797 = vmatpush.bf16.msra.mxu0 0
    %2798 = vmatpush.bf16.msra.mxu0 0
    %2799 = vmatpush.bf16.msra.mxu0 0
    %2800 = vmatpush.bf16.msra.mxu0 0
    %2801 = vmatpush.bf16.msra.mxu0 0
    %2802 = vmatpush.bf16.msra.mxu0 0
    %2803 = vmatpush.bf16.msra.mxu0 %v2765
    %2804 = vmatpush.bf16.msra.mxu0 %v2764
    %2805 = vmatmul.bf16.gmra.mxu0 %v2386
    %v2806 = vpop.f32.mrf.mxu0
    %v2807 = vadd.f32 0.0, %v2806
    %v2808 = vpop.f32.mrf.mxu0
    %v2809 = vadd.f32 0.0, %v2808
    %2810 = vdwg.mxu0
    %v2811 = vpack.c.bf16 %v2809, %v2807
    %s2812 = scalar_lea.vmem [#allocation22], 64
    %v2813 = vld [vmem:[%s2812] sm:$0xf]
    %v2814 = vld [vmem:[%s2812 + $0x4] sm:$0xf]
    %v2815 = vld [vmem:[%s2812 + $0x8] sm:$0xf]
    %v2816 = vld [vmem:[%s2812 + $0xc] sm:$0xf]
    %v2817 = vld [vmem:[%s2812 + $0x10] sm:$0xf]
    %v2818 = vld [vmem:[%s2812 + $0x14] sm:$0xf]
    %v2819 = vld [vmem:[%s2812 + $0x18] sm:$0xf]
    %v2820 = vld [vmem:[%s2812 + $0x1c] sm:$0xf]
    %v2821 = vld [vmem:[%s2812 + $0x20] sm:$0xf]
    %v2822 = vld [vmem:[%s2812 + $0x24] sm:$0xf]
    %v2823 = vld [vmem:[%s2812 + $0x28] sm:$0xf]
    %v2824 = vld [vmem:[%s2812 + $0x2c] sm:$0xf]
    %v2825 = vld [vmem:[%s2812 + $0x30] sm:$0xf]
    %v2826 = vld [vmem:[%s2812 + $0x34] sm:$0xf]
    %v2827 = vld [vmem:[%s2812 + $0x38] sm:$0xf]
    %v2828 = vld [vmem:[%s2812 + $0x3c] sm:$0xf]
    %v2845 = vunpack.c.l.b16 %v2813
    %v2846 = vunpack.c.l.b16 %v2814
    %v2847 = vunpack.c.l.b16 %v2815
    %v2848 = vunpack.c.l.b16 %v2816
    %v2849 = vunpack.c.l.b16 %v2817
    %v2850 = vunpack.c.l.b16 %v2818
    %v2851 = vunpack.c.l.b16 %v2819
    %v2852 = vunpack.c.l.b16 %v2820
    %v2853 = vunpack.c.l.b16 %v2821
    %v2854 = vunpack.c.l.b16 %v2822
    %v2855 = vunpack.c.l.b16 %v2823
    %v2856 = vunpack.c.l.b16 %v2824
    %v2857 = vunpack.c.l.b16 %v2825
    %v2858 = vunpack.c.l.b16 %v2826
    %v2859 = vunpack.c.l.b16 %v2827
    %v2860 = vunpack.c.l.b16 %v2828
    %v2861 = vpack.c.b16 %v2846, %v2845
    %v2862 = vpack.c.b16 %v2848, %v2847
    %v2863 = vpack.c.b16 %v2850, %v2849
    %v2864 = vpack.c.b16 %v2852, %v2851
    %v2865 = vpack.c.b16 %v2854, %v2853
    %v2866 = vpack.c.b16 %v2856, %v2855
    %v2867 = vpack.c.b16 %v2858, %v2857
    %v2868 = vpack.c.b16 %v2860, %v2859
    %2877 = vmatpush.bf16.msra.mxu0 %v2868
    %2878 = vmatpush.bf16.msra.mxu0 %v2867
    %2879 = vmatpush.bf16.msra.mxu0 %v2866
    %2880 = vmatpush.bf16.msra.mxu0 %v2865
    %2881 = vmatpush.bf16.msra.mxu0 %v2864
    %2882 = vmatpush.bf16.msra.mxu0 %v2863
    %2883 = vmatpush.bf16.msra.mxu0 %v2862
    %2884 = vmatpush.bf16.msra.mxu0 %v2861
    %2885 = vmatmul.bf16.gmra.mxu0 %v2811
    %v2886 = vpop.f32.mrf.mxu0
    %v2887 = vadd.f32 0.0, %v2886
    %v2888 = vpop.f32.mrf.mxu0
    %v2889 = vadd.f32 0.0, %v2888
    %2890 = vdwg.mxu0
    %v2907 = vunpack.c.l.b16 %v2781
    %v2908 = vunpack.c.l.b16 %v2782
    %v2909 = vunpack.c.l.b16 %v2783
    %v2910 = vunpack.c.l.b16 %v2784
    %v2911 = vunpack.c.l.b16 %v2785
    %v2912 = vunpack.c.l.b16 %v2786
    %v2913 = vunpack.c.l.b16 %v2787
    %v2914 = vunpack.c.l.b16 %v2788
    %v2915 = vunpack.c.l.b16 %v2789
    %v2916 = vunpack.c.l.b16 %v2790
    %v2917 = vunpack.c.l.b16 %v2791
    %v2918 = vunpack.c.l.b16 %v2792
    %v2919 = vunpack.c.l.b16 %v2793
    %v2920 = vunpack.c.l.b16 %v2794
    %v2921 = vunpack.c.l.b16 %v2795
    %v2922 = vunpack.c.l.b16 %v2796
    %v2923 = vpack.c.b16 %v2908, %v2907
    %v2924 = vpack.c.b16 %v2910, %v2909
    %v2925 = vpack.c.b16 %v2912, %v2911
    %v2926 = vpack.c.b16 %v2914, %v2913
    %v2927 = vpack.c.b16 %v2916, %v2915
    %v2928 = vpack.c.b16 %v2918, %v2917
    %v2929 = vpack.c.b16 %v2920, %v2919
    %v2930 = vpack.c.b16 %v2922, %v2921
    %2939 = vmatpush.bf16.msra.mxu0 %v2930
    %2940 = vmatpush.bf16.msra.mxu0 %v2929
    %2941 = vmatpush.bf16.msra.mxu0 %v2928
    %2942 = vmatpush.bf16.msra.mxu0 %v2927
    %2943 = vmatpush.bf16.msra.mxu0 %v2926
    %2944 = vmatpush.bf16.msra.mxu0 %v2925
    %2945 = vmatpush.bf16.msra.mxu0 %v2924
    %2946 = vmatpush.bf16.msra.mxu0 %v2923
    %2947 = vmatmul.bf16.gmra.mxu0 %v2780
    %v2948 = vpop.f32.mrf.mxu0
    %v2949 = vadd.f32 %v2887, %v2948
    %v2950 = vpop.f32.mrf.mxu0
    %v2951 = vadd.f32 %v2889, %v2950
    %2952 = vdwg.mxu0
    %2953 = vmatpush.bf16.msra.mxu0 0
    %2954 = vmatpush.bf16.msra.mxu0 0
    %2955 = vmatpush.bf16.msra.mxu0 0
    %2956 = vmatpush.bf16.msra.mxu0 0
    %2957 = vmatpush.bf16.msra.mxu0 0
    %2958 = vmatpush.bf16.msra.mxu0 0
    %2959 = vmatpush.bf16.msra.mxu0 %v2765
    %2960 = vmatpush.bf16.msra.mxu0 %v2764
    %2961 = vmatmul.bf16.gmra.mxu0 %v2553
    %v2962 = vpop.f32.mrf.mxu0
    %v2963 = vadd.f32 0.0, %v2962
    %v2964 = vpop.f32.mrf.mxu0
    %v2965 = vadd.f32 0.0, %v2964
    %2966 = vdwg.mxu0
    %v2967 = vpack.c.bf16 %v2965, %v2963
    %s2968 = scalar_lea.vmem [#allocation22], 128
    %v2969 = vld [vmem:[%s2968] sm:$0xf]
    %v2970 = vld [vmem:[%s2968 + $0x4] sm:$0xf]
    %v2971 = vld [vmem:[%s2968 + $0x8] sm:$0xf]
    %v2972 = vld [vmem:[%s2968 + $0xc] sm:$0xf]
    %v2973 = vld [vmem:[%s2968 + $0x10] sm:$0xf]
    %v2974 = vld [vmem:[%s2968 + $0x14] sm:$0xf]
    %v2975 = vld [vmem:[%s2968 + $0x18] sm:$0xf]
    %v2976 = vld [vmem:[%s2968 + $0x1c] sm:$0xf]
    %v2977 = vld [vmem:[%s2968 + $0x20] sm:$0xf]
    %v2978 = vld [vmem:[%s2968 + $0x24] sm:$0xf]
    %v2979 = vld [vmem:[%s2968 + $0x28] sm:$0xf]
    %v2980 = vld [vmem:[%s2968 + $0x2c] sm:$0xf]
    %v2981 = vld [vmem:[%s2968 + $0x30] sm:$0xf]
    %v2982 = vld [vmem:[%s2968 + $0x34] sm:$0xf]
    %v2983 = vld [vmem:[%s2968 + $0x38] sm:$0xf]
    %v2984 = vld [vmem:[%s2968 + $0x3c] sm:$0xf]
    %v3001 = vunpack.c.l.b16 %v2969
    %v3002 = vunpack.c.l.b16 %v2970
    %v3003 = vunpack.c.l.b16 %v2971
    %v3004 = vunpack.c.l.b16 %v2972
    %v3005 = vunpack.c.l.b16 %v2973
    %v3006 = vunpack.c.l.b16 %v2974
    %v3007 = vunpack.c.l.b16 %v2975
    %v3008 = vunpack.c.l.b16 %v2976
    %v3009 = vunpack.c.l.b16 %v2977
    %v3010 = vunpack.c.l.b16 %v2978
    %v3011 = vunpack.c.l.b16 %v2979
    %v3012 = vunpack.c.l.b16 %v2980
    %v3013 = vunpack.c.l.b16 %v2981
    %v3014 = vunpack.c.l.b16 %v2982
    %v3015 = vunpack.c.l.b16 %v2983
    %v3016 = vunpack.c.l.b16 %v2984
    %v3017 = vpack.c.b16 %v3002, %v3001
    %v3018 = vpack.c.b16 %v3004, %v3003
    %v3019 = vpack.c.b16 %v3006, %v3005
    %v3020 = vpack.c.b16 %v3008, %v3007
    %v3021 = vpack.c.b16 %v3010, %v3009
    %v3022 = vpack.c.b16 %v3012, %v3011
    %v3023 = vpack.c.b16 %v3014, %v3013
    %v3024 = vpack.c.b16 %v3016, %v3015
    %3033 = vmatpush.bf16.msra.mxu0 %v3024
    %3034 = vmatpush.bf16.msra.mxu0 %v3023
    %3035 = vmatpush.bf16.msra.mxu0 %v3022
    %3036 = vmatpush.bf16.msra.mxu0 %v3021
    %3037 = vmatpush.bf16.msra.mxu0 %v3020
    %3038 = vmatpush.bf16.msra.mxu0 %v3019
    %3039 = vmatpush.bf16.msra.mxu0 %v3018
    %3040 = vmatpush.bf16.msra.mxu0 %v3017
    %3041 = vmatmul.bf16.gmra.mxu0 %v2967
    %v3042 = vpop.f32.mrf.mxu0
    %v3043 = vadd.f32 0.0, %v3042
    %v3044 = vpop.f32.mrf.mxu0
    %v3045 = vadd.f32 0.0, %v3044
    %3046 = vdwg.mxu0
    %v3047 = vadd.f32 %v2949, %v3043
    %v3048 = vadd.f32 %v2951, %v3045
    %3049 = vmatpush.bf16.msra.mxu0 0
    %3050 = vmatpush.bf16.msra.mxu0 0
    %3051 = vmatpush.bf16.msra.mxu0 0
    %3052 = vmatpush.bf16.msra.mxu0 0
    %3053 = vmatpush.bf16.msra.mxu0 0
    %3054 = vmatpush.bf16.msra.mxu0 0
    %3055 = vmatpush.bf16.msra.mxu0 %v2765
    %3056 = vmatpush.bf16.msra.mxu0 %v2764
    %3057 = vmatmul.bf16.gmra.mxu0 %v2660
    %v3058 = vpop.f32.mrf.mxu0
    %v3059 = vadd.f32 0.0, %v3058
    %v3060 = vpop.f32.mrf.mxu0
    %v3061 = vadd.f32 0.0, %v3060
    %3062 = vdwg.mxu0
    %v3063 = vpack.c.bf16 %v3061, %v3059
    %s3064 = scalar_lea.vmem [#allocation22], 192
    %v3065 = vld [vmem:[%s3064] sm:$0xf]
    %v3066 = vld [vmem:[%s3064 + $0x4] sm:$0xf]
    %v3067 = vld [vmem:[%s3064 + $0x8] sm:$0xf]
    %v3068 = vld [vmem:[%s3064 + $0xc] sm:$0xf]
    %v3069 = vld [vmem:[%s3064 + $0x10] sm:$0xf]
    %v3070 = vld [vmem:[%s3064 + $0x14] sm:$0xf]
    %v3071 = vld [vmem:[%s3064 + $0x18] sm:$0xf]
    %v3072 = vld [vmem:[%s3064 + $0x1c] sm:$0xf]
    %v3073 = vld [vmem:[%s3064 + $0x20] sm:$0xf]
    %v3074 = vld [vmem:[%s3064 + $0x24] sm:$0xf]
    %v3075 = vld [vmem:[%s3064 + $0x28] sm:$0xf]
    %v3076 = vld [vmem:[%s3064 + $0x2c] sm:$0xf]
    %v3077 = vld [vmem:[%s3064 + $0x30] sm:$0xf]
    %v3078 = vld [vmem:[%s3064 + $0x34] sm:$0xf]
    %v3079 = vld [vmem:[%s3064 + $0x38] sm:$0xf]
    %v3080 = vld [vmem:[%s3064 + $0x3c] sm:$0xf]
    %v3097 = vunpack.c.l.b16 %v3065
    %v3098 = vunpack.c.l.b16 %v3066
    %v3099 = vunpack.c.l.b16 %v3067
    %v3100 = vunpack.c.l.b16 %v3068
    %v3101 = vunpack.c.l.b16 %v3069
    %v3102 = vunpack.c.l.b16 %v3070
    %v3103 = vunpack.c.l.b16 %v3071
    %v3104 = vunpack.c.l.b16 %v3072
    %v3105 = vunpack.c.l.b16 %v3073
    %v3106 = vunpack.c.l.b16 %v3074
    %v3107 = vunpack.c.l.b16 %v3075
    %v3108 = vunpack.c.l.b16 %v3076
    %v3109 = vunpack.c.l.b16 %v3077
    %v3110 = vunpack.c.l.b16 %v3078
    %v3111 = vunpack.c.l.b16 %v3079
    %v3112 = vunpack.c.l.b16 %v3080
    %v3113 = vpack.c.b16 %v3098, %v3097
    %v3114 = vpack.c.b16 %v3100, %v3099
    %v3115 = vpack.c.b16 %v3102, %v3101
    %v3116 = vpack.c.b16 %v3104, %v3103
    %v3117 = vpack.c.b16 %v3106, %v3105
    %v3118 = vpack.c.b16 %v3108, %v3107
    %v3119 = vpack.c.b16 %v3110, %v3109
    %v3120 = vpack.c.b16 %v3112, %v3111
    %3129 = vmatpush.bf16.msra.mxu0 %v3120
    %3130 = vmatpush.bf16.msra.mxu0 %v3119
    %3131 = vmatpush.bf16.msra.mxu0 %v3118
    %3132 = vmatpush.bf16.msra.mxu0 %v3117
    %3133 = vmatpush.bf16.msra.mxu0 %v3116
    %3134 = vmatpush.bf16.msra.mxu0 %v3115
    %3135 = vmatpush.bf16.msra.mxu0 %v3114
    %3136 = vmatpush.bf16.msra.mxu0 %v3113
    %3137 = vmatmul.bf16.gmra.mxu0 %v3063
    %v3138 = vpop.f32.mrf.mxu0
    %v3139 = vadd.f32 0.0, %v3138
    %v3140 = vpop.f32.mrf.mxu0
    %v3141 = vadd.f32 0.0, %v3140
    %3142 = vdwg.mxu0
    %v3143 = vadd.f32 %v3047, %v3139
    %v3144 = vadd.f32 %v3048, %v3141
    %v3145 = vld [vmem:[%s39] sm:$0x1]
    %v3147 = vperm.slane %v3145, 0
    %v3149 = vadd.f32 %v3143, %v3147
    %v3150 = vadd.f32 %v3144, %v3147
    %v3151 = vmul.f32 %v3149, 2.0
    %v3152 = vmul.f32 %v3150, 2.0
    %v3153 = vmul.f32 %v2762, 0.3
    %v3154 = vmul.f32 %v2763, 0.3
    %v3155 = vadd.f32 %v3151, %v3153
    %v3156 = vadd.f32 %v3152, %v3154
    %v3157 = vmax.f32 %v3155, 0.0
    %v3158 = vmax.f32 %v3156, 0.0
    %v3159 = vpack.c.bf16 %v3158, %v3157
    %v3160 = vld [vmem:[#allocation23] sm:$0xf]
    %v3161 = vld [vmem:[#allocation23 + $0x4] sm:$0xf]
    %v3162 = vld [vmem:[#allocation23 + $0x8] sm:$0xf]
    %v3163 = vld [vmem:[#allocation23 + $0xc] sm:$0xf]
    %v3164 = vld [vmem:[#allocation23 + $0x10] sm:$0xf]
    %v3165 = vld [vmem:[#allocation23 + $0x14] sm:$0xf]
    %v3166 = vld [vmem:[#allocation23 + $0x18] sm:$0xf]
    %v3167 = vld [vmem:[#allocation23 + $0x1c] sm:$0xf]
    %v3168 = vld [vmem:[#allocation23 + $0x20] sm:$0xf]
    %v3169 = vld [vmem:[#allocation23 + $0x24] sm:$0xf]
    %v3170 = vld [vmem:[#allocation23 + $0x28] sm:$0xf]
    %v3171 = vld [vmem:[#allocation23 + $0x2c] sm:$0xf]
    %v3172 = vld [vmem:[#allocation23 + $0x30] sm:$0xf]
    %v3173 = vld [vmem:[#allocation23 + $0x34] sm:$0xf]
    %v3174 = vld [vmem:[#allocation23 + $0x38] sm:$0xf]
    %v3175 = vld [vmem:[#allocation23 + $0x3c] sm:$0xf]
    %v3176 = vld [vmem:[%s43] sm:$0x1]
    %v3178 = vperm.slane %v3176, 0
    %v3196 = vunpack.c.l.b16 %v3160
    %v3197 = vunpack.c.l.b16 %v3161
    %v3198 = vunpack.c.l.b16 %v3162
    %v3199 = vunpack.c.l.b16 %v3163
    %v3200 = vunpack.c.l.b16 %v3164
    %v3201 = vunpack.c.l.b16 %v3165
    %v3202 = vunpack.c.l.b16 %v3166
    %v3203 = vunpack.c.l.b16 %v3167
    %v3204 = vunpack.c.l.b16 %v3168
    %v3205 = vunpack.c.l.b16 %v3169
    %v3206 = vunpack.c.l.b16 %v3170
    %v3207 = vunpack.c.l.b16 %v3171
    %v3208 = vunpack.c.l.b16 %v3172
    %v3209 = vunpack.c.l.b16 %v3173
    %v3210 = vunpack.c.l.b16 %v3174
    %v3211 = vunpack.c.l.b16 %v3175
    %v3212 = vpack.c.b16 %v3197, %v3196
    %v3213 = vpack.c.b16 %v3199, %v3198
    %v3214 = vpack.c.b16 %v3201, %v3200
    %v3215 = vpack.c.b16 %v3203, %v3202
    %v3216 = vpack.c.b16 %v3205, %v3204
    %v3217 = vpack.c.b16 %v3207, %v3206
    %v3218 = vpack.c.b16 %v3209, %v3208
    %v3219 = vpack.c.b16 %v3211, %v3210
    %3228 = vmatpush.bf16.msra.mxu0 %v3219
    %3229 = vmatpush.bf16.msra.mxu0 %v3218
    %3230 = vmatpush.bf16.msra.mxu0 %v3217
    %3231 = vmatpush.bf16.msra.mxu0 %v3216
    %3232 = vmatpush.bf16.msra.mxu0 %v3215
    %3233 = vmatpush.bf16.msra.mxu0 %v3214
    %3234 = vmatpush.bf16.msra.mxu0 %v3213
    %3235 = vmatpush.bf16.msra.mxu0 %v3212
    %3236 = vmatmul.bf16.gmra.mxu0 %v3159
    %v3237 = vpop.f32.mrf.mxu0
    %v3238 = vadd.f32 %v3178, %v3237
    %v3239 = vpop.f32.mrf.mxu0
    %v3240 = vadd.f32 %v3178, %v3239
    %3241 = vdwg.mxu0
    %v3242 = vmax.f32 %v3238, 0.0
    %v3243 = vmax.f32 %v3240, 0.0
    %v3244 = vpack.c.bf16 %v3243, %v3242
    %v3245 = vld [vmem:[#allocation10] sm:$0xf]
    %vm3246 = vcmask 130048
    %v3248 = vsel %vm3246, %v3245, 0
    %3250 = vmatpush.bf16.msra.mxu0 0
    %3251 = vmatpush.bf16.msra.mxu0 0
    %3252 = vmatpush.bf16.msra.mxu0 0
    %3253 = vmatpush.bf16.msra.mxu0 0
    %3254 = vmatpush.bf16.msra.mxu0 0
    %3255 = vmatpush.bf16.msra.mxu0 0
    %3256 = vmatpush.bf16.msra.mxu0 0
    %3257 = vmatpush.bf16.msra.mxu0 %v3244
    %3258 = vmatmul.bf16.gmra.mxu0 %v3248
    %v3259 = vpop.f32.mrf.mxu0
    %v3260 = vadd.f32 0.0, %v3259
    %v3261 = vpop.f32.mrf.mxu0
    %3262 = vdwg.mxu0
    %v3263 = vpack.c.bf16 %v3260, %v3260
    %v3264 = vld [vmem:[#allocation25] sm:$0xf]
    %v3265 = vld [vmem:[#allocation25 + $0x4] sm:$0xf]
    %v3266 = vld [vmem:[#allocation25 + $0x8] sm:$0xf]
    %v3267 = vld [vmem:[#allocation25 + $0xc] sm:$0xf]
    %v3268 = vld [vmem:[#allocation25 + $0x10] sm:$0xf]
    %v3269 = vld [vmem:[#allocation25 + $0x14] sm:$0xf]
    %v3270 = vld [vmem:[#allocation25 + $0x18] sm:$0xf]
    %v3271 = vld [vmem:[#allocation25 + $0x1c] sm:$0xf]
    %v3272 = vld [vmem:[#allocation25 + $0x20] sm:$0xf]
    %v3273 = vld [vmem:[#allocation25 + $0x24] sm:$0xf]
    %v3274 = vld [vmem:[#allocation25 + $0x28] sm:$0xf]
    %v3275 = vld [vmem:[#allocation25 + $0x2c] sm:$0xf]
    %v3276 = vld [vmem:[#allocation25 + $0x30] sm:$0xf]
    %v3277 = vld [vmem:[#allocation25 + $0x34] sm:$0xf]
    %v3278 = vld [vmem:[#allocation25 + $0x38] sm:$0xf]
    %v3279 = vld [vmem:[#allocation25 + $0x3c] sm:$0xf]
    %s3280 = scalar_lea.vmem [#allocation10], 4
    %v3281 = vld [vmem:[%s3280] sm:$0xf]
    %v3283 = vsel %vm3246, %v3281, 0
    %3285 = vmatpush.bf16.msra.mxu0 0
    %3286 = vmatpush.bf16.msra.mxu0 0
    %3287 = vmatpush.bf16.msra.mxu0 0
    %3288 = vmatpush.bf16.msra.mxu0 0
    %3289 = vmatpush.bf16.msra.mxu0 0
    %3290 = vmatpush.bf16.msra.mxu0 0
    %3291 = vmatpush.bf16.msra.mxu0 0
    %3292 = vmatpush.bf16.msra.mxu0 %v3244
    %3293 = vmatmul.bf16.gmra.mxu0 %v3283
    %v3294 = vpop.f32.mrf.mxu0
    %v3295 = vadd.f32 0.0, %v3294
    %v3296 = vpop.f32.mrf.mxu0
    %3297 = vdwg.mxu0
    %v3298 = vpack.c.bf16 %v3295, %v3295
    %s3299 = scalar_lea.vmem [#allocation25], 64
    %v3300 = vld [vmem:[%s3299] sm:$0xf]
    %v3301 = vld [vmem:[%s3299 + $0x4] sm:$0xf]
    %v3302 = vld [vmem:[%s3299 + $0x8] sm:$0xf]
    %v3303 = vld [vmem:[%s3299 + $0xc] sm:$0xf]
    %v3304 = vld [vmem:[%s3299 + $0x10] sm:$0xf]
    %v3305 = vld [vmem:[%s3299 + $0x14] sm:$0xf]
    %v3306 = vld [vmem:[%s3299 + $0x18] sm:$0xf]
    %v3307 = vld [vmem:[%s3299 + $0x1c] sm:$0xf]
    %v3308 = vld [vmem:[%s3299 + $0x20] sm:$0xf]
    %v3309 = vld [vmem:[%s3299 + $0x24] sm:$0xf]
    %v3310 = vld [vmem:[%s3299 + $0x28] sm:$0xf]
    %v3311 = vld [vmem:[%s3299 + $0x2c] sm:$0xf]
    %v3312 = vld [vmem:[%s3299 + $0x30] sm:$0xf]
    %v3313 = vld [vmem:[%s3299 + $0x34] sm:$0xf]
    %v3314 = vld [vmem:[%s3299 + $0x38] sm:$0xf]
    %v3315 = vld [vmem:[%s3299 + $0x3c] sm:$0xf]
    %v3332 = vunpack.c.l.b16 %v3300
    %v3333 = vunpack.c.l.b16 %v3301
    %v3334 = vunpack.c.l.b16 %v3302
    %v3335 = vunpack.c.l.b16 %v3303
    %v3336 = vunpack.c.l.b16 %v3304
    %v3337 = vunpack.c.l.b16 %v3305
    %v3338 = vunpack.c.l.b16 %v3306
    %v3339 = vunpack.c.l.b16 %v3307
    %v3340 = vunpack.c.l.b16 %v3308
    %v3341 = vunpack.c.l.b16 %v3309
    %v3342 = vunpack.c.l.b16 %v3310
    %v3343 = vunpack.c.l.b16 %v3311
    %v3344 = vunpack.c.l.b16 %v3312
    %v3345 = vunpack.c.l.b16 %v3313
    %v3346 = vunpack.c.l.b16 %v3314
    %v3347 = vunpack.c.l.b16 %v3315
    %v3348 = vpack.c.b16 %v3333, %v3332
    %v3349 = vpack.c.b16 %v3335, %v3334
    %v3350 = vpack.c.b16 %v3337, %v3336
    %v3351 = vpack.c.b16 %v3339, %v3338
    %v3352 = vpack.c.b16 %v3341, %v3340
    %v3353 = vpack.c.b16 %v3343, %v3342
    %v3354 = vpack.c.b16 %v3345, %v3344
    %v3355 = vpack.c.b16 %v3347, %v3346
    %3364 = vmatpush.bf16.msra.mxu0 %v3355
    %3365 = vmatpush.bf16.msra.mxu0 %v3354
    %3366 = vmatpush.bf16.msra.mxu0 %v3353
    %3367 = vmatpush.bf16.msra.mxu0 %v3352
    %3368 = vmatpush.bf16.msra.mxu0 %v3351
    %3369 = vmatpush.bf16.msra.mxu0 %v3350
    %3370 = vmatpush.bf16.msra.mxu0 %v3349
    %3371 = vmatpush.bf16.msra.mxu0 %v3348
    %3372 = vmatmul.bf16.gmra.mxu0 %v3298
    %v3373 = vpop.f32.mrf.mxu0
    %v3374 = vadd.f32 0.0, %v3373
    %v3375 = vpop.f32.mrf.mxu0
    %3376 = vdwg.mxu0
    %v3393 = vunpack.c.l.b16 %v3264
    %v3394 = vunpack.c.l.b16 %v3265
    %v3395 = vunpack.c.l.b16 %v3266
    %v3396 = vunpack.c.l.b16 %v3267
    %v3397 = vunpack.c.l.b16 %v3268
    %v3398 = vunpack.c.l.b16 %v3269
    %v3399 = vunpack.c.l.b16 %v3270
    %v3400 = vunpack.c.l.b16 %v3271
    %v3401 = vunpack.c.l.b16 %v3272
    %v3402 = vunpack.c.l.b16 %v3273
    %v3403 = vunpack.c.l.b16 %v3274
    %v3404 = vunpack.c.l.b16 %v3275
    %v3405 = vunpack.c.l.b16 %v3276
    %v3406 = vunpack.c.l.b16 %v3277
    %v3407 = vunpack.c.l.b16 %v3278
    %v3408 = vunpack.c.l.b16 %v3279
    %v3409 = vpack.c.b16 %v3394, %v3393
    %v3410 = vpack.c.b16 %v3396, %v3395
    %v3411 = vpack.c.b16 %v3398, %v3397
    %v3412 = vpack.c.b16 %v3400, %v3399
    %v3413 = vpack.c.b16 %v3402, %v3401
    %v3414 = vpack.c.b16 %v3404, %v3403
    %v3415 = vpack.c.b16 %v3406, %v3405
    %v3416 = vpack.c.b16 %v3408, %v3407
    %3425 = vmatpush.bf16.msra.mxu0 %v3416
    %3426 = vmatpush.bf16.msra.mxu0 %v3415
    %3427 = vmatpush.bf16.msra.mxu0 %v3414
    %3428 = vmatpush.bf16.msra.mxu0 %v3413
    %3429 = vmatpush.bf16.msra.mxu0 %v3412
    %3430 = vmatpush.bf16.msra.mxu0 %v3411
    %3431 = vmatpush.bf16.msra.mxu0 %v3410
    %3432 = vmatpush.bf16.msra.mxu0 %v3409
    %3433 = vmatmul.bf16.gmra.mxu0 %v3263
    %v3434 = vpop.f32.mrf.mxu0
    %v3435 = vadd.f32 %v3374, %v3434
    %v3436 = vpop.f32.mrf.mxu0
    %3437 = vdwg.mxu0
    %s3438 = scalar_lea.vmem [#allocation10], 8
    %v3439 = vld [vmem:[%s3438] sm:$0xf]
    %v3441 = vsel %vm3246, %v3439, 0
    %3443 = vmatpush.bf16.msra.mxu0 0
    %3444 = vmatpush.bf16.msra.mxu0 0
    %3445 = vmatpush.bf16.msra.mxu0 0
    %3446 = vmatpush.bf16.msra.mxu0 0
    %3447 = vmatpush.bf16.msra.mxu0 0
    %3448 = vmatpush.bf16.msra.mxu0 0
    %3449 = vmatpush.bf16.msra.mxu0 0
    %3450 = vmatpush.bf16.msra.mxu0 %v3244
    %3451 = vmatmul.bf16.gmra.mxu0 %v3441
    %v3452 = vpop.f32.mrf.mxu0
    %v3453 = vadd.f32 0.0, %v3452
    %v3454 = vpop.f32.mrf.mxu0
    %3455 = vdwg.mxu0
    %v3456 = vpack.c.bf16 %v3453, %v3453
    %s3457 = scalar_lea.vmem [#allocation25], 128
    %v3458 = vld [vmem:[%s3457] sm:$0xf]
    %v3459 = vld [vmem:[%s3457 + $0x4] sm:$0xf]
    %v3460 = vld [vmem:[%s3457 + $0x8] sm:$0xf]
    %v3461 = vld [vmem:[%s3457 + $0xc] sm:$0xf]
    %v3462 = vld [vmem:[%s3457 + $0x10] sm:$0xf]
    %v3463 = vld [vmem:[%s3457 + $0x14] sm:$0xf]
    %v3464 = vld [vmem:[%s3457 + $0x18] sm:$0xf]
    %v3465 = vld [vmem:[%s3457 + $0x1c] sm:$0xf]
    %v3466 = vld [vmem:[%s3457 + $0x20] sm:$0xf]
    %v3467 = vld [vmem:[%s3457 + $0x24] sm:$0xf]
    %v3468 = vld [vmem:[%s3457 + $0x28] sm:$0xf]
    %v3469 = vld [vmem:[%s3457 + $0x2c] sm:$0xf]
    %v3470 = vld [vmem:[%s3457 + $0x30] sm:$0xf]
    %v3471 = vld [vmem:[%s3457 + $0x34] sm:$0xf]
    %v3472 = vld [vmem:[%s3457 + $0x38] sm:$0xf]
    %v3473 = vld [vmem:[%s3457 + $0x3c] sm:$0xf]
    %v3490 = vunpack.c.l.b16 %v3458
    %v3491 = vunpack.c.l.b16 %v3459
    %v3492 = vunpack.c.l.b16 %v3460
    %v3493 = vunpack.c.l.b16 %v3461
    %v3494 = vunpack.c.l.b16 %v3462
    %v3495 = vunpack.c.l.b16 %v3463
    %v3496 = vunpack.c.l.b16 %v3464
    %v3497 = vunpack.c.l.b16 %v3465
    %v3498 = vunpack.c.l.b16 %v3466
    %v3499 = vunpack.c.l.b16 %v3467
    %v3500 = vunpack.c.l.b16 %v3468
    %v3501 = vunpack.c.l.b16 %v3469
    %v3502 = vunpack.c.l.b16 %v3470
    %v3503 = vunpack.c.l.b16 %v3471
    %v3504 = vunpack.c.l.b16 %v3472
    %v3505 = vunpack.c.l.b16 %v3473
    %v3506 = vpack.c.b16 %v3491, %v3490
    %v3507 = vpack.c.b16 %v3493, %v3492
    %v3508 = vpack.c.b16 %v3495, %v3494
    %v3509 = vpack.c.b16 %v3497, %v3496
    %v3510 = vpack.c.b16 %v3499, %v3498
    %v3511 = vpack.c.b16 %v3501, %v3500
    %v3512 = vpack.c.b16 %v3503, %v3502
    %v3513 = vpack.c.b16 %v3505, %v3504
    %3522 = vmatpush.bf16.msra.mxu0 %v3513
    %3523 = vmatpush.bf16.msra.mxu0 %v3512
    %3524 = vmatpush.bf16.msra.mxu0 %v3511
    %3525 = vmatpush.bf16.msra.mxu0 %v3510
    %3526 = vmatpush.bf16.msra.mxu0 %v3509
    %3527 = vmatpush.bf16.msra.mxu0 %v3508
    %3528 = vmatpush.bf16.msra.mxu0 %v3507
    %3529 = vmatpush.bf16.msra.mxu0 %v3506
    %3530 = vmatmul.bf16.gmra.mxu0 %v3456
    %v3531 = vpop.f32.mrf.mxu0
    %v3532 = vadd.f32 0.0, %v3531
    %v3533 = vpop.f32.mrf.mxu0
    %3534 = vdwg.mxu0
    %v3535 = vadd.f32 %v3435, %v3532
    %s3536 = scalar_lea.vmem [#allocation10], 12
    %v3537 = vld [vmem:[%s3536] sm:$0xf]
    %v3539 = vsel %vm3246, %v3537, 0
    %3541 = vmatpush.bf16.msra.mxu0 0
    %3542 = vmatpush.bf16.msra.mxu0 0
    %3543 = vmatpush.bf16.msra.mxu0 0
    %3544 = vmatpush.bf16.msra.mxu0 0
    %3545 = vmatpush.bf16.msra.mxu0 0
    %3546 = vmatpush.bf16.msra.mxu0 0
    %3547 = vmatpush.bf16.msra.mxu0 0
    %3548 = vmatpush.bf16.msra.mxu0 %v3244
    %3549 = vmatmul.bf16.gmra.mxu0 %v3539
    %v3550 = vpop.f32.mrf.mxu0
    %v3551 = vadd.f32 0.0, %v3550
    %v3552 = vpop.f32.mrf.mxu0
    %3553 = vdwg.mxu0
    %v3554 = vpack.c.bf16 %v3551, %v3551
    %s3555 = scalar_lea.vmem [#allocation25], 192
    %v3556 = vld [vmem:[%s3555] sm:$0xf]
    %v3557 = vld [vmem:[%s3555 + $0x4] sm:$0xf]
    %v3558 = vld [vmem:[%s3555 + $0x8] sm:$0xf]
    %v3559 = vld [vmem:[%s3555 + $0xc] sm:$0xf]
    %v3560 = vld [vmem:[%s3555 + $0x10] sm:$0xf]
    %v3561 = vld [vmem:[%s3555 + $0x14] sm:$0xf]
    %v3562 = vld [vmem:[%s3555 + $0x18] sm:$0xf]
    %v3563 = vld [vmem:[%s3555 + $0x1c] sm:$0xf]
    %v3564 = vld [vmem:[%s3555 + $0x20] sm:$0xf]
    %v3565 = vld [vmem:[%s3555 + $0x24] sm:$0xf]
    %v3566 = vld [vmem:[%s3555 + $0x28] sm:$0xf]
    %v3567 = vld [vmem:[%s3555 + $0x2c] sm:$0xf]
    %v3568 = vld [vmem:[%s3555 + $0x30] sm:$0xf]
    %v3569 = vld [vmem:[%s3555 + $0x34] sm:$0xf]
    %v3570 = vld [vmem:[%s3555 + $0x38] sm:$0xf]
    %v3571 = vld [vmem:[%s3555 + $0x3c] sm:$0xf]
    %v3588 = vunpack.c.l.b16 %v3556
    %v3589 = vunpack.c.l.b16 %v3557
    %v3590 = vunpack.c.l.b16 %v3558
    %v3591 = vunpack.c.l.b16 %v3559
    %v3592 = vunpack.c.l.b16 %v3560
    %v3593 = vunpack.c.l.b16 %v3561
    %v3594 = vunpack.c.l.b16 %v3562
    %v3595 = vunpack.c.l.b16 %v3563
    %v3596 = vunpack.c.l.b16 %v3564
    %v3597 = vunpack.c.l.b16 %v3565
    %v3598 = vunpack.c.l.b16 %v3566
    %v3599 = vunpack.c.l.b16 %v3567
    %v3600 = vunpack.c.l.b16 %v3568
    %v3601 = vunpack.c.l.b16 %v3569
    %v3602 = vunpack.c.l.b16 %v3570
    %v3603 = vunpack.c.l.b16 %v3571
    %v3604 = vpack.c.b16 %v3589, %v3588
    %v3605 = vpack.c.b16 %v3591, %v3590
    %v3606 = vpack.c.b16 %v3593, %v3592
    %v3607 = vpack.c.b16 %v3595, %v3594
    %v3608 = vpack.c.b16 %v3597, %v3596
    %v3609 = vpack.c.b16 %v3599, %v3598
    %v3610 = vpack.c.b16 %v3601, %v3600
    %v3611 = vpack.c.b16 %v3603, %v3602
    %3620 = vmatpush.bf16.msra.mxu0 %v3611
    %3621 = vmatpush.bf16.msra.mxu0 %v3610
    %3622 = vmatpush.bf16.msra.mxu0 %v3609
    %3623 = vmatpush.bf16.msra.mxu0 %v3608
    %3624 = vmatpush.bf16.msra.mxu0 %v3607
    %3625 = vmatpush.bf16.msra.mxu0 %v3606
    %3626 = vmatpush.bf16.msra.mxu0 %v3605
    %3627 = vmatpush.bf16.msra.mxu0 %v3604
    %3628 = vmatmul.bf16.gmra.mxu0 %v3554
    %v3629 = vpop.f32.mrf.mxu0
    %v3630 = vadd.f32 0.0, %v3629
    %v3631 = vpop.f32.mrf.mxu0
    %3632 = vdwg.mxu0
    %v3633 = vadd.f32 %v3535, %v3630
    %v3634 = vld [vmem:[%s47] sm:$0x1]
    %v3636 = vperm.slane %v3634, 0
    %v3638 = vadd.f32 %v3633, %v3636
    %v3639 = vpack.c.bf16 %v3156, %v3155
    %3640 = vmatpush.bf16.msra.mxu0 0
    %3641 = vmatpush.bf16.msra.mxu0 0
    %3642 = vmatpush.bf16.msra.mxu0 0
    %3643 = vmatpush.bf16.msra.mxu0 0
    %3644 = vmatpush.bf16.msra.mxu0 0
    %3645 = vmatpush.bf16.msra.mxu0 0
    %3646 = vmatpush.bf16.msra.mxu0 0
    %3647 = vmatpush.bf16.msra.mxu0 %v3639
    %3648 = vmatmul.bf16.gmra.mxu0 %v3248
    %v3649 = vpop.f32.mrf.mxu0
    %v3650 = vadd.f32 0.0, %v3649
    %v3651 = vpop.f32.mrf.mxu0
    %3652 = vdwg.mxu0
    %v3653 = vpack.c.bf16 %v3650, %v3650
    %v3654 = vld [vmem:[#allocation26] sm:$0xf]
    %v3655 = vld [vmem:[#allocation26 + $0x4] sm:$0xf]
    %v3656 = vld [vmem:[#allocation26 + $0x8] sm:$0xf]
    %v3657 = vld [vmem:[#allocation26 + $0xc] sm:$0xf]
    %v3658 = vld [vmem:[#allocation26 + $0x10] sm:$0xf]
    %v3659 = vld [vmem:[#allocation26 + $0x14] sm:$0xf]
    %v3660 = vld [vmem:[#allocation26 + $0x18] sm:$0xf]
    %v3661 = vld [vmem:[#allocation26 + $0x1c] sm:$0xf]
    %v3662 = vld [vmem:[#allocation26 + $0x20] sm:$0xf]
    %v3663 = vld [vmem:[#allocation26 + $0x24] sm:$0xf]
    %v3664 = vld [vmem:[#allocation26 + $0x28] sm:$0xf]
    %v3665 = vld [vmem:[#allocation26 + $0x2c] sm:$0xf]
    %v3666 = vld [vmem:[#allocation26 + $0x30] sm:$0xf]
    %v3667 = vld [vmem:[#allocation26 + $0x34] sm:$0xf]
    %v3668 = vld [vmem:[#allocation26 + $0x38] sm:$0xf]
    %v3669 = vld [vmem:[#allocation26 + $0x3c] sm:$0xf]
    %3670 = vmatpush.bf16.msra.mxu0 0
    %3671 = vmatpush.bf16.msra.mxu0 0
    %3672 = vmatpush.bf16.msra.mxu0 0
    %3673 = vmatpush.bf16.msra.mxu0 0
    %3674 = vmatpush.bf16.msra.mxu0 0
    %3675 = vmatpush.bf16.msra.mxu0 0
    %3676 = vmatpush.bf16.msra.mxu0 0
    %3677 = vmatpush.bf16.msra.mxu0 %v3639
    %3678 = vmatmul.bf16.gmra.mxu0 %v3283
    %v3679 = vpop.f32.mrf.mxu0
    %v3680 = vadd.f32 0.0, %v3679
    %v3681 = vpop.f32.mrf.mxu0
    %3682 = vdwg.mxu0
    %v3683 = vpack.c.bf16 %v3680, %v3680
    %s3684 = scalar_lea.vmem [#allocation26], 64
    %v3685 = vld [vmem:[%s3684] sm:$0xf]
    %v3686 = vld [vmem:[%s3684 + $0x4] sm:$0xf]
    %v3687 = vld [vmem:[%s3684 + $0x8] sm:$0xf]
    %v3688 = vld [vmem:[%s3684 + $0xc] sm:$0xf]
    %v3689 = vld [vmem:[%s3684 + $0x10] sm:$0xf]
    %v3690 = vld [vmem:[%s3684 + $0x14] sm:$0xf]
    %v3691 = vld [vmem:[%s3684 + $0x18] sm:$0xf]
    %v3692 = vld [vmem:[%s3684 + $0x1c] sm:$0xf]
    %v3693 = vld [vmem:[%s3684 + $0x20] sm:$0xf]
    %v3694 = vld [vmem:[%s3684 + $0x24] sm:$0xf]
    %v3695 = vld [vmem:[%s3684 + $0x28] sm:$0xf]
    %v3696 = vld [vmem:[%s3684 + $0x2c] sm:$0xf]
    %v3697 = vld [vmem:[%s3684 + $0x30] sm:$0xf]
    %v3698 = vld [vmem:[%s3684 + $0x34] sm:$0xf]
    %v3699 = vld [vmem:[%s3684 + $0x38] sm:$0xf]
    %v3700 = vld [vmem:[%s3684 + $0x3c] sm:$0xf]
    %v3717 = vunpack.c.l.b16 %v3685
    %v3718 = vunpack.c.l.b16 %v3686
    %v3719 = vunpack.c.l.b16 %v3687
    %v3720 = vunpack.c.l.b16 %v3688
    %v3721 = vunpack.c.l.b16 %v3689
    %v3722 = vunpack.c.l.b16 %v3690
    %v3723 = vunpack.c.l.b16 %v3691
    %v3724 = vunpack.c.l.b16 %v3692
    %v3725 = vunpack.c.l.b16 %v3693
    %v3726 = vunpack.c.l.b16 %v3694
    %v3727 = vunpack.c.l.b16 %v3695
    %v3728 = vunpack.c.l.b16 %v3696
    %v3729 = vunpack.c.l.b16 %v3697
    %v3730 = vunpack.c.l.b16 %v3698
    %v3731 = vunpack.c.l.b16 %v3699
    %v3732 = vunpack.c.l.b16 %v3700
    %v3733 = vpack.c.b16 %v3718, %v3717
    %v3734 = vpack.c.b16 %v3720, %v3719
    %v3735 = vpack.c.b16 %v3722, %v3721
    %v3736 = vpack.c.b16 %v3724, %v3723
    %v3737 = vpack.c.b16 %v3726, %v3725
    %v3738 = vpack.c.b16 %v3728, %v3727
    %v3739 = vpack.c.b16 %v3730, %v3729
    %v3740 = vpack.c.b16 %v3732, %v3731
    %3749 = vmatpush.bf16.msra.mxu0 %v3740
    %3750 = vmatpush.bf16.msra.mxu0 %v3739
    %3751 = vmatpush.bf16.msra.mxu0 %v3738
    %3752 = vmatpush.bf16.msra.mxu0 %v3737
    %3753 = vmatpush.bf16.msra.mxu0 %v3736
    %3754 = vmatpush.bf16.msra.mxu0 %v3735
    %3755 = vmatpush.bf16.msra.mxu0 %v3734
    %3756 = vmatpush.bf16.msra.mxu0 %v3733
    %3757 = vmatmul.bf16.gmra.mxu0 %v3683
    %v3758 = vpop.f32.mrf.mxu0
    %v3759 = vadd.f32 0.0, %v3758
    %v3760 = vpop.f32.mrf.mxu0
    %3761 = vdwg.mxu0
    %v3778 = vunpack.c.l.b16 %v3654
    %v3779 = vunpack.c.l.b16 %v3655
    %v3780 = vunpack.c.l.b16 %v3656
    %v3781 = vunpack.c.l.b16 %v3657
    %v3782 = vunpack.c.l.b16 %v3658
    %v3783 = vunpack.c.l.b16 %v3659
    %v3784 = vunpack.c.l.b16 %v3660
    %v3785 = vunpack.c.l.b16 %v3661
    %v3786 = vunpack.c.l.b16 %v3662
    %v3787 = vunpack.c.l.b16 %v3663
    %v3788 = vunpack.c.l.b16 %v3664
    %v3789 = vunpack.c.l.b16 %v3665
    %v3790 = vunpack.c.l.b16 %v3666
    %v3791 = vunpack.c.l.b16 %v3667
    %v3792 = vunpack.c.l.b16 %v3668
    %v3793 = vunpack.c.l.b16 %v3669
    %v3794 = vpack.c.b16 %v3779, %v3778
    %v3795 = vpack.c.b16 %v3781, %v3780
    %v3796 = vpack.c.b16 %v3783, %v3782
    %v3797 = vpack.c.b16 %v3785, %v3784
    %v3798 = vpack.c.b16 %v3787, %v3786
    %v3799 = vpack.c.b16 %v3789, %v3788
    %v3800 = vpack.c.b16 %v3791, %v3790
    %v3801 = vpack.c.b16 %v3793, %v3792
    %3810 = vmatpush.bf16.msra.mxu0 %v3801
    %3811 = vmatpush.bf16.msra.mxu0 %v3800
    %3812 = vmatpush.bf16.msra.mxu0 %v3799
    %3813 = vmatpush.bf16.msra.mxu0 %v3798
    %3814 = vmatpush.bf16.msra.mxu0 %v3797
    %3815 = vmatpush.bf16.msra.mxu0 %v3796
    %3816 = vmatpush.bf16.msra.mxu0 %v3795
    %3817 = vmatpush.bf16.msra.mxu0 %v3794
    %3818 = vmatmul.bf16.gmra.mxu0 %v3653
    %v3819 = vpop.f32.mrf.mxu0
    %v3820 = vadd.f32 %v3759, %v3819
    %v3821 = vpop.f32.mrf.mxu0
    %3822 = vdwg.mxu0
    %3823 = vmatpush.bf16.msra.mxu0 0
    %3824 = vmatpush.bf16.msra.mxu0 0
    %3825 = vmatpush.bf16.msra.mxu0 0
    %3826 = vmatpush.bf16.msra.mxu0 0
    %3827 = vmatpush.bf16.msra.mxu0 0
    %3828 = vmatpush.bf16.msra.mxu0 0
    %3829 = vmatpush.bf16.msra.mxu0 0
    %3830 = vmatpush.bf16.msra.mxu0 %v3639
    %3831 = vmatmul.bf16.gmra.mxu0 %v3441
    %v3832 = vpop.f32.mrf.mxu0
    %v3833 = vadd.f32 0.0, %v3832
    %v3834 = vpop.f32.mrf.mxu0
    %3835 = vdwg.mxu0
    %v3836 = vpack.c.bf16 %v3833, %v3833
    %s3837 = scalar_lea.vmem [#allocation26], 128
    %v3838 = vld [vmem:[%s3837] sm:$0xf]
    %v3839 = vld [vmem:[%s3837 + $0x4] sm:$0xf]
    %v3840 = vld [vmem:[%s3837 + $0x8] sm:$0xf]
    %v3841 = vld [vmem:[%s3837 + $0xc] sm:$0xf]
    %v3842 = vld [vmem:[%s3837 + $0x10] sm:$0xf]
    %v3843 = vld [vmem:[%s3837 + $0x14] sm:$0xf]
    %v3844 = vld [vmem:[%s3837 + $0x18] sm:$0xf]
    %v3845 = vld [vmem:[%s3837 + $0x1c] sm:$0xf]
    %v3846 = vld [vmem:[%s3837 + $0x20] sm:$0xf]
    %v3847 = vld [vmem:[%s3837 + $0x24] sm:$0xf]
    %v3848 = vld [vmem:[%s3837 + $0x28] sm:$0xf]
    %v3849 = vld [vmem:[%s3837 + $0x2c] sm:$0xf]
    %v3850 = vld [vmem:[%s3837 + $0x30] sm:$0xf]
    %v3851 = vld [vmem:[%s3837 + $0x34] sm:$0xf]
    %v3852 = vld [vmem:[%s3837 + $0x38] sm:$0xf]
    %v3853 = vld [vmem:[%s3837 + $0x3c] sm:$0xf]
    %v3870 = vunpack.c.l.b16 %v3838
    %v3871 = vunpack.c.l.b16 %v3839
    %v3872 = vunpack.c.l.b16 %v3840
    %v3873 = vunpack.c.l.b16 %v3841
    %v3874 = vunpack.c.l.b16 %v3842
    %v3875 = vunpack.c.l.b16 %v3843
    %v3876 = vunpack.c.l.b16 %v3844
    %v3877 = vunpack.c.l.b16 %v3845
    %v3878 = vunpack.c.l.b16 %v3846
    %v3879 = vunpack.c.l.b16 %v3847
    %v3880 = vunpack.c.l.b16 %v3848
    %v3881 = vunpack.c.l.b16 %v3849
    %v3882 = vunpack.c.l.b16 %v3850
    %v3883 = vunpack.c.l.b16 %v3851
    %v3884 = vunpack.c.l.b16 %v3852
    %v3885 = vunpack.c.l.b16 %v3853
    %v3886 = vpack.c.b16 %v3871, %v3870
    %v3887 = vpack.c.b16 %v3873, %v3872
    %v3888 = vpack.c.b16 %v3875, %v3874
    %v3889 = vpack.c.b16 %v3877, %v3876
    %v3890 = vpack.c.b16 %v3879, %v3878
    %v3891 = vpack.c.b16 %v3881, %v3880
    %v3892 = vpack.c.b16 %v3883, %v3882
    %v3893 = vpack.c.b16 %v3885, %v3884
    %3902 = vmatpush.bf16.msra.mxu0 %v3893
    %3903 = vmatpush.bf16.msra.mxu0 %v3892
    %3904 = vmatpush.bf16.msra.mxu0 %v3891
    %3905 = vmatpush.bf16.msra.mxu0 %v3890
    %3906 = vmatpush.bf16.msra.mxu0 %v3889
    %3907 = vmatpush.bf16.msra.mxu0 %v3888
    %3908 = vmatpush.bf16.msra.mxu0 %v3887
    %3909 = vmatpush.bf16.msra.mxu0 %v3886
    %3910 = vmatmul.bf16.gmra.mxu0 %v3836
    %v3911 = vpop.f32.mrf.mxu0
    %v3912 = vadd.f32 0.0, %v3911
    %v3913 = vpop.f32.mrf.mxu0
    %3914 = vdwg.mxu0
    %v3915 = vadd.f32 %v3820, %v3912
    %3916 = vmatpush.bf16.msra.mxu0 0
    %3917 = vmatpush.bf16.msra.mxu0 0
    %3918 = vmatpush.bf16.msra.mxu0 0
    %3919 = vmatpush.bf16.msra.mxu0 0
    %3920 = vmatpush.bf16.msra.mxu0 0
    %3921 = vmatpush.bf16.msra.mxu0 0
    %3922 = vmatpush.bf16.msra.mxu0 0
    %3923 = vmatpush.bf16.msra.mxu0 %v3639
    %3924 = vmatmul.bf16.gmra.mxu0 %v3539
    %v3925 = vpop.f32.mrf.mxu0
    %v3926 = vadd.f32 0.0, %v3925
    %v3927 = vpop.f32.mrf.mxu0
    %3928 = vdwg.mxu0
    %v3929 = vpack.c.bf16 %v3926, %v3926
    %s3930 = scalar_lea.vmem [#allocation26], 192
    %v3931 = vld [vmem:[%s3930] sm:$0xf]
    %v3932 = vld [vmem:[%s3930 + $0x4] sm:$0xf]
    %v3933 = vld [vmem:[%s3930 + $0x8] sm:$0xf]
    %v3934 = vld [vmem:[%s3930 + $0xc] sm:$0xf]
    %v3935 = vld [vmem:[%s3930 + $0x10] sm:$0xf]
    %v3936 = vld [vmem:[%s3930 + $0x14] sm:$0xf]
    %v3937 = vld [vmem:[%s3930 + $0x18] sm:$0xf]
    %v3938 = vld [vmem:[%s3930 + $0x1c] sm:$0xf]
    %v3939 = vld [vmem:[%s3930 + $0x20] sm:$0xf]
    %v3940 = vld [vmem:[%s3930 + $0x24] sm:$0xf]
    %v3941 = vld [vmem:[%s3930 + $0x28] sm:$0xf]
    %v3942 = vld [vmem:[%s3930 + $0x2c] sm:$0xf]
    %v3943 = vld [vmem:[%s3930 + $0x30] sm:$0xf]
    %v3944 = vld [vmem:[%s3930 + $0x34] sm:$0xf]
    %v3945 = vld [vmem:[%s3930 + $0x38] sm:$0xf]
    %v3946 = vld [vmem:[%s3930 + $0x3c] sm:$0xf]
    %v3963 = vunpack.c.l.b16 %v3931
    %v3964 = vunpack.c.l.b16 %v3932
    %v3965 = vunpack.c.l.b16 %v3933
    %v3966 = vunpack.c.l.b16 %v3934
    %v3967 = vunpack.c.l.b16 %v3935
    %v3968 = vunpack.c.l.b16 %v3936
    %v3969 = vunpack.c.l.b16 %v3937
    %v3970 = vunpack.c.l.b16 %v3938
    %v3971 = vunpack.c.l.b16 %v3939
    %v3972 = vunpack.c.l.b16 %v3940
    %v3973 = vunpack.c.l.b16 %v3941
    %v3974 = vunpack.c.l.b16 %v3942
    %v3975 = vunpack.c.l.b16 %v3943
    %v3976 = vunpack.c.l.b16 %v3944
    %v3977 = vunpack.c.l.b16 %v3945
    %v3978 = vunpack.c.l.b16 %v3946
    %v3979 = vpack.c.b16 %v3964, %v3963
    %v3980 = vpack.c.b16 %v3966, %v3965
    %v3981 = vpack.c.b16 %v3968, %v3967
    %v3982 = vpack.c.b16 %v3970, %v3969
    %v3983 = vpack.c.b16 %v3972, %v3971
    %v3984 = vpack.c.b16 %v3974, %v3973
    %v3985 = vpack.c.b16 %v3976, %v3975
    %v3986 = vpack.c.b16 %v3978, %v3977
    %3995 = vmatpush.bf16.msra.mxu0 %v3986
    %3996 = vmatpush.bf16.msra.mxu0 %v3985
    %3997 = vmatpush.bf16.msra.mxu0 %v3984
    %3998 = vmatpush.bf16.msra.mxu0 %v3983
    %3999 = vmatpush.bf16.msra.mxu0 %v3982
    %4000 = vmatpush.bf16.msra.mxu0 %v3981
    %4001 = vmatpush.bf16.msra.mxu0 %v3980
    %4002 = vmatpush.bf16.msra.mxu0 %v3979
    %4003 = vmatmul.bf16.gmra.mxu0 %v3929
    %v4004 = vpop.f32.mrf.mxu0
    %v4005 = vadd.f32 0.0, %v4004
    %v4006 = vpop.f32.mrf.mxu0
    %4007 = vdwg.mxu0
    %v4008 = vadd.f32 %v3915, %v4005
    %v4009 = vld [vmem:[%s51] sm:$0x1]
    %v4011 = vperm.slane %v4009, 0
    %v4013 = vadd.f32 %v4008, %v4011
    %v4014 = vmul.f32 %v4013, 2.0
    %v4015 = vmul.f32 %v3638, 0.3
    %v4016 = vadd.f32 %v4014, %v4015
    %v4017 = vmax.f32 %v4016, 0.0
    %v4018 = vpack.c.bf16 %v4017, %v4017
    %v4019 = vld [vmem:[#allocation28] sm:$0xf]
    %v4020 = vld [vmem:[#allocation28 + $0x4] sm:$0xf]
    %v4021 = vld [vmem:[#allocation28 + $0x8] sm:$0xf]
    %v4022 = vld [vmem:[#allocation28 + $0xc] sm:$0xf]
    %v4023 = vld [vmem:[#allocation28 + $0x10] sm:$0xf]
    %v4024 = vld [vmem:[#allocation28 + $0x14] sm:$0xf]
    %v4025 = vld [vmem:[#allocation28 + $0x18] sm:$0xf]
    %v4026 = vld [vmem:[#allocation28 + $0x1c] sm:$0xf]
    %v4027 = vld [vmem:[#allocation28 + $0x20] sm:$0xf]
    %v4028 = vld [vmem:[#allocation28 + $0x24] sm:$0xf]
    %v4029 = vld [vmem:[#allocation28 + $0x28] sm:$0xf]
    %v4030 = vld [vmem:[#allocation28 + $0x2c] sm:$0xf]
    %v4031 = vld [vmem:[#allocation28 + $0x30] sm:$0xf]
    %v4032 = vld [vmem:[#allocation28 + $0x34] sm:$0xf]
    %v4033 = vld [vmem:[#allocation28 + $0x38] sm:$0xf]
    %v4034 = vld [vmem:[#allocation28 + $0x3c] sm:$0xf]
    %v4035 = vld [vmem:[%s55] sm:$0x1]
    %v4037 = vperm.slane %v4035, 0
    %v4055 = vunpack.c.l.b16 %v4019
    %v4056 = vunpack.c.l.b16 %v4020
    %v4057 = vunpack.c.l.b16 %v4021
    %v4058 = vunpack.c.l.b16 %v4022
    %v4059 = vunpack.c.l.b16 %v4023
    %v4060 = vunpack.c.l.b16 %v4024
    %v4061 = vunpack.c.l.b16 %v4025
    %v4062 = vunpack.c.l.b16 %v4026
    %v4063 = vunpack.c.l.b16 %v4027
    %v4064 = vunpack.c.l.b16 %v4028
    %v4065 = vunpack.c.l.b16 %v4029
    %v4066 = vunpack.c.l.b16 %v4030
    %v4067 = vunpack.c.l.b16 %v4031
    %v4068 = vunpack.c.l.b16 %v4032
    %v4069 = vunpack.c.l.b16 %v4033
    %v4070 = vunpack.c.l.b16 %v4034
    %v4071 = vpack.c.b16 %v4056, %v4055
    %v4072 = vpack.c.b16 %v4058, %v4057
    %v4073 = vpack.c.b16 %v4060, %v4059
    %v4074 = vpack.c.b16 %v4062, %v4061
    %v4075 = vpack.c.b16 %v4064, %v4063
    %v4076 = vpack.c.b16 %v4066, %v4065
    %v4077 = vpack.c.b16 %v4068, %v4067
    %v4078 = vpack.c.b16 %v4070, %v4069
    %4087 = vmatpush.bf16.msra.mxu0 %v4078
    %4088 = vmatpush.bf16.msra.mxu0 %v4077
    %4089 = vmatpush.bf16.msra.mxu0 %v4076
    %4090 = vmatpush.bf16.msra.mxu0 %v4075
    %4091 = vmatpush.bf16.msra.mxu0 %v4074
    %4092 = vmatpush.bf16.msra.mxu0 %v4073
    %4093 = vmatpush.bf16.msra.mxu0 %v4072
    %4094 = vmatpush.bf16.msra.mxu0 %v4071
    %4095 = vmatmul.bf16.gmra.mxu0 %v4018
    %v4096 = vpop.f32.mrf.mxu0
    %v4097 = vadd.f32 %v4037, %v4096
    %v4098 = vpop.f32.mrf.mxu0
    %4099 = vdwg.mxu0
    %v4100 = vmax.f32 %v4097, 0.0
    %v4101 = vpack.c.bf16 %v4100, %v4100
    %v4102 = vld [vmem:[#allocation11] sm:$0xf]
    %vm4103 = vcmask 64512
    %v4105 = vsel %vm4103, %v4102, 0
    %vm4107 = vcmask 1043456
    %v4109 = vsel %vm4107, %v4101, 0
    %4111 = vmatpush.bf16.msra.mxu0 0
    %4112 = vmatpush.bf16.msra.mxu0 0
    %4113 = vmatpush.bf16.msra.mxu0 0
    %4114 = vmatpush.bf16.msra.mxu0 0
    %4115 = vmatpush.bf16.msra.mxu0 0
    %4116 = vmatpush.bf16.msra.mxu0 0
    %4117 = vmatpush.bf16.msra.mxu0 0
    %4118 = vmatpush.bf16.msra.mxu0 %v4109
    %4119 = vmatmul.bf16.gmra.mxu0 %v4105
    %v4120 = vpop.f32.mrf.mxu0
    %v4121 = vadd.f32 0.0, %v4120
    %v4122 = vpop.f32.mrf.mxu0
    %4123 = vdwg.mxu0
    %v4124 = vpack.c.bf16 %v4121, %v4121
    %v4125 = vld [vmem:[#allocation29] sm:$0xf]
    %v4126 = vld [vmem:[#allocation29 + $0x4] sm:$0xf]
    %v4127 = vld [vmem:[#allocation29 + $0x8] sm:$0xf]
    %v4128 = vld [vmem:[#allocation29 + $0xc] sm:$0xf]
    %v4129 = vld [vmem:[#allocation29 + $0x10] sm:$0xf]
    %v4130 = vld [vmem:[#allocation29 + $0x14] sm:$0xf]
    %v4131 = vld [vmem:[#allocation29 + $0x18] sm:$0xf]
    %v4132 = vld [vmem:[#allocation29 + $0x1c] sm:$0xf]
    %v4133 = vld [vmem:[#allocation29 + $0x20] sm:$0xf]
    %v4134 = vld [vmem:[#allocation29 + $0x24] sm:$0xf]
    %v4135 = vld [vmem:[#allocation29 + $0x28] sm:$0xf]
    %v4136 = vld [vmem:[#allocation29 + $0x2c] sm:$0xf]
    %v4137 = vld [vmem:[#allocation29 + $0x30] sm:$0xf]
    %v4138 = vld [vmem:[#allocation29 + $0x34] sm:$0xf]
    %v4139 = vld [vmem:[#allocation29 + $0x38] sm:$0xf]
    %v4140 = vld [vmem:[#allocation29 + $0x3c] sm:$0xf]
    %s4141 = scalar_lea.vmem [#allocation11], 4
    %v4142 = vld [vmem:[%s4141] sm:$0xf]
    %v4144 = vsel %vm4103, %v4142, 0
    %4146 = vmatpush.bf16.msra.mxu0 0
    %4147 = vmatpush.bf16.msra.mxu0 0
    %4148 = vmatpush.bf16.msra.mxu0 0
    %4149 = vmatpush.bf16.msra.mxu0 0
    %4150 = vmatpush.bf16.msra.mxu0 0
    %4151 = vmatpush.bf16.msra.mxu0 0
    %4152 = vmatpush.bf16.msra.mxu0 0
    %4153 = vmatpush.bf16.msra.mxu0 %v4109
    %4154 = vmatmul.bf16.gmra.mxu0 %v4144
    %v4155 = vpop.f32.mrf.mxu0
    %v4156 = vadd.f32 0.0, %v4155
    %v4157 = vpop.f32.mrf.mxu0
    %4158 = vdwg.mxu0
    %v4159 = vpack.c.bf16 %v4156, %v4156
    %s4160 = scalar_lea.vmem [#allocation29], 64
    %v4161 = vld [vmem:[%s4160] sm:$0xf]
    %v4162 = vld [vmem:[%s4160 + $0x4] sm:$0xf]
    %v4163 = vld [vmem:[%s4160 + $0x8] sm:$0xf]
    %v4164 = vld [vmem:[%s4160 + $0xc] sm:$0xf]
    %v4165 = vld [vmem:[%s4160 + $0x10] sm:$0xf]
    %v4166 = vld [vmem:[%s4160 + $0x14] sm:$0xf]
    %v4167 = vld [vmem:[%s4160 + $0x18] sm:$0xf]
    %v4168 = vld [vmem:[%s4160 + $0x1c] sm:$0xf]
    %v4169 = vld [vmem:[%s4160 + $0x20] sm:$0xf]
    %v4170 = vld [vmem:[%s4160 + $0x24] sm:$0xf]
    %v4171 = vld [vmem:[%s4160 + $0x28] sm:$0xf]
    %v4172 = vld [vmem:[%s4160 + $0x2c] sm:$0xf]
    %v4173 = vld [vmem:[%s4160 + $0x30] sm:$0xf]
    %v4174 = vld [vmem:[%s4160 + $0x34] sm:$0xf]
    %v4175 = vld [vmem:[%s4160 + $0x38] sm:$0xf]
    %v4176 = vld [vmem:[%s4160 + $0x3c] sm:$0xf]
    %v4193 = vunpack.c.l.b16 %v4161
    %v4194 = vunpack.c.l.b16 %v4162
    %v4195 = vunpack.c.l.b16 %v4163
    %v4196 = vunpack.c.l.b16 %v4164
    %v4197 = vunpack.c.l.b16 %v4165
    %v4198 = vunpack.c.l.b16 %v4166
    %v4199 = vunpack.c.l.b16 %v4167
    %v4200 = vunpack.c.l.b16 %v4168
    %v4201 = vunpack.c.l.b16 %v4169
    %v4202 = vunpack.c.l.b16 %v4170
    %v4203 = vunpack.c.l.b16 %v4171
    %v4204 = vunpack.c.l.b16 %v4172
    %v4205 = vunpack.c.l.b16 %v4173
    %v4206 = vunpack.c.l.b16 %v4174
    %v4207 = vunpack.c.l.b16 %v4175
    %v4208 = vunpack.c.l.b16 %v4176
    %v4209 = vpack.c.b16 %v4194, %v4193
    %v4210 = vpack.c.b16 %v4196, %v4195
    %v4211 = vpack.c.b16 %v4198, %v4197
    %v4212 = vpack.c.b16 %v4200, %v4199
    %v4213 = vpack.c.b16 %v4202, %v4201
    %v4214 = vpack.c.b16 %v4204, %v4203
    %v4215 = vpack.c.b16 %v4206, %v4205
    %v4216 = vpack.c.b16 %v4208, %v4207
    %4225 = vmatpush.bf16.msra.mxu0 %v4216
    %4226 = vmatpush.bf16.msra.mxu0 %v4215
    %4227 = vmatpush.bf16.msra.mxu0 %v4214
    %4228 = vmatpush.bf16.msra.mxu0 %v4213
    %4229 = vmatpush.bf16.msra.mxu0 %v4212
    %4230 = vmatpush.bf16.msra.mxu0 %v4211
    %4231 = vmatpush.bf16.msra.mxu0 %v4210
    %4232 = vmatpush.bf16.msra.mxu0 %v4209
    %4233 = vmatmul.bf16.gmra.mxu0 %v4159
    %v4234 = vpop.f32.mrf.mxu0
    %v4235 = vadd.f32 0.0, %v4234
    %v4236 = vpop.f32.mrf.mxu0
    %4237 = vdwg.mxu0
    %v4254 = vunpack.c.l.b16 %v4125
    %v4255 = vunpack.c.l.b16 %v4126
    %v4256 = vunpack.c.l.b16 %v4127
    %v4257 = vunpack.c.l.b16 %v4128
    %v4258 = vunpack.c.l.b16 %v4129
    %v4259 = vunpack.c.l.b16 %v4130
    %v4260 = vunpack.c.l.b16 %v4131
    %v4261 = vunpack.c.l.b16 %v4132
    %v4262 = vunpack.c.l.b16 %v4133
    %v4263 = vunpack.c.l.b16 %v4134
    %v4264 = vunpack.c.l.b16 %v4135
    %v4265 = vunpack.c.l.b16 %v4136
    %v4266 = vunpack.c.l.b16 %v4137
    %v4267 = vunpack.c.l.b16 %v4138
    %v4268 = vunpack.c.l.b16 %v4139
    %v4269 = vunpack.c.l.b16 %v4140
    %v4270 = vpack.c.b16 %v4255, %v4254
    %v4271 = vpack.c.b16 %v4257, %v4256
    %v4272 = vpack.c.b16 %v4259, %v4258
    %v4273 = vpack.c.b16 %v4261, %v4260
    %v4274 = vpack.c.b16 %v4263, %v4262
    %v4275 = vpack.c.b16 %v4265, %v4264
    %v4276 = vpack.c.b16 %v4267, %v4266
    %v4277 = vpack.c.b16 %v4269, %v4268
    %4286 = vmatpush.bf16.msra.mxu0 %v4277
    %4287 = vmatpush.bf16.msra.mxu0 %v4276
    %4288 = vmatpush.bf16.msra.mxu0 %v4275
    %4289 = vmatpush.bf16.msra.mxu0 %v4274
    %4290 = vmatpush.bf16.msra.mxu0 %v4273
    %4291 = vmatpush.bf16.msra.mxu0 %v4272
    %4292 = vmatpush.bf16.msra.mxu0 %v4271
    %4293 = vmatpush.bf16.msra.mxu0 %v4270
    %4294 = vmatmul.bf16.gmra.mxu0 %v4124
    %v4295 = vpop.f32.mrf.mxu0
    %v4296 = vadd.f32 %v4235, %v4295
    %v4297 = vpop.f32.mrf.mxu0
    %4298 = vdwg.mxu0
    %s4299 = scalar_lea.vmem [#allocation11], 8
    %v4300 = vld [vmem:[%s4299] sm:$0xf]
    %v4302 = vsel %vm4103, %v4300, 0
    %4304 = vmatpush.bf16.msra.mxu0 0
    %4305 = vmatpush.bf16.msra.mxu0 0
    %4306 = vmatpush.bf16.msra.mxu0 0
    %4307 = vmatpush.bf16.msra.mxu0 0
    %4308 = vmatpush.bf16.msra.mxu0 0
    %4309 = vmatpush.bf16.msra.mxu0 0
    %4310 = vmatpush.bf16.msra.mxu0 0
    %4311 = vmatpush.bf16.msra.mxu0 %v4109
    %4312 = vmatmul.bf16.gmra.mxu0 %v4302
    %v4313 = vpop.f32.mrf.mxu0
    %v4314 = vadd.f32 0.0, %v4313
    %v4315 = vpop.f32.mrf.mxu0
    %4316 = vdwg.mxu0
    %v4317 = vpack.c.bf16 %v4314, %v4314
    %s4318 = scalar_lea.vmem [#allocation29], 128
    %v4319 = vld [vmem:[%s4318] sm:$0xf]
    %v4320 = vld [vmem:[%s4318 + $0x4] sm:$0xf]
    %v4321 = vld [vmem:[%s4318 + $0x8] sm:$0xf]
    %v4322 = vld [vmem:[%s4318 + $0xc] sm:$0xf]
    %v4323 = vld [vmem:[%s4318 + $0x10] sm:$0xf]
    %v4324 = vld [vmem:[%s4318 + $0x14] sm:$0xf]
    %v4325 = vld [vmem:[%s4318 + $0x18] sm:$0xf]
    %v4326 = vld [vmem:[%s4318 + $0x1c] sm:$0xf]
    %v4327 = vld [vmem:[%s4318 + $0x20] sm:$0xf]
    %v4328 = vld [vmem:[%s4318 + $0x24] sm:$0xf]
    %v4329 = vld [vmem:[%s4318 + $0x28] sm:$0xf]
    %v4330 = vld [vmem:[%s4318 + $0x2c] sm:$0xf]
    %v4331 = vld [vmem:[%s4318 + $0x30] sm:$0xf]
    %v4332 = vld [vmem:[%s4318 + $0x34] sm:$0xf]
    %v4333 = vld [vmem:[%s4318 + $0x38] sm:$0xf]
    %v4334 = vld [vmem:[%s4318 + $0x3c] sm:$0xf]
    %v4351 = vunpack.c.l.b16 %v4319
    %v4352 = vunpack.c.l.b16 %v4320
    %v4353 = vunpack.c.l.b16 %v4321
    %v4354 = vunpack.c.l.b16 %v4322
    %v4355 = vunpack.c.l.b16 %v4323
    %v4356 = vunpack.c.l.b16 %v4324
    %v4357 = vunpack.c.l.b16 %v4325
    %v4358 = vunpack.c.l.b16 %v4326
    %v4359 = vunpack.c.l.b16 %v4327
    %v4360 = vunpack.c.l.b16 %v4328
    %v4361 = vunpack.c.l.b16 %v4329
    %v4362 = vunpack.c.l.b16 %v4330
    %v4363 = vunpack.c.l.b16 %v4331
    %v4364 = vunpack.c.l.b16 %v4332
    %v4365 = vunpack.c.l.b16 %v4333
    %v4366 = vunpack.c.l.b16 %v4334
    %v4367 = vpack.c.b16 %v4352, %v4351
    %v4368 = vpack.c.b16 %v4354, %v4353
    %v4369 = vpack.c.b16 %v4356, %v4355
    %v4370 = vpack.c.b16 %v4358, %v4357
    %v4371 = vpack.c.b16 %v4360, %v4359
    %v4372 = vpack.c.b16 %v4362, %v4361
    %v4373 = vpack.c.b16 %v4364, %v4363
    %v4374 = vpack.c.b16 %v4366, %v4365
    %4383 = vmatpush.bf16.msra.mxu0 %v4374
    %4384 = vmatpush.bf16.msra.mxu0 %v4373
    %4385 = vmatpush.bf16.msra.mxu0 %v4372
    %4386 = vmatpush.bf16.msra.mxu0 %v4371
    %4387 = vmatpush.bf16.msra.mxu0 %v4370
    %4388 = vmatpush.bf16.msra.mxu0 %v4369
    %4389 = vmatpush.bf16.msra.mxu0 %v4368
    %4390 = vmatpush.bf16.msra.mxu0 %v4367
    %4391 = vmatmul.bf16.gmra.mxu0 %v4317
    %v4392 = vpop.f32.mrf.mxu0
    %v4393 = vadd.f32 0.0, %v4392
    %v4394 = vpop.f32.mrf.mxu0
    %4395 = vdwg.mxu0
    %v4396 = vadd.f32 %v4296, %v4393
    %s4397 = scalar_lea.vmem [#allocation11], 12
    %v4398 = vld [vmem:[%s4397] sm:$0xf]
    %v4400 = vsel %vm4103, %v4398, 0
    %4402 = vmatpush.bf16.msra.mxu0 0
    %4403 = vmatpush.bf16.msra.mxu0 0
    %4404 = vmatpush.bf16.msra.mxu0 0
    %4405 = vmatpush.bf16.msra.mxu0 0
    %4406 = vmatpush.bf16.msra.mxu0 0
    %4407 = vmatpush.bf16.msra.mxu0 0
    %4408 = vmatpush.bf16.msra.mxu0 0
    %4409 = vmatpush.bf16.msra.mxu0 %v4109
    %4410 = vmatmul.bf16.gmra.mxu0 %v4400
    %v4411 = vpop.f32.mrf.mxu0
    %v4412 = vadd.f32 0.0, %v4411
    %v4413 = vpop.f32.mrf.mxu0
    %4414 = vdwg.mxu0
    %v4415 = vpack.c.bf16 %v4412, %v4412
    %s4416 = scalar_lea.vmem [#allocation29], 192
    %v4417 = vld [vmem:[%s4416] sm:$0xf]
    %v4418 = vld [vmem:[%s4416 + $0x4] sm:$0xf]
    %v4419 = vld [vmem:[%s4416 + $0x8] sm:$0xf]
    %v4420 = vld [vmem:[%s4416 + $0xc] sm:$0xf]
    %v4421 = vld [vmem:[%s4416 + $0x10] sm:$0xf]
    %v4422 = vld [vmem:[%s4416 + $0x14] sm:$0xf]
    %v4423 = vld [vmem:[%s4416 + $0x18] sm:$0xf]
    %v4424 = vld [vmem:[%s4416 + $0x1c] sm:$0xf]
    %v4425 = vld [vmem:[%s4416 + $0x20] sm:$0xf]
    %v4426 = vld [vmem:[%s4416 + $0x24] sm:$0xf]
    %v4427 = vld [vmem:[%s4416 + $0x28] sm:$0xf]
    %v4428 = vld [vmem:[%s4416 + $0x2c] sm:$0xf]
    %v4429 = vld [vmem:[%s4416 + $0x30] sm:$0xf]
    %v4430 = vld [vmem:[%s4416 + $0x34] sm:$0xf]
    %v4431 = vld [vmem:[%s4416 + $0x38] sm:$0xf]
    %v4432 = vld [vmem:[%s4416 + $0x3c] sm:$0xf]
    %v4449 = vunpack.c.l.b16 %v4417
    %v4450 = vunpack.c.l.b16 %v4418
    %v4451 = vunpack.c.l.b16 %v4419
    %v4452 = vunpack.c.l.b16 %v4420
    %v4453 = vunpack.c.l.b16 %v4421
    %v4454 = vunpack.c.l.b16 %v4422
    %v4455 = vunpack.c.l.b16 %v4423
    %v4456 = vunpack.c.l.b16 %v4424
    %v4457 = vunpack.c.l.b16 %v4425
    %v4458 = vunpack.c.l.b16 %v4426
    %v4459 = vunpack.c.l.b16 %v4427
    %v4460 = vunpack.c.l.b16 %v4428
    %v4461 = vunpack.c.l.b16 %v4429
    %v4462 = vunpack.c.l.b16 %v4430
    %v4463 = vunpack.c.l.b16 %v4431
    %v4464 = vunpack.c.l.b16 %v4432
    %v4465 = vpack.c.b16 %v4450, %v4449
    %v4466 = vpack.c.b16 %v4452, %v4451
    %v4467 = vpack.c.b16 %v4454, %v4453
    %v4468 = vpack.c.b16 %v4456, %v4455
    %v4469 = vpack.c.b16 %v4458, %v4457
    %v4470 = vpack.c.b16 %v4460, %v4459
    %v4471 = vpack.c.b16 %v4462, %v4461
    %v4472 = vpack.c.b16 %v4464, %v4463
    %4481 = vmatpush.bf16.msra.mxu0 %v4472
    %4482 = vmatpush.bf16.msra.mxu0 %v4471
    %4483 = vmatpush.bf16.msra.mxu0 %v4470
    %4484 = vmatpush.bf16.msra.mxu0 %v4469
    %4485 = vmatpush.bf16.msra.mxu0 %v4468
    %4486 = vmatpush.bf16.msra.mxu0 %v4467
    %4487 = vmatpush.bf16.msra.mxu0 %v4466
    %4488 = vmatpush.bf16.msra.mxu0 %v4465
    %4489 = vmatmul.bf16.gmra.mxu0 %v4415
    %v4490 = vpop.f32.mrf.mxu0
    %v4491 = vadd.f32 0.0, %v4490
    %v4492 = vpop.f32.mrf.mxu0
    %4493 = vdwg.mxu0
    %v4494 = vadd.f32 %v4396, %v4491
    %v4495 = vld [vmem:[%s59] sm:$0x1]
    %v4497 = vperm.slane %v4495, 0
    %v4499 = vadd.f32 %v4494, %v4497
    %v4500 = vpack.c.bf16 %v4016, %v4016
    %v4502 = vsel %vm4107, %v4500, 0
    %4504 = vmatpush.bf16.msra.mxu0 0
    %4505 = vmatpush.bf16.msra.mxu0 0
    %4506 = vmatpush.bf16.msra.mxu0 0
    %4507 = vmatpush.bf16.msra.mxu0 0
    %4508 = vmatpush.bf16.msra.mxu0 0
    %4509 = vmatpush.bf16.msra.mxu0 0
    %4510 = vmatpush.bf16.msra.mxu0 0
    %4511 = vmatpush.bf16.msra.mxu0 %v4502
    %4512 = vmatmul.bf16.gmra.mxu0 %v4105
    %v4513 = vpop.f32.mrf.mxu0
    %v4514 = vadd.f32 0.0, %v4513
    %v4515 = vpop.f32.mrf.mxu0
    %4516 = vdwg.mxu0
    %v4517 = vpack.c.bf16 %v4514, %v4514
    %v4518 = vld [vmem:[#allocation31] sm:$0xf]
    %v4519 = vld [vmem:[#allocation31 + $0x4] sm:$0xf]
    %v4520 = vld [vmem:[#allocation31 + $0x8] sm:$0xf]
    %v4521 = vld [vmem:[#allocation31 + $0xc] sm:$0xf]
    %v4522 = vld [vmem:[#allocation31 + $0x10] sm:$0xf]
    %v4523 = vld [vmem:[#allocation31 + $0x14] sm:$0xf]
    %v4524 = vld [vmem:[#allocation31 + $0x18] sm:$0xf]
    %v4525 = vld [vmem:[#allocation31 + $0x1c] sm:$0xf]
    %v4526 = vld [vmem:[#allocation31 + $0x20] sm:$0xf]
    %v4527 = vld [vmem:[#allocation31 + $0x24] sm:$0xf]
    %v4528 = vld [vmem:[#allocation31 + $0x28] sm:$0xf]
    %v4529 = vld [vmem:[#allocation31 + $0x2c] sm:$0xf]
    %v4530 = vld [vmem:[#allocation31 + $0x30] sm:$0xf]
    %v4531 = vld [vmem:[#allocation31 + $0x34] sm:$0xf]
    %v4532 = vld [vmem:[#allocation31 + $0x38] sm:$0xf]
    %v4533 = vld [vmem:[#allocation31 + $0x3c] sm:$0xf]
    %4534 = vmatpush.bf16.msra.mxu0 0
    %4535 = vmatpush.bf16.msra.mxu0 0
    %4536 = vmatpush.bf16.msra.mxu0 0
    %4537 = vmatpush.bf16.msra.mxu0 0
    %4538 = vmatpush.bf16.msra.mxu0 0
    %4539 = vmatpush.bf16.msra.mxu0 0
    %4540 = vmatpush.bf16.msra.mxu0 0
    %4541 = vmatpush.bf16.msra.mxu0 %v4502
    %4542 = vmatmul.bf16.gmra.mxu0 %v4144
    %v4543 = vpop.f32.mrf.mxu0
    %v4544 = vadd.f32 0.0, %v4543
    %v4545 = vpop.f32.mrf.mxu0
    %4546 = vdwg.mxu0
    %v4547 = vpack.c.bf16 %v4544, %v4544
    %s4548 = scalar_lea.vmem [#allocation31], 64
    %v4549 = vld [vmem:[%s4548] sm:$0xf]
    %v4550 = vld [vmem:[%s4548 + $0x4] sm:$0xf]
    %v4551 = vld [vmem:[%s4548 + $0x8] sm:$0xf]
    %v4552 = vld [vmem:[%s4548 + $0xc] sm:$0xf]
    %v4553 = vld [vmem:[%s4548 + $0x10] sm:$0xf]
    %v4554 = vld [vmem:[%s4548 + $0x14] sm:$0xf]
    %v4555 = vld [vmem:[%s4548 + $0x18] sm:$0xf]
    %v4556 = vld [vmem:[%s4548 + $0x1c] sm:$0xf]
    %v4557 = vld [vmem:[%s4548 + $0x20] sm:$0xf]
    %v4558 = vld [vmem:[%s4548 + $0x24] sm:$0xf]
    %v4559 = vld [vmem:[%s4548 + $0x28] sm:$0xf]
    %v4560 = vld [vmem:[%s4548 + $0x2c] sm:$0xf]
    %v4561 = vld [vmem:[%s4548 + $0x30] sm:$0xf]
    %v4562 = vld [vmem:[%s4548 + $0x34] sm:$0xf]
    %v4563 = vld [vmem:[%s4548 + $0x38] sm:$0xf]
    %v4564 = vld [vmem:[%s4548 + $0x3c] sm:$0xf]
    %v4581 = vunpack.c.l.b16 %v4549
    %v4582 = vunpack.c.l.b16 %v4550
    %v4583 = vunpack.c.l.b16 %v4551
    %v4584 = vunpack.c.l.b16 %v4552
    %v4585 = vunpack.c.l.b16 %v4553
    %v4586 = vunpack.c.l.b16 %v4554
    %v4587 = vunpack.c.l.b16 %v4555
    %v4588 = vunpack.c.l.b16 %v4556
    %v4589 = vunpack.c.l.b16 %v4557
    %v4590 = vunpack.c.l.b16 %v4558
    %v4591 = vunpack.c.l.b16 %v4559
    %v4592 = vunpack.c.l.b16 %v4560
    %v4593 = vunpack.c.l.b16 %v4561
    %v4594 = vunpack.c.l.b16 %v4562
    %v4595 = vunpack.c.l.b16 %v4563
    %v4596 = vunpack.c.l.b16 %v4564
    %v4597 = vpack.c.b16 %v4582, %v4581
    %v4598 = vpack.c.b16 %v4584, %v4583
    %v4599 = vpack.c.b16 %v4586, %v4585
    %v4600 = vpack.c.b16 %v4588, %v4587
    %v4601 = vpack.c.b16 %v4590, %v4589
    %v4602 = vpack.c.b16 %v4592, %v4591
    %v4603 = vpack.c.b16 %v4594, %v4593
    %v4604 = vpack.c.b16 %v4596, %v4595
    %4613 = vmatpush.bf16.msra.mxu0 %v4604
    %4614 = vmatpush.bf16.msra.mxu0 %v4603
    %4615 = vmatpush.bf16.msra.mxu0 %v4602
    %4616 = vmatpush.bf16.msra.mxu0 %v4601
    %4617 = vmatpush.bf16.msra.mxu0 %v4600
    %4618 = vmatpush.bf16.msra.mxu0 %v4599
    %4619 = vmatpush.bf16.msra.mxu0 %v4598
    %4620 = vmatpush.bf16.msra.mxu0 %v4597
    %4621 = vmatmul.bf16.gmra.mxu0 %v4547
    %v4622 = vpop.f32.mrf.mxu0
    %v4623 = vadd.f32 0.0, %v4622
    %v4624 = vpop.f32.mrf.mxu0
    %4625 = vdwg.mxu0
    %v4642 = vunpack.c.l.b16 %v4518
    %v4643 = vunpack.c.l.b16 %v4519
    %v4644 = vunpack.c.l.b16 %v4520
    %v4645 = vunpack.c.l.b16 %v4521
    %v4646 = vunpack.c.l.b16 %v4522
    %v4647 = vunpack.c.l.b16 %v4523
    %v4648 = vunpack.c.l.b16 %v4524
    %v4649 = vunpack.c.l.b16 %v4525
    %v4650 = vunpack.c.l.b16 %v4526
    %v4651 = vunpack.c.l.b16 %v4527
    %v4652 = vunpack.c.l.b16 %v4528
    %v4653 = vunpack.c.l.b16 %v4529
    %v4654 = vunpack.c.l.b16 %v4530
    %v4655 = vunpack.c.l.b16 %v4531
    %v4656 = vunpack.c.l.b16 %v4532
    %v4657 = vunpack.c.l.b16 %v4533
    %v4658 = vpack.c.b16 %v4643, %v4642
    %v4659 = vpack.c.b16 %v4645, %v4644
    %v4660 = vpack.c.b16 %v4647, %v4646
    %v4661 = vpack.c.b16 %v4649, %v4648
    %v4662 = vpack.c.b16 %v4651, %v4650
    %v4663 = vpack.c.b16 %v4653, %v4652
    %v4664 = vpack.c.b16 %v4655, %v4654
    %v4665 = vpack.c.b16 %v4657, %v4656
    %4674 = vmatpush.bf16.msra.mxu0 %v4665
    %4675 = vmatpush.bf16.msra.mxu0 %v4664
    %4676 = vmatpush.bf16.msra.mxu0 %v4663
    %4677 = vmatpush.bf16.msra.mxu0 %v4662
    %4678 = vmatpush.bf16.msra.mxu0 %v4661
    %4679 = vmatpush.bf16.msra.mxu0 %v4660
    %4680 = vmatpush.bf16.msra.mxu0 %v4659
    %4681 = vmatpush.bf16.msra.mxu0 %v4658
    %4682 = vmatmul.bf16.gmra.mxu0 %v4517
    %v4683 = vpop.f32.mrf.mxu0
    %v4684 = vadd.f32 %v4623, %v4683
    %v4685 = vpop.f32.mrf.mxu0
    %4686 = vdwg.mxu0
    %4687 = vmatpush.bf16.msra.mxu0 0
    %4688 = vmatpush.bf16.msra.mxu0 0
    %4689 = vmatpush.bf16.msra.mxu0 0
    %4690 = vmatpush.bf16.msra.mxu0 0
    %4691 = vmatpush.bf16.msra.mxu0 0
    %4692 = vmatpush.bf16.msra.mxu0 0
    %4693 = vmatpush.bf16.msra.mxu0 0
    %4694 = vmatpush.bf16.msra.mxu0 %v4502
    %4695 = vmatmul.bf16.gmra.mxu0 %v4302
    %v4696 = vpop.f32.mrf.mxu0
    %v4697 = vadd.f32 0.0, %v4696
    %v4698 = vpop.f32.mrf.mxu0
    %4699 = vdwg.mxu0
    %v4700 = vpack.c.bf16 %v4697, %v4697
    %s4701 = scalar_lea.vmem [#allocation31], 128
    %v4702 = vld [vmem:[%s4701] sm:$0xf]
    %v4703 = vld [vmem:[%s4701 + $0x4] sm:$0xf]
    %v4704 = vld [vmem:[%s4701 + $0x8] sm:$0xf]
    %v4705 = vld [vmem:[%s4701 + $0xc] sm:$0xf]
    %v4706 = vld [vmem:[%s4701 + $0x10] sm:$0xf]
    %v4707 = vld [vmem:[%s4701 + $0x14] sm:$0xf]
    %v4708 = vld [vmem:[%s4701 + $0x18] sm:$0xf]
    %v4709 = vld [vmem:[%s4701 + $0x1c] sm:$0xf]
    %v4710 = vld [vmem:[%s4701 + $0x20] sm:$0xf]
    %v4711 = vld [vmem:[%s4701 + $0x24] sm:$0xf]
    %v4712 = vld [vmem:[%s4701 + $0x28] sm:$0xf]
    %v4713 = vld [vmem:[%s4701 + $0x2c] sm:$0xf]
    %v4714 = vld [vmem:[%s4701 + $0x30] sm:$0xf]
    %v4715 = vld [vmem:[%s4701 + $0x34] sm:$0xf]
    %v4716 = vld [vmem:[%s4701 + $0x38] sm:$0xf]
    %v4717 = vld [vmem:[%s4701 + $0x3c] sm:$0xf]
    %v4734 = vunpack.c.l.b16 %v4702
    %v4735 = vunpack.c.l.b16 %v4703
    %v4736 = vunpack.c.l.b16 %v4704
    %v4737 = vunpack.c.l.b16 %v4705
    %v4738 = vunpack.c.l.b16 %v4706
    %v4739 = vunpack.c.l.b16 %v4707
    %v4740 = vunpack.c.l.b16 %v4708
    %v4741 = vunpack.c.l.b16 %v4709
    %v4742 = vunpack.c.l.b16 %v4710
    %v4743 = vunpack.c.l.b16 %v4711
    %v4744 = vunpack.c.l.b16 %v4712
    %v4745 = vunpack.c.l.b16 %v4713
    %v4746 = vunpack.c.l.b16 %v4714
    %v4747 = vunpack.c.l.b16 %v4715
    %v4748 = vunpack.c.l.b16 %v4716
    %v4749 = vunpack.c.l.b16 %v4717
    %v4750 = vpack.c.b16 %v4735, %v4734
    %v4751 = vpack.c.b16 %v4737, %v4736
    %v4752 = vpack.c.b16 %v4739, %v4738
    %v4753 = vpack.c.b16 %v4741, %v4740
    %v4754 = vpack.c.b16 %v4743, %v4742
    %v4755 = vpack.c.b16 %v4745, %v4744
    %v4756 = vpack.c.b16 %v4747, %v4746
    %v4757 = vpack.c.b16 %v4749, %v4748
    %4766 = vmatpush.bf16.msra.mxu0 %v4757
    %4767 = vmatpush.bf16.msra.mxu0 %v4756
    %4768 = vmatpush.bf16.msra.mxu0 %v4755
    %4769 = vmatpush.bf16.msra.mxu0 %v4754
    %4770 = vmatpush.bf16.msra.mxu0 %v4753
    %4771 = vmatpush.bf16.msra.mxu0 %v4752
    %4772 = vmatpush.bf16.msra.mxu0 %v4751
    %4773 = vmatpush.bf16.msra.mxu0 %v4750
    %4774 = vmatmul.bf16.gmra.mxu0 %v4700
    %v4775 = vpop.f32.mrf.mxu0
    %v4776 = vadd.f32 0.0, %v4775
    %v4777 = vpop.f32.mrf.mxu0
    %4778 = vdwg.mxu0
    %v4779 = vadd.f32 %v4684, %v4776
    %4780 = vmatpush.bf16.msra.mxu0 0
    %4781 = vmatpush.bf16.msra.mxu0 0
    %4782 = vmatpush.bf16.msra.mxu0 0
    %4783 = vmatpush.bf16.msra.mxu0 0
    %4784 = vmatpush.bf16.msra.mxu0 0
    %4785 = vmatpush.bf16.msra.mxu0 0
    %4786 = vmatpush.bf16.msra.mxu0 0
    %4787 = vmatpush.bf16.msra.mxu0 %v4502
    %4788 = vmatmul.bf16.gmra.mxu0 %v4400
    %v4789 = vpop.f32.mrf.mxu0
    %v4790 = vadd.f32 0.0, %v4789
    %v4791 = vpop.f32.mrf.mxu0
    %4792 = vdwg.mxu0
    %v4793 = vpack.c.bf16 %v4790, %v4790
    %s4794 = scalar_lea.vmem [#allocation31], 192
    %v4795 = vld [vmem:[%s4794] sm:$0xf]
    %v4796 = vld [vmem:[%s4794 + $0x4] sm:$0xf]
    %v4797 = vld [vmem:[%s4794 + $0x8] sm:$0xf]
    %v4798 = vld [vmem:[%s4794 + $0xc] sm:$0xf]
    %v4799 = vld [vmem:[%s4794 + $0x10] sm:$0xf]
    %v4800 = vld [vmem:[%s4794 + $0x14] sm:$0xf]
    %v4801 = vld [vmem:[%s4794 + $0x18] sm:$0xf]
    %v4802 = vld [vmem:[%s4794 + $0x1c] sm:$0xf]
    %v4803 = vld [vmem:[%s4794 + $0x20] sm:$0xf]
    %v4804 = vld [vmem:[%s4794 + $0x24] sm:$0xf]
    %v4805 = vld [vmem:[%s4794 + $0x28] sm:$0xf]
    %v4806 = vld [vmem:[%s4794 + $0x2c] sm:$0xf]
    %v4807 = vld [vmem:[%s4794 + $0x30] sm:$0xf]
    %v4808 = vld [vmem:[%s4794 + $0x34] sm:$0xf]
    %v4809 = vld [vmem:[%s4794 + $0x38] sm:$0xf]
    %v4810 = vld [vmem:[%s4794 + $0x3c] sm:$0xf]
    %v4827 = vunpack.c.l.b16 %v4795
    %v4828 = vunpack.c.l.b16 %v4796
    %v4829 = vunpack.c.l.b16 %v4797
    %v4830 = vunpack.c.l.b16 %v4798
    %v4831 = vunpack.c.l.b16 %v4799
    %v4832 = vunpack.c.l.b16 %v4800
    %v4833 = vunpack.c.l.b16 %v4801
    %v4834 = vunpack.c.l.b16 %v4802
    %v4835 = vunpack.c.l.b16 %v4803
    %v4836 = vunpack.c.l.b16 %v4804
    %v4837 = vunpack.c.l.b16 %v4805
    %v4838 = vunpack.c.l.b16 %v4806
    %v4839 = vunpack.c.l.b16 %v4807
    %v4840 = vunpack.c.l.b16 %v4808
    %v4841 = vunpack.c.l.b16 %v4809
    %v4842 = vunpack.c.l.b16 %v4810
    %v4843 = vpack.c.b16 %v4828, %v4827
    %v4844 = vpack.c.b16 %v4830, %v4829
    %v4845 = vpack.c.b16 %v4832, %v4831
    %v4846 = vpack.c.b16 %v4834, %v4833
    %v4847 = vpack.c.b16 %v4836, %v4835
    %v4848 = vpack.c.b16 %v4838, %v4837
    %v4849 = vpack.c.b16 %v4840, %v4839
    %v4850 = vpack.c.b16 %v4842, %v4841
    %4859 = vmatpush.bf16.msra.mxu0 %v4850
    %4860 = vmatpush.bf16.msra.mxu0 %v4849
    %4861 = vmatpush.bf16.msra.mxu0 %v4848
    %4862 = vmatpush.bf16.msra.mxu0 %v4847
    %4863 = vmatpush.bf16.msra.mxu0 %v4846
    %4864 = vmatpush.bf16.msra.mxu0 %v4845
    %4865 = vmatpush.bf16.msra.mxu0 %v4844
    %4866 = vmatpush.bf16.msra.mxu0 %v4843
    %4867 = vmatmul.bf16.gmra.mxu0 %v4793
    %v4868 = vpop.f32.mrf.mxu0
    %v4869 = vadd.f32 0.0, %v4868
    %v4870 = vpop.f32.mrf.mxu0
    %4871 = vdwg.mxu0
    %v4872 = vadd.f32 %v4779, %v4869
    %v4873 = vld [vmem:[%s63] sm:$0x1]
    %v4875 = vperm.slane %v4873, 0
    %v4877 = vadd.f32 %v4872, %v4875
    %v4878 = vmul.f32 %v4877, 2.0
    %v4879 = vmul.f32 %v4499, 0.3
    %v4880 = vadd.f32 %v4878, %v4879
    %v4881 = vpack.c.bf16 %v4880, %v4880
    %v4882 = vld [vmem:[#allocation32] sm:$0xf]
    %v4883 = vld [vmem:[#allocation32 + $0x4] sm:$0xf]
    %v4884 = vld [vmem:[#allocation32 + $0x8] sm:$0xf]
    %v4885 = vld [vmem:[#allocation32 + $0xc] sm:$0xf]
    %v4886 = vld [vmem:[#allocation32 + $0x10] sm:$0xf]
    %v4887 = vld [vmem:[#allocation32 + $0x14] sm:$0xf]
    %v4888 = vld [vmem:[#allocation32 + $0x18] sm:$0xf]
    %v4889 = vld [vmem:[#allocation32 + $0x1c] sm:$0xf]
    %v4890 = vld [vmem:[#allocation32 + $0x20] sm:$0xf]
    %v4891 = vld [vmem:[#allocation32 + $0x24] sm:$0xf]
    %v4892 = vld [vmem:[#allocation32 + $0x28] sm:$0xf]
    %v4893 = vld [vmem:[#allocation32 + $0x2c] sm:$0xf]
    %v4894 = vld [vmem:[#allocation32 + $0x30] sm:$0xf]
    %v4895 = vld [vmem:[#allocation32 + $0x34] sm:$0xf]
    %v4896 = vld [vmem:[#allocation32 + $0x38] sm:$0xf]
    %v4897 = vld [vmem:[#allocation32 + $0x3c] sm:$0xf]
    %v4898 = vld [vmem:[%s67] sm:$0x1]
    %v4900 = vperm.slane %v4898, 0
    %v4918 = vunpack.c.l.b16 %v4882
    %v4919 = vunpack.c.l.b16 %v4883
    %v4920 = vunpack.c.l.b16 %v4884
    %v4921 = vunpack.c.l.b16 %v4885
    %v4922 = vunpack.c.l.b16 %v4886
    %v4923 = vunpack.c.l.b16 %v4887
    %v4924 = vunpack.c.l.b16 %v4888
    %v4925 = vunpack.c.l.b16 %v4889
    %v4926 = vunpack.c.l.b16 %v4890
    %v4927 = vunpack.c.l.b16 %v4891
    %v4928 = vunpack.c.l.b16 %v4892
    %v4929 = vunpack.c.l.b16 %v4893
    %v4930 = vunpack.c.l.b16 %v4894
    %v4931 = vunpack.c.l.b16 %v4895
    %v4932 = vunpack.c.l.b16 %v4896
    %v4933 = vunpack.c.l.b16 %v4897
    %v4934 = vpack.c.b16 %v4919, %v4918
    %v4935 = vpack.c.b16 %v4921, %v4920
    %v4936 = vpack.c.b16 %v4923, %v4922
    %v4937 = vpack.c.b16 %v4925, %v4924
    %v4938 = vpack.c.b16 %v4927, %v4926
    %v4939 = vpack.c.b16 %v4929, %v4928
    %v4940 = vpack.c.b16 %v4931, %v4930
    %v4941 = vpack.c.b16 %v4933, %v4932
    %4950 = vmatpush.bf16.msra.mxu0 %v4941
    %4951 = vmatpush.bf16.msra.mxu0 %v4940
    %4952 = vmatpush.bf16.msra.mxu0 %v4939
    %4953 = vmatpush.bf16.msra.mxu0 %v4938
    %4954 = vmatpush.bf16.msra.mxu0 %v4937
    %4955 = vmatpush.bf16.msra.mxu0 %v4936
    %4956 = vmatpush.bf16.msra.mxu0 %v4935
    %4957 = vmatpush.bf16.msra.mxu0 %v4934
    %4958 = vmatmul.bf16.gmra.mxu0 %v4881
    %v4959 = vpop.f32.mrf.mxu0
    %v4960 = vadd.f32 %v4900, %v4959
    %v4961 = vpop.f32.mrf.mxu0
    %4962 = vdwg.mxu0
    %4963 = vst [vmem:[#allocation34] sm:$0xff] %v4960
    // Predicated region
    $region218: #{tpu_custom_call.1} parent=1 // pred_check
      _
    $region219: #{tpu_custom_call.1} parent=1 // pred_check_branch
      %4965 = sbr.rel (0) target = $region221
    $region220: #{tpu_custom_call.1} parent=1 // pred_region
      %4967 = vsyncadd [#allocation4], 0
      %s4969 = sshll.u32 [#allocation34], 4
      %s4970 = int_to_ptr.vmem [resolvable:$true] %s4969
      %s4971 = sshll.u32 %s69, 4
      %s4972 = int_to_ptr.hbm [resolvable:$true] %s4971
      %4974 = dma.vmem_to_hbm [thread:$0]  %s4970, 128, %s4972, [#allocation4]
    $region221: #{tpu_custom_call.1} parent=1 // pred_fallthru
      _
    // Predicated region
    $region222: #{tpu_custom_call.1} parent=1 // pred_check
      _
    $region223: #{tpu_custom_call.1} parent=1 // pred_check_branch
      %4976 = sbr.rel (0) target = $region225
    $region224: #{tpu_custom_call.1} parent=1 // pred_region
      %4978 = dma.done [#allocation4], 128
    $region225: #{tpu_custom_call.1} parent=1 // pred_fallthru
      _
    %4979 = vsyncpa [#allocation3], 1
    %4980 = vsyncpa [#allocation6], 1
    %4981 = vsyncpa [#allocation9], 1
    %4982 = vsyncpa [#allocation12], 1
    %4983 = vsyncpa [#allocation15], 1
    %4984 = vsyncpa [#allocation18], 1
    %4985 = vsyncpa [#allocation21], 1
    %4986 = vsyncpa [#allocation24], 1
    %4987 = vsyncpa [#allocation27], 1
    %4988 = vsyncpa [#allocation30], 1
    %4989 = vsyncpa [#allocation33], 1
    %4990 = vsyncpa [#allocation4], 1

</llo_original>
